<compile_context>
chip_gen: v6e
topology: v6e:2x2x1
jax: 0.10.0
libtpu: 0.0.40
codegen_flags: <defaults>
</compile_context>

<pallas_src>
import functools

import jax
import jax.numpy as jnp
from jax.experimental import pallas as pl
from jax.experimental.pallas import tpu as pltpu


# ----------------------------------------------------------------------------
# Kernel
# ----------------------------------------------------------------------------
def _mha_kernel(q_ref, k_ref, v_ref,
                wq_ref, bq_ref, wk_ref, bk_ref,
                wv_ref, bv_ref, wo_ref, bo_ref,
                o_ref,
                qp_ref, kp_ref, vp_ref, cp_ref,
                *, h, d_k, d_v, compute_dtype):
    tb, nq, d_out = q_ref.shape
    nk = k_ref.shape[1]
    cd = compute_dtype
    f32 = jnp.float32
    scale = float(d_k) ** -0.5

    # Fold the batch tile into rows (leading-dim merge only: cheap and layout
    # preserving) so the projection matmuls see tb*nq / tb*nk rows.
    q2 = q_ref[...].reshape(tb * nq, d_out).astype(cd)
    k2 = k_ref[...].reshape(tb * nk, d_out).astype(cd)
    v2 = v_ref[...].reshape(tb * nk, d_out).astype(cd)

    # Fused, lane-dense projections: one MXU matmul each with N = h*d_k / h*d_v
    # (instead of h matmuls with N = d_k).  f32 accumulation, bias added in f32.
    qp = jnp.dot(q2, wq_ref[...], preferred_element_type=f32) + bq_ref[...]
    kp = jnp.dot(k2, wk_ref[...], preferred_element_type=f32) + bk_ref[...]
    vp = jnp.dot(v2, wv_ref[...], preferred_element_type=f32) + bv_ref[...]

    # Stage the projections in VMEM scratch (compute dtype).  Per-head operands
    # become plain static ref slices, so no giant f32 temporaries stay live
    # across the whole head loop.
    qp_ref[...] = (qp * scale).astype(cd)
    kp_ref[...] = kp.astype(cd)
    vp_ref[...] = vp.astype(cd)

    for hh in range(h):        # static unroll; h is a small compile-time const
        qh = qp_ref[:, hh * d_k:(hh + 1) * d_k].reshape(tb, nq, d_k)
        kh = kp_ref[:, hh * d_k:(hh + 1) * d_k].reshape(tb, nk, d_k)
        vh = vp_ref[:, hh * d_v:(hh + 1) * d_v].reshape(tb, nk, d_v)

        # Batched scores over the batch tile; contraction over d_k -- no
        # materialized transpose.
        s = jnp.einsum('bqd,bkd->bqk', qh, kh, preferred_element_type=f32)

        # Numerically-stable softmax over keys in f32; the approximate
        # reciprocal runs on the EUP (otherwise-idle VLIW slot).
        s = s - jnp.max(s, axis=-1, keepdims=True)
        p = jnp.exp(s)
        p = p * pl.reciprocal(jnp.sum(p, axis=-1, keepdims=True), approx=True)
        # dropout(p) is identity in eval mode.

        ctx = jnp.einsum('bqk,bkd->bqd', p.astype(cd), vh,
                         preferred_element_type=f32)            # (tb, nq, d_v)

        # Pack this head's context into its lane block of the (tb*nq, h*d_v)
        # slab so the output projection is one matmul with K = h*d_v.
        cp_ref[:, hh * d_v:(hh + 1) * d_v] = (
            ctx.reshape(tb * nq, d_v).astype(cd))

    out = jnp.dot(cp_ref[...], wo_ref[...], preferred_element_type=f32)
    out = out + bo_ref[...]
    o_ref[...] = out.reshape(tb, nq, d_out).astype(o_ref.dtype)


# ----------------------------------------------------------------------------
# Wrapper helpers
# ----------------------------------------------------------------------------
def _pick_batch_tile(bs, nq, nk, *, target_rows=1024, max_score_bytes=8 << 20):
    """Batch-tile heuristic.

    * keeps >= 2 grid steps whenever bs >= 2 (v7x has two TensorCores and the
      batch axis is the only "parallel" grid axis),
    * keeps tb*max(nq, nk) rows around `target_rows` to amortize per-step
      overhead while staying VMEM-friendly,
    * bounds the per-head f32 (tb, nq, nk) score temporary,
    * prefers an exact divisor of bs; otherwise the wrapper pads the batch.
    """
    cap = bs if bs < 2 else max(1, bs // 2)
    rows = max(nq, nk, 1)
    by_rows = max(1, target_rows // rows)
    by_scores = max(1, max_score_bytes // max(1, nq * nk * 4))
    ideal = max(1, min(cap, by_rows, by_scores))
    best_div = 1
    for t in range(1, ideal + 1):
        if bs % t == 0:
            best_div = t
    return best_div if 2 * best_div >= ideal else ideal


def _vmem_cap_bytes():
    try:
        return int(pltpu.get_tpu_info().vmem_capacity_bytes)
    except Exception:
        return 64 << 20      # conservative: v7x has the smallest VMEM (64 MiB)


def _vmem_limit_bytes(tb, nq, nk, d_out, h, d_k, d_v, in_dtype, compute_dtype,
                      single_buffer_weights):
    """Explicit scoped-VMEM budget; the per-chip defaults (16 MiB on v5e,
    32 MiB on v6e/v7x) are the first wall at moderate sizes, not compute."""
    isz = jnp.dtype(in_dtype).itemsize
    csz = jnp.dtype(compute_dtype).itemsize
    # q/k/v/out grid blocks, double-buffered by the pipeline
    io = 2 * (2 * tb * nq * d_out + 2 * tb * nk * d_out) * isz
    # weight / bias blocks (single- or double-buffered)
    wbuf = 1 if single_buffer_weights else 2
    w = wbuf * ((2 * d_out * h * d_k + d_out * h * d_v + h * d_v * d_out) * csz
                + (2 * h * d_k + h * d_v + d_out) * 4)
    # staging scratch (compute dtype)
    scr = (tb * nq * (h * d_k + h * d_v) + tb * nk * (h * d_k + h * d_v)) * csz
    # f32 temporaries: fused projections, per-head scores/probs, ctx, out acc
    tmp = 4 * (tb * nq * h * d_k + tb * nk * (h * d_k + h * d_v)
               + 2 * tb * nq * nk + tb * nq * h * d_v + tb * nq * d_out)
    needed = io + w + scr + tmp
    cap = _vmem_cap_bytes() - (8 << 20)      # leave headroom for the compiler
    lo = min(32 << 20, cap)
    return int(max(lo, min(int(needed * 1.5), cap)))


# ----------------------------------------------------------------------------
# Wrapper
# ----------------------------------------------------------------------------
def scaled_dot_product_attention(queries, keys, values, params, *, h, d_k, d_v,
                                 compute_dtype=jnp.bfloat16, batch_tile=None):
    """queries: (bs, nq, d_out), keys/values: (bs, nk, d_out) -> (bs, nq, d_out).

    compute_dtype: dtype of the MXU operands (bfloat16 default -- the quoted
    MXU rates on v5e/v6e/v7x are bf16 numbers); softmax and all accumulation
    stay in float32.
    """
    bs, nq, d_out = queries.shape
    nk = keys.shape[1]
    wq, bq, wk, bk, wv, bv, wo, bo = params   # weights already (in, out)

    cd = jnp.dtype(compute_dtype)
    # Weights keep their natural interleaved (in, h*d_k / h*d_v) layout so the
    # fused projections need no in-kernel relayout; cast to the MXU dtype once.
    wq_c = wq.astype(cd)
    wk_c = wk.astype(cd)
    wv_c = wv.astype(cd)
    wo_c = wo.astype(cd)
    bq_c = bq.reshape(1, h * d_k).astype(jnp.float32)
    bk_c = bk.reshape(1, h * d_k).astype(jnp.float32)
    bv_c = bv.reshape(1, h * d_v).astype(jnp.float32)
    bo_c = bo.reshape(1, d_out).astype(jnp.float32)

    tb = batch_tile if batch_tile is not None else _pick_batch_tile(bs, nq, nk)
    grid = pl.cdiv(bs, tb)
    bs_p = grid * tb
    if bs_p != bs:   # pad the batch instead of degrading to tiny tiles
        pad = ((0, bs_p - bs), (0, 0), (0, 0))
        q_in = jnp.pad(queries, pad)
        k_in = jnp.pad(keys, pad)
        v_in = jnp.pad(values, pad)
    else:
        q_in, k_in, v_in = queries, keys, values

    kernel = functools.partial(_mha_kernel, h=h, d_k=d_k, d_v=d_v,
                               compute_dtype=cd)

    def run(single_buffer_weights):
        wmode = pl.Buffered(1) if single_buffer_weights else None

        def full_spec(a):
            idx = (0,) * a.ndim
            if wmode is None:
                return pl.BlockSpec(a.shape, lambda b, _i=idx: _i)
            # Grid-invariant block: DMA'd once, keep a single VMEM buffer.
            return pl.BlockSpec(a.shape, lambda b, _i=idx: _i,
                                pipeline_mode=wmode)

        vmem_limit = _vmem_limit_bytes(tb, nq, nk, d_out, h, d_k, d_v,
                                       q_in.dtype, cd, single_buffer_weights)
        out = pl.pallas_call(
            kernel,
            out_shape=jax.ShapeDtypeStruct((bs_p, nq, d_out), queries.dtype),
            grid_spec=pltpu.PrefetchScalarGridSpec(
                num_scalar_prefetch=0,
                grid=(grid,),
                in_specs=[
                    pl.BlockSpec((tb, nq, d_out), lambda b: (b, 0, 0)),   # q
                    pl.BlockSpec((tb, nk, d_out), lambda b: (b, 0, 0)),   # k
                    pl.BlockSpec((tb, nk, d_out), lambda b: (b, 0, 0)),   # v
                    full_spec(wq_c), full_spec(bq_c),
                    full_spec(wk_c), full_spec(bk_c),
                    full_spec(wv_c), full_spec(bv_c),
                    full_spec(wo_c), full_spec(bo_c),
                ],
                out_specs=pl.BlockSpec((tb, nq, d_out), lambda b: (b, 0, 0)),
                scratch_shapes=[
                    pltpu.VMEM((tb * nq, h * d_k), cd),   # staged Q projection
                    pltpu.VMEM((tb * nk, h * d_k), cd),   # staged K projection
                    pltpu.VMEM((tb * nk, h * d_v), cd),   # staged V projection
                    pltpu.VMEM((tb * nq, h * d_v), cd),   # packed head contexts
                ]),
            compiler_params=pltpu.CompilerParams(
                dimension_semantics=("parallel",),
                vmem_limit_bytes=vmem_limit),
        )(q_in, k_in, v_in, wq_c, bq_c, wk_c, bk_c, wv_c, bv_c, wo_c, bo_c)
        return jax.block_until_ready(out)

    out = None
    if hasattr(pl, "Buffered"):
        try:
            out = run(True)       # single-buffer the grid-invariant weights
        except Exception:
            out = None            # older Pallas: fall back to default buffering
    if out is None:
        out = run(False)
    return out[:bs] if bs_p != bs else out


# ----------------------------------------------------------------------------
# Deterministic parameter init (matches nn.init.xavier_uniform_, bias = 0)
# ----------------------------------------------------------------------------
def _xavier_uniform(key, fan_in, fan_out, dtype=jnp.float32):
    bound = (6.0 / (fan_in + fan_out)) ** 0.5
    # PyTorch weight is (out, in); return the transposed (in, out) layout.
    w = jax.random.uniform(key, (fan_out, fan_in), dtype, -bound, bound)
    return w.T


def init_params(key, d_out, d_k, d_v, h):
    k1, k2, k3, k4 = jax.random.split(key, 4)
    wq = _xavier_uniform(k1, d_out, h * d_k)          # (d_out, h*d_k)
    wk = _xavier_uniform(k2, d_out, h * d_k)
    wv = _xavier_uniform(k3, d_out, h * d_v)
    wo = _xavier_uniform(k4, h * d_v, d_out)          # (h*d_v, d_out)
    bq = jnp.zeros((1, h * d_k), jnp.float32)
    bk = jnp.zeros((1, h * d_k), jnp.float32)
    bv = jnp.zeros((1, h * d_v), jnp.float32)
    bo = jnp.zeros((1, d_out), jnp.float32)
    return (wq, bq, wk, bk, wv, bv, wo, bo)


# ----------------------------------------------------------------------------
# Pure-JAX reference (same math) for a sanity check
# ----------------------------------------------------------------------------
def reference(queries, keys, values, params, *, h, d_k, d_v):
    wq, bq, wk, bk, wv, bv, wo, bo = params
    bs, nq, _ = queries.shape
    nk = keys.shape[1]
    q = (queries @ wq + bq).reshape(bs, nq, h, d_k).transpose(0, 2, 1, 3)
    k = (keys @ wk + bk).reshape(bs, nk, h, d_k).transpose(0, 2, 3, 1)
    v = (values @ wv + bv).reshape(bs, nk, h, d_v).transpose(0, 2, 1, 3)
    att = jnp.matmul(q, k) / jnp.sqrt(jnp.float32(d_k))
    att = jax.nn.softmax(att, axis=-1)
    out = jnp.matmul(att, v).transpose(0, 2, 1, 3).reshape(bs, nq, h * d_v)
    return out @ wo + bo


if __name__ == "__main__":
    # Small shapes consistent with the module
    bs, nq, nk = 2, 8, 8
    d_out, d_k, d_v, h = 32, 16, 16, 4

    key = jax.random.PRNGKey(0)
    kq, kk, kv, kp = jax.random.split(key, 4)
    queries = jax.random.normal(kq, (bs, nq, d_out), jnp.float32)
    keys = jax.random.normal(kk, (bs, nk, d_out), jnp.float32)
    values = jax.random.normal(kv, (bs, nk, d_out), jnp.float32)
    params = init_params(kp, d_out, d_k, d_v, h)

    ref = reference(queries, keys, values, params, h=h, d_k=d_k, d_v=d_v)

    # f32 MXU-operand path (tolerance covers the EUP approximate reciprocal).
    out_f32 = scaled_dot_product_attention(queries, keys, values, params,
                                           h=h, d_k=d_k, d_v=d_v,
                                           compute_dtype=jnp.float32)
    out_f32 = jax.block_until_ready(out_f32)
    assert out_f32.shape == (bs, nq, d_out)
    assert jnp.allclose(out_f32, ref, atol=5e-3, rtol=5e-3), "f32 mismatch vs reference"

    # Default bf16 MXU-operand path (f32 softmax / accumulation), looser tol.
    out_bf16 = scaled_dot_product_attention(queries, keys, values, params,
                                            h=h, d_k=d_k, d_v=d_v)
    out_bf16 = jax.block_until_ready(out_bf16)
    assert out_bf16.shape == (bs, nq, d_out)
    assert jnp.allclose(out_bf16, ref, atol=1e-1, rtol=1e-1), "bf16 mismatch vs reference"

    print("KERNEL_OK")
</pallas_src>

<mosaic_0001>
module attributes {stable_mosaic.version = 11 : i64} {
  func.func @_mha_kernel(%arg0: i32, %arg1: memref<1x8x32xf32, #tpu.memory_space<vmem>>, %arg2: memref<1x8x32xf32, #tpu.memory_space<vmem>>, %arg3: memref<1x8x32xf32, #tpu.memory_space<vmem>>, %arg4: memref<32x64xf32, #tpu.memory_space<vmem>>, %arg5: memref<1x64xf32, #tpu.memory_space<vmem>>, %arg6: memref<32x64xf32, #tpu.memory_space<vmem>>, %arg7: memref<1x64xf32, #tpu.memory_space<vmem>>, %arg8: memref<32x64xf32, #tpu.memory_space<vmem>>, %arg9: memref<1x64xf32, #tpu.memory_space<vmem>>, %arg10: memref<64x32xf32, #tpu.memory_space<vmem>>, %arg11: memref<1x32xf32, #tpu.memory_space<vmem>>, %arg12: memref<1x8x32xf32, #tpu.memory_space<vmem>>, %arg13: memref<8x64xf32, #tpu.memory_space<vmem>>, %arg14: memref<8x64xf32, #tpu.memory_space<vmem>>, %arg15: memref<8x64xf32, #tpu.memory_space<vmem>>, %arg16: memref<8x64xf32, #tpu.memory_space<vmem>>) attributes {dimension_semantics = [#tpu.dimension_semantics<parallel>], iteration_bounds = array<i64: 2>, scalar_prefetch = 0 : i64, scratch_operands = 4 : i64, tpu.core_type = #tpu.core_type<tc>, window_params = [{transform_indices = @transform_0, window_bounds = array<i64: 1, 8, 32>}, {transform_indices = @transform_1, window_bounds = array<i64: 1, 8, 32>}, {transform_indices = @transform_2, window_bounds = array<i64: 1, 8, 32>}, {pipeline_mode = #tpu.pipeline_mode<synchronous>, transform_indices = @transform_3, window_bounds = array<i64: 32, 64>}, {pipeline_mode = #tpu.pipeline_mode<synchronous>, transform_indices = @transform_4, window_bounds = array<i64: 1, 64>}, {pipeline_mode = #tpu.pipeline_mode<synchronous>, transform_indices = @transform_5, window_bounds = array<i64: 32, 64>}, {pipeline_mode = #tpu.pipeline_mode<synchronous>, transform_indices = @transform_6, window_bounds = array<i64: 1, 64>}, {pipeline_mode = #tpu.pipeline_mode<synchronous>, transform_indices = @transform_7, window_bounds = array<i64: 32, 64>}, {pipeline_mode = #tpu.pipeline_mode<synchronous>, transform_indices = @transform_8, window_bounds = array<i64: 1, 64>}, {pipeline_mode = #tpu.pipeline_mode<synchronous>, transform_indices = @transform_9, window_bounds = array<i64: 64, 32>}, {pipeline_mode = #tpu.pipeline_mode<synchronous>, transform_indices = @transform_10, window_bounds = array<i64: 1, 32>}, {transform_indices = @transform_11, window_bounds = array<i64: 1, 8, 32>}]} {
    %c0 = arith.constant 0 : index
    %c0_0 = arith.constant 0 : index
    %c0_1 = arith.constant 0 : index
    %0 = vector.load %arg1[%c0, %c0_0, %c0_1] : memref<1x8x32xf32, #tpu.memory_space<vmem>>, vector<1x8x32xf32>
    %1 = vector.shape_cast %0 : vector<1x8x32xf32> to vector<8x32xf32>
    %c0_2 = arith.constant 0 : index
    %c0_3 = arith.constant 0 : index
    %c0_4 = arith.constant 0 : index
    %2 = vector.load %arg2[%c0_2, %c0_3, %c0_4] : memref<1x8x32xf32, #tpu.memory_space<vmem>>, vector<1x8x32xf32>
    %3 = vector.shape_cast %2 : vector<1x8x32xf32> to vector<8x32xf32>
    %c0_5 = arith.constant 0 : index
    %c0_6 = arith.constant 0 : index
    %c0_7 = arith.constant 0 : index
    %4 = vector.load %arg3[%c0_5, %c0_6, %c0_7] : memref<1x8x32xf32, #tpu.memory_space<vmem>>, vector<1x8x32xf32>
    %5 = vector.shape_cast %4 : vector<1x8x32xf32> to vector<8x32xf32>
    %c0_8 = arith.constant 0 : index
    %c0_9 = arith.constant 0 : index
    %6 = vector.load %arg4[%c0_8, %c0_9] : memref<32x64xf32, #tpu.memory_space<vmem>>, vector<32x64xf32>
    %cst = arith.constant dense<0.000000e+00> : vector<8x64xf32>
    %7 = tpu.matmul %1, %6, %cst {dimension_numbers = #tpu.dot_dimension_numbers<[1], [0], [0], [1], [0, 0, 1, 1], [], []>} : vector<8x32xf32>, vector<32x64xf32>, vector<8x64xf32> -> vector<8x64xf32>
    %c0_10 = arith.constant 0 : index
    %c0_11 = arith.constant 0 : index
    %8 = vector.load %arg5[%c0_10, %c0_11] : memref<1x64xf32, #tpu.memory_space<vmem>>, vector<1x64xf32>
    %9 = vector.broadcast %8 : vector<1x64xf32> to vector<8x64xf32>
    %10 = arith.addf %7, %9 : vector<8x64xf32>
    %c0_12 = arith.constant 0 : index
    %c0_13 = arith.constant 0 : index
    %11 = vector.load %arg6[%c0_12, %c0_13] : memref<32x64xf32, #tpu.memory_space<vmem>>, vector<32x64xf32>
    %cst_14 = arith.constant dense<0.000000e+00> : vector<8x64xf32>
    %12 = tpu.matmul %3, %11, %cst_14 {dimension_numbers = #tpu.dot_dimension_numbers<[1], [0], [0], [1], [0, 0, 1, 1], [], []>} : vector<8x32xf32>, vector<32x64xf32>, vector<8x64xf32> -> vector<8x64xf32>
    %c0_15 = arith.constant 0 : index
    %c0_16 = arith.constant 0 : index
    %13 = vector.load %arg7[%c0_15, %c0_16] : memref<1x64xf32, #tpu.memory_space<vmem>>, vector<1x64xf32>
    %14 = vector.broadcast %13 : vector<1x64xf32> to vector<8x64xf32>
    %15 = arith.addf %12, %14 : vector<8x64xf32>
    %c0_17 = arith.constant 0 : index
    %c0_18 = arith.constant 0 : index
    %16 = vector.load %arg8[%c0_17, %c0_18] : memref<32x64xf32, #tpu.memory_space<vmem>>, vector<32x64xf32>
    %cst_19 = arith.constant dense<0.000000e+00> : vector<8x64xf32>
    %17 = tpu.matmul %5, %16, %cst_19 {dimension_numbers = #tpu.dot_dimension_numbers<[1], [0], [0], [1], [0, 0, 1, 1], [], []>} : vector<8x32xf32>, vector<32x64xf32>, vector<8x64xf32> -> vector<8x64xf32>
    %c0_20 = arith.constant 0 : index
    %c0_21 = arith.constant 0 : index
    %18 = vector.load %arg9[%c0_20, %c0_21] : memref<1x64xf32, #tpu.memory_space<vmem>>, vector<1x64xf32>
    %19 = vector.broadcast %18 : vector<1x64xf32> to vector<8x64xf32>
    %20 = arith.addf %17, %19 : vector<8x64xf32>
    %cst_22 = arith.constant 2.500000e-01 : f32
    %21 = vector.broadcast %cst_22 : f32 to vector<8x64xf32>
    %22 = arith.mulf %10, %21 : vector<8x64xf32>
    %c0_23 = arith.constant 0 : index
    %c0_24 = arith.constant 0 : index
    %23 = vector.load %arg13[%c0_23, %c0_24] : memref<8x64xf32, #tpu.memory_space<vmem>>, vector<8x64xf32>
    tpu.vector_store %arg13[%c0_23, %c0_24], %22 {strides = array<i32>} : memref<8x64xf32, #tpu.memory_space<vmem>>, vector<8x64xf32>,
    %c0_25 = arith.constant 0 : index
    %c0_26 = arith.constant 0 : index
    %24 = vector.load %arg14[%c0_25, %c0_26] : memref<8x64xf32, #tpu.memory_space<vmem>>, vector<8x64xf32>
    tpu.vector_store %arg14[%c0_25, %c0_26], %15 {strides = array<i32>} : memref<8x64xf32, #tpu.memory_space<vmem>>, vector<8x64xf32>,
    %c0_27 = arith.constant 0 : index
    %c0_28 = arith.constant 0 : index
    %25 = vector.load %arg15[%c0_27, %c0_28] : memref<8x64xf32, #tpu.memory_space<vmem>>, vector<8x64xf32>
    tpu.vector_store %arg15[%c0_27, %c0_28], %20 {strides = array<i32>} : memref<8x64xf32, #tpu.memory_space<vmem>>, vector<8x64xf32>,
    %c0_29 = arith.constant 0 : index
    %c0_30 = arith.constant 0 : index
    %26 = vector.load %arg13[%c0_29, %c0_30] : memref<8x64xf32, #tpu.memory_space<vmem>>, vector<8x16xf32>
    %27 = vector.shape_cast %26 : vector<8x16xf32> to vector<1x8x16xf32>
    %c0_31 = arith.constant 0 : index
    %c0_32 = arith.constant 0 : index
    %28 = vector.load %arg14[%c0_31, %c0_32] : memref<8x64xf32, #tpu.memory_space<vmem>>, vector<8x16xf32>
    %29 = vector.shape_cast %28 : vector<8x16xf32> to vector<1x8x16xf32>
    %c0_33 = arith.constant 0 : index
    %c0_34 = arith.constant 0 : index
    %30 = vector.load %arg15[%c0_33, %c0_34] : memref<8x64xf32, #tpu.memory_space<vmem>>, vector<8x16xf32>
    %31 = vector.shape_cast %30 : vector<8x16xf32> to vector<1x8x16xf32>
    "tpu.trace_start"() <{level = 10 : i32, message = "bqd,bkd->bqk"}> : () -> ()
    %cst_35 = arith.constant dense<0.000000e+00> : vector<1x8x8xf32>
    %32 = tpu.matmul %27, %29, %cst_35 {dimension_numbers = #tpu.dot_dimension_numbers<[2], [2], [1], [1], [0, 0, 0, 1, 1, 1], [0], [0]>} : vector<1x8x16xf32>, vector<1x8x16xf32>, vector<1x8x8xf32> -> vector<1x8x8xf32>
    "tpu.trace_stop"() : () -> ()
    %cst_36 = arith.constant dense<0xFF800000> : vector<1x8xf32>
    %33 = vector.multi_reduction <maximumf>, %32, %cst_36 [2] : vector<1x8x8xf32> to vector<1x8xf32>
    %34 = vector.shape_cast %33 : vector<1x8xf32> to vector<1x8x1xf32>
    %35 = vector.broadcast %34 : vector<1x8x1xf32> to vector<1x8x8xf32>
    %36 = arith.subf %32, %35 : vector<1x8x8xf32>
    %37 = math.exp %36 : vector<1x8x8xf32>
    %cst_37 = arith.constant dense<0.000000e+00> : vector<1x8xf32>
    %38 = vector.multi_reduction <add>, %37, %cst_37 [2] : vector<1x8x8xf32> to vector<1x8xf32>
    %39 = vector.shape_cast %38 : vector<1x8xf32> to vector<1x8x1xf32>
    %40 = tpu.reciprocal %39 {approx = true} : vector<1x8x1xf32> -> vector<1x8x1xf32>
    %41 = vector.broadcast %40 : vector<1x8x1xf32> to vector<1x8x8xf32>
    %42 = arith.mulf %37, %41 : vector<1x8x8xf32>
    "tpu.trace_start"() <{level = 10 : i32, message = "bqk,bkd->bqd"}> : () -> ()
    %cst_38 = arith.constant dense<0.000000e+00> : vector<1x8x16xf32>
    %43 = tpu.matmul %42, %31, %cst_38 {dimension_numbers = #tpu.dot_dimension_numbers<[2], [1], [1], [2], [0, 0, 0, 1, 1, 2], [0], [0]>} : vector<1x8x8xf32>, vector<1x8x16xf32>, vector<1x8x16xf32> -> vector<1x8x16xf32>
    "tpu.trace_stop"() : () -> ()
    %44 = vector.shape_cast %43 : vector<1x8x16xf32> to vector<8x16xf32>
    %c0_39 = arith.constant 0 : index
    %c0_40 = arith.constant 0 : index
    %45 = vector.load %arg16[%c0_39, %c0_40] : memref<8x64xf32, #tpu.memory_space<vmem>>, vector<8x16xf32>
    tpu.vector_store %arg16[%c0_39, %c0_40], %44 {strides = array<i32>} : memref<8x64xf32, #tpu.memory_space<vmem>>, vector<8x16xf32>,
    %c0_41 = arith.constant 0 : index
    %c16 = arith.constant 16 : index
    %46 = vector.load %arg13[%c0_41, %c16] : memref<8x64xf32, #tpu.memory_space<vmem>>, vector<8x16xf32>
    %47 = vector.shape_cast %46 : vector<8x16xf32> to vector<1x8x16xf32>
    %c0_42 = arith.constant 0 : index
    %c16_43 = arith.constant 16 : index
    %48 = vector.load %arg14[%c0_42, %c16_43] : memref<8x64xf32, #tpu.memory_space<vmem>>, vector<8x16xf32>
    %49 = vector.shape_cast %48 : vector<8x16xf32> to vector<1x8x16xf32>
    %c0_44 = arith.constant 0 : index
    %c16_45 = arith.constant 16 : index
    %50 = vector.load %arg15[%c0_44, %c16_45] : memref<8x64xf32, #tpu.memory_space<vmem>>, vector<8x16xf32>
    %51 = vector.shape_cast %50 : vector<8x16xf32> to vector<1x8x16xf32>
    "tpu.trace_start"() <{level = 10 : i32, message = "bqd,bkd->bqk"}> : () -> ()
    %cst_46 = arith.constant dense<0.000000e+00> : vector<1x8x8xf32>
    %52 = tpu.matmul %47, %49, %cst_46 {dimension_numbers = #tpu.dot_dimension_numbers<[2], [2], [1], [1], [0, 0, 0, 1, 1, 1], [0], [0]>} : vector<1x8x16xf32>, vector<1x8x16xf32>, vector<1x8x8xf32> -> vector<1x8x8xf32>
    "tpu.trace_stop"() : () -> ()
    %cst_47 = arith.constant dense<0xFF800000> : vector<1x8xf32>
    %53 = vector.multi_reduction <maximumf>, %52, %cst_47 [2] : vector<1x8x8xf32> to vector<1x8xf32>
    %54 = vector.shape_cast %53 : vector<1x8xf32> to vector<1x8x1xf32>
    %55 = vector.broadcast %54 : vector<1x8x1xf32> to vector<1x8x8xf32>
    %56 = arith.subf %52, %55 : vector<1x8x8xf32>
    %57 = math.exp %56 : vector<1x8x8xf32>
    %cst_48 = arith.constant dense<0.000000e+00> : vector<1x8xf32>
    %58 = vector.multi_reduction <add>, %57, %cst_48 [2] : vector<1x8x8xf32> to vector<1x8xf32>
    %59 = vector.shape_cast %58 : vector<1x8xf32> to vector<1x8x1xf32>
    %60 = tpu.reciprocal %59 {approx = true} : vector<1x8x1xf32> -> vector<1x8x1xf32>
    %61 = vector.broadcast %60 : vector<1x8x1xf32> to vector<1x8x8xf32>
    %62 = arith.mulf %57, %61 : vector<1x8x8xf32>
    "tpu.trace_start"() <{level = 10 : i32, message = "bqk,bkd->bqd"}> : () -> ()
    %cst_49 = arith.constant dense<0.000000e+00> : vector<1x8x16xf32>
    %63 = tpu.matmul %62, %51, %cst_49 {dimension_numbers = #tpu.dot_dimension_numbers<[2], [1], [1], [2], [0, 0, 0, 1, 1, 2], [0], [0]>} : vector<1x8x8xf32>, vector<1x8x16xf32>, vector<1x8x16xf32> -> vector<1x8x16xf32>
    "tpu.trace_stop"() : () -> ()
    %64 = vector.shape_cast %63 : vector<1x8x16xf32> to vector<8x16xf32>
    %c0_50 = arith.constant 0 : index
    %c16_51 = arith.constant 16 : index
    %65 = vector.load %arg16[%c0_50, %c16_51] : memref<8x64xf32, #tpu.memory_space<vmem>>, vector<8x16xf32>
    tpu.vector_store %arg16[%c0_50, %c16_51], %64 {strides = array<i32>} : memref<8x64xf32, #tpu.memory_space<vmem>>, vector<8x16xf32>,
    %c0_52 = arith.constant 0 : index
    %c32 = arith.constant 32 : index
    %66 = vector.load %arg13[%c0_52, %c32] : memref<8x64xf32, #tpu.memory_space<vmem>>, vector<8x16xf32>
    %67 = vector.shape_cast %66 : vector<8x16xf32> to vector<1x8x16xf32>
    %c0_53 = arith.constant 0 : index
    %c32_54 = arith.constant 32 : index
    %68 = vector.load %arg14[%c0_53, %c32_54] : memref<8x64xf32, #tpu.memory_space<vmem>>, vector<8x16xf32>
    %69 = vector.shape_cast %68 : vector<8x16xf32> to vector<1x8x16xf32>
    %c0_55 = arith.constant 0 : index
    %c32_56 = arith.constant 32 : index
    %70 = vector.load %arg15[%c0_55, %c32_56] : memref<8x64xf32, #tpu.memory_space<vmem>>, vector<8x16xf32>
    %71 = vector.shape_cast %70 : vector<8x16xf32> to vector<1x8x16xf32>
    "tpu.trace_start"() <{level = 10 : i32, message = "bqd,bkd->bqk"}> : () -> ()
    %cst_57 = arith.constant dense<0.000000e+00> : vector<1x8x8xf32>
    %72 = tpu.matmul %67, %69, %cst_57 {dimension_numbers = #tpu.dot_dimension_numbers<[2], [2], [1], [1], [0, 0, 0, 1, 1, 1], [0], [0]>} : vector<1x8x16xf32>, vector<1x8x16xf32>, vector<1x8x8xf32> -> vector<1x8x8xf32>
    "tpu.trace_stop"() : () -> ()
    %cst_58 = arith.constant dense<0xFF800000> : vector<1x8xf32>
    %73 = vector.multi_reduction <maximumf>, %72, %cst_58 [2] : vector<1x8x8xf32> to vector<1x8xf32>
    %74 = vector.shape_cast %73 : vector<1x8xf32> to vector<1x8x1xf32>
    %75 = vector.broadcast %74 : vector<1x8x1xf32> to vector<1x8x8xf32>
    %76 = arith.subf %72, %75 : vector<1x8x8xf32>
    %77 = math.exp %76 : vector<1x8x8xf32>
    %cst_59 = arith.constant dense<0.000000e+00> : vector<1x8xf32>
    %78 = vector.multi_reduction <add>, %77, %cst_59 [2] : vector<1x8x8xf32> to vector<1x8xf32>
    %79 = vector.shape_cast %78 : vector<1x8xf32> to vector<1x8x1xf32>
    %80 = tpu.reciprocal %79 {approx = true} : vector<1x8x1xf32> -> vector<1x8x1xf32>
    %81 = vector.broadcast %80 : vector<1x8x1xf32> to vector<1x8x8xf32>
    %82 = arith.mulf %77, %81 : vector<1x8x8xf32>
    "tpu.trace_start"() <{level = 10 : i32, message = "bqk,bkd->bqd"}> : () -> ()
    %cst_60 = arith.constant dense<0.000000e+00> : vector<1x8x16xf32>
    %83 = tpu.matmul %82, %71, %cst_60 {dimension_numbers = #tpu.dot_dimension_numbers<[2], [1], [1], [2], [0, 0, 0, 1, 1, 2], [0], [0]>} : vector<1x8x8xf32>, vector<1x8x16xf32>, vector<1x8x16xf32> -> vector<1x8x16xf32>
    "tpu.trace_stop"() : () -> ()
    %84 = vector.shape_cast %83 : vector<1x8x16xf32> to vector<8x16xf32>
    %c0_61 = arith.constant 0 : index
    %c32_62 = arith.constant 32 : index
    %85 = vector.load %arg16[%c0_61, %c32_62] : memref<8x64xf32, #tpu.memory_space<vmem>>, vector<8x16xf32>
    tpu.vector_store %arg16[%c0_61, %c32_62], %84 {strides = array<i32>} : memref<8x64xf32, #tpu.memory_space<vmem>>, vector<8x16xf32>,
    %c0_63 = arith.constant 0 : index
    %c48 = arith.constant 48 : index
    %86 = vector.load %arg13[%c0_63, %c48] : memref<8x64xf32, #tpu.memory_space<vmem>>, vector<8x16xf32>
    %87 = vector.shape_cast %86 : vector<8x16xf32> to vector<1x8x16xf32>
    %c0_64 = arith.constant 0 : index
    %c48_65 = arith.constant 48 : index
    %88 = vector.load %arg14[%c0_64, %c48_65] : memref<8x64xf32, #tpu.memory_space<vmem>>, vector<8x16xf32>
    %89 = vector.shape_cast %88 : vector<8x16xf32> to vector<1x8x16xf32>
    %c0_66 = arith.constant 0 : index
    %c48_67 = arith.constant 48 : index
    %90 = vector.load %arg15[%c0_66, %c48_67] : memref<8x64xf32, #tpu.memory_space<vmem>>, vector<8x16xf32>
    %91 = vector.shape_cast %90 : vector<8x16xf32> to vector<1x8x16xf32>
    "tpu.trace_start"() <{level = 10 : i32, message = "bqd,bkd->bqk"}> : () -> ()
    %cst_68 = arith.constant dense<0.000000e+00> : vector<1x8x8xf32>
    %92 = tpu.matmul %87, %89, %cst_68 {dimension_numbers = #tpu.dot_dimension_numbers<[2], [2], [1], [1], [0, 0, 0, 1, 1, 1], [0], [0]>} : vector<1x8x16xf32>, vector<1x8x16xf32>, vector<1x8x8xf32> -> vector<1x8x8xf32>
    "tpu.trace_stop"() : () -> ()
    %cst_69 = arith.constant dense<0xFF800000> : vector<1x8xf32>
    %93 = vector.multi_reduction <maximumf>, %92, %cst_69 [2] : vector<1x8x8xf32> to vector<1x8xf32>
    %94 = vector.shape_cast %93 : vector<1x8xf32> to vector<1x8x1xf32>
    %95 = vector.broadcast %94 : vector<1x8x1xf32> to vector<1x8x8xf32>
    %96 = arith.subf %92, %95 : vector<1x8x8xf32>
    %97 = math.exp %96 : vector<1x8x8xf32>
    %cst_70 = arith.constant dense<0.000000e+00> : vector<1x8xf32>
    %98 = vector.multi_reduction <add>, %97, %cst_70 [2] : vector<1x8x8xf32> to vector<1x8xf32>
    %99 = vector.shape_cast %98 : vector<1x8xf32> to vector<1x8x1xf32>
    %100 = tpu.reciprocal %99 {approx = true} : vector<1x8x1xf32> -> vector<1x8x1xf32>
    %101 = vector.broadcast %100 : vector<1x8x1xf32> to vector<1x8x8xf32>
    %102 = arith.mulf %97, %101 : vector<1x8x8xf32>
    "tpu.trace_start"() <{level = 10 : i32, message = "bqk,bkd->bqd"}> : () -> ()
    %cst_71 = arith.constant dense<0.000000e+00> : vector<1x8x16xf32>
    %103 = tpu.matmul %102, %91, %cst_71 {dimension_numbers = #tpu.dot_dimension_numbers<[2], [1], [1], [2], [0, 0, 0, 1, 1, 2], [0], [0]>} : vector<1x8x8xf32>, vector<1x8x16xf32>, vector<1x8x16xf32> -> vector<1x8x16xf32>
    "tpu.trace_stop"() : () -> ()
    %104 = vector.shape_cast %103 : vector<1x8x16xf32> to vector<8x16xf32>
    %c0_72 = arith.constant 0 : index
    %c48_73 = arith.constant 48 : index
    %105 = vector.load %arg16[%c0_72, %c48_73] : memref<8x64xf32, #tpu.memory_space<vmem>>, vector<8x16xf32>
    tpu.vector_store %arg16[%c0_72, %c48_73], %104 {strides = array<i32>} : memref<8x64xf32, #tpu.memory_space<vmem>>, vector<8x16xf32>,
    %c0_74 = arith.constant 0 : index
    %c0_75 = arith.constant 0 : index
    %106 = vector.load %arg16[%c0_74, %c0_75] : memref<8x64xf32, #tpu.memory_space<vmem>>, vector<8x64xf32>
    %c0_76 = arith.constant 0 : index
    %c0_77 = arith.constant 0 : index
    %107 = vector.load %arg10[%c0_76, %c0_77] : memref<64x32xf32, #tpu.memory_space<vmem>>, vector<64x32xf32>
    %cst_78 = arith.constant dense<0.000000e+00> : vector<8x32xf32>
    %108 = tpu.matmul %106, %107, %cst_78 {dimension_numbers = #tpu.dot_dimension_numbers<[1], [0], [0], [1], [0, 0, 1, 1], [], []>} : vector<8x64xf32>, vector<64x32xf32>, vector<8x32xf32> -> vector<8x32xf32>
    %c0_79 = arith.constant 0 : index
    %c0_80 = arith.constant 0 : index
    %109 = vector.load %arg11[%c0_79, %c0_80] : memref<1x32xf32, #tpu.memory_space<vmem>>, vector<1x32xf32>
    %110 = vector.broadcast %109 : vector<1x32xf32> to vector<8x32xf32>
    %111 = arith.addf %108, %110 : vector<8x32xf32>
    %112 = vector.shape_cast %111 : vector<8x32xf32> to vector<1x8x32xf32>
    %c0_81 = arith.constant 0 : index
    %c0_82 = arith.constant 0 : index
    %c0_83 = arith.constant 0 : index
    %113 = vector.load %arg12[%c0_81, %c0_82, %c0_83] : memref<1x8x32xf32, #tpu.memory_space<vmem>>, vector<1x8x32xf32>
    tpu.vector_store %arg12[%c0_81, %c0_82, %c0_83], %112 {strides = array<i32>} : memref<1x8x32xf32, #tpu.memory_space<vmem>>, vector<1x8x32xf32>,
    return
  }
  func.func @transform_0(%arg0: i32) -> (i32, i32, i32) {
    %c0_i32 = arith.constant 0 : i32
    %c0_i32_0 = arith.constant 0 : i32
    %c0_i32_1 = arith.constant 0 : i32
    return %arg0, %c0_i32, %c0_i32_0 : i32, i32, i32
  }
  func.func @transform_1(%arg0: i32) -> (i32, i32, i32) {
    %c0_i32 = arith.constant 0 : i32
    %c0_i32_0 = arith.constant 0 : i32
    %c0_i32_1 = arith.constant 0 : i32
    return %arg0, %c0_i32, %c0_i32_0 : i32, i32, i32
  }
  func.func @transform_2(%arg0: i32) -> (i32, i32, i32) {
    %c0_i32 = arith.constant 0 : i32
    %c0_i32_0 = arith.constant 0 : i32
    %c0_i32_1 = arith.constant 0 : i32
    return %arg0, %c0_i32, %c0_i32_0 : i32, i32, i32
  }
  func.func @transform_3(%arg0: i32) -> (i32, i32) {
    %c0_i32 = arith.constant 0 : i32
    %c0_i32_0 = arith.constant 0 : i32
    %c0_i32_1 = arith.constant 0 : i32
    return %c0_i32, %c0_i32_0 : i32, i32
  }
  func.func @transform_4(%arg0: i32) -> (i32, i32) {
    %c0_i32 = arith.constant 0 : i32
    %c0_i32_0 = arith.constant 0 : i32
    %c0_i32_1 = arith.constant 0 : i32
    return %c0_i32, %c0_i32_0 : i32, i32
  }
  func.func @transform_5(%arg0: i32) -> (i32, i32) {
    %c0_i32 = arith.constant 0 : i32
    %c0_i32_0 = arith.constant 0 : i32
    %c0_i32_1 = arith.constant 0 : i32
    return %c0_i32, %c0_i32_0 : i32, i32
  }
  func.func @transform_6(%arg0: i32) -> (i32, i32) {
    %c0_i32 = arith.constant 0 : i32
    %c0_i32_0 = arith.constant 0 : i32
    %c0_i32_1 = arith.constant 0 : i32
    return %c0_i32, %c0_i32_0 : i32, i32
  }
  func.func @transform_7(%arg0: i32) -> (i32, i32) {
    %c0_i32 = arith.constant 0 : i32
    %c0_i32_0 = arith.constant 0 : i32
    %c0_i32_1 = arith.constant 0 : i32
    return %c0_i32, %c0_i32_0 : i32, i32
  }
  func.func @transform_8(%arg0: i32) -> (i32, i32) {
    %c0_i32 = arith.constant 0 : i32
    %c0_i32_0 = arith.constant 0 : i32
    %c0_i32_1 = arith.constant 0 : i32
    return %c0_i32, %c0_i32_0 : i32, i32
  }
  func.func @transform_9(%arg0: i32) -> (i32, i32) {
    %c0_i32 = arith.constant 0 : i32
    %c0_i32_0 = arith.constant 0 : i32
    %c0_i32_1 = arith.constant 0 : i32
    return %c0_i32, %c0_i32_0 : i32, i32
  }
  func.func @transform_10(%arg0: i32) -> (i32, i32) {
    %c0_i32 = arith.constant 0 : i32
    %c0_i32_0 = arith.constant 0 : i32
    %c0_i32_1 = arith.constant 0 : i32
    return %c0_i32, %c0_i32_0 : i32, i32
  }
  func.func @transform_11(%arg0: i32) -> (i32, i32, i32) {
    %c0_i32 = arith.constant 0 : i32
    %c0_i32_0 = arith.constant 0 : i32
    %c0_i32_1 = arith.constant 0 : i32
    return %arg0, %c0_i32, %c0_i32_0 : i32, i32, i32
  }
}

module attributes {stable_mosaic.version = 11 : i64} {
  func.func @_mha_kernel(%arg0: i32, %arg1: memref<1x8x32xf32, #tpu.memory_space<vmem>>, %arg2: memref<1x8x32xf32, #tpu.memory_space<vmem>>, %arg3: memref<1x8x32xf32, #tpu.memory_space<vmem>>, %arg4: memref<32x64xf32, #tpu.memory_space<vmem>>, %arg5: memref<1x64xf32, #tpu.memory_space<vmem>>, %arg6: memref<32x64xf32, #tpu.memory_space<vmem>>, %arg7: memref<1x64xf32, #tpu.memory_space<vmem>>, %arg8: memref<32x64xf32, #tpu.memory_space<vmem>>, %arg9: memref<1x64xf32, #tpu.memory_space<vmem>>, %arg10: memref<64x32xf32, #tpu.memory_space<vmem>>, %arg11: memref<1x32xf32, #tpu.memory_space<vmem>>, %arg12: memref<1x8x32xf32, #tpu.memory_space<vmem>>, %arg13: memref<8x64xf32, #tpu.memory_space<vmem>>, %arg14: memref<8x64xf32, #tpu.memory_space<vmem>>, %arg15: memref<8x64xf32, #tpu.memory_space<vmem>>, %arg16: memref<8x64xf32, #tpu.memory_space<vmem>>) attributes {dimension_semantics = [#tpu.dimension_semantics<parallel>], iteration_bounds = array<i64: 2>, scalar_prefetch = 0 : i64, scratch_operands = 4 : i64, tpu.core_type = #tpu.core_type<tc>, window_params = [{transform_indices = @transform_0, window_bounds = array<i64: 1, 8, 32>}, {transform_indices = @transform_1, window_bounds = array<i64: 1, 8, 32>}, {transform_indices = @transform_2, window_bounds = array<i64: 1, 8, 32>}, {pipeline_mode = #tpu.pipeline_mode<synchronous>, transform_indices = @transform_3, window_bounds = array<i64: 32, 64>}, {pipeline_mode = #tpu.pipeline_mode<synchronous>, transform_indices = @transform_4, window_bounds = array<i64: 1, 64>}, {pipeline_mode = #tpu.pipeline_mode<synchronous>, transform_indices = @transform_5, window_bounds = array<i64: 32, 64>}, {pipeline_mode = #tpu.pipeline_mode<synchronous>, transform_indices = @transform_6, window_bounds = array<i64: 1, 64>}, {pipeline_mode = #tpu.pipeline_mode<synchronous>, transform_indices = @transform_7, window_bounds = array<i64: 32, 64>}, {pipeline_mode = #tpu.pipeline_mode<synchronous>, transform_indices = @transform_8, window_bounds = array<i64: 1, 64>}, {pipeline_mode = #tpu.pipeline_mode<synchronous>, transform_indices = @transform_9, window_bounds = array<i64: 64, 32>}, {pipeline_mode = #tpu.pipeline_mode<synchronous>, transform_indices = @transform_10, window_bounds = array<i64: 1, 32>}, {transform_indices = @transform_11, window_bounds = array<i64: 1, 8, 32>}]} {
    %c0 = arith.constant 0 : index
    %c0_0 = arith.constant 0 : index
    %c0_1 = arith.constant 0 : index
    %0 = vector.load %arg1[%c0, %c0_0, %c0_1] : memref<1x8x32xf32, #tpu.memory_space<vmem>>, vector<1x8x32xf32>
    %1 = vector.shape_cast %0 : vector<1x8x32xf32> to vector<8x32xf32>
    %c0_2 = arith.constant 0 : index
    %c0_3 = arith.constant 0 : index
    %c0_4 = arith.constant 0 : index
    %2 = vector.load %arg2[%c0_2, %c0_3, %c0_4] : memref<1x8x32xf32, #tpu.memory_space<vmem>>, vector<1x8x32xf32>
    %3 = vector.shape_cast %2 : vector<1x8x32xf32> to vector<8x32xf32>
    %c0_5 = arith.constant 0 : index
    %c0_6 = arith.constant 0 : index
    %c0_7 = arith.constant 0 : index
    %4 = vector.load %arg3[%c0_5, %c0_6, %c0_7] : memref<1x8x32xf32, #tpu.memory_space<vmem>>, vector<1x8x32xf32>
    %5 = vector.shape_cast %4 : vector<1x8x32xf32> to vector<8x32xf32>
    %c0_8 = arith.constant 0 : index
    %c0_9 = arith.constant 0 : index
    %6 = vector.load %arg4[%c0_8, %c0_9] : memref<32x64xf32, #tpu.memory_space<vmem>>, vector<32x64xf32>
    %cst = arith.constant dense<0.000000e+00> : vector<8x64xf32>
    %7 = tpu.matmul %1, %6, %cst {dimension_numbers = #tpu.dot_dimension_numbers<[1], [0], [0], [1], [0, 0, 1, 1], [], []>} : vector<8x32xf32>, vector<32x64xf32>, vector<8x64xf32> -> vector<8x64xf32>
    %c0_10 = arith.constant 0 : index
    %c0_11 = arith.constant 0 : index
    %8 = vector.load %arg5[%c0_10, %c0_11] : memref<1x64xf32, #tpu.memory_space<vmem>>, vector<1x64xf32>
    %9 = vector.broadcast %8 : vector<1x64xf32> to vector<8x64xf32>
    %10 = arith.addf %7, %9 : vector<8x64xf32>
    %c0_12 = arith.constant 0 : index
    %c0_13 = arith.constant 0 : index
    %11 = vector.load %arg6[%c0_12, %c0_13] : memref<32x64xf32, #tpu.memory_space<vmem>>, vector<32x64xf32>
    %cst_14 = arith.constant dense<0.000000e+00> : vector<8x64xf32>
    %12 = tpu.matmul %3, %11, %cst_14 {dimension_numbers = #tpu.dot_dimension_numbers<[1], [0], [0], [1], [0, 0, 1, 1], [], []>} : vector<8x32xf32>, vector<32x64xf32>, vector<8x64xf32> -> vector<8x64xf32>
    %c0_15 = arith.constant 0 : index
    %c0_16 = arith.constant 0 : index
    %13 = vector.load %arg7[%c0_15, %c0_16] : memref<1x64xf32, #tpu.memory_space<vmem>>, vector<1x64xf32>
    %14 = vector.broadcast %13 : vector<1x64xf32> to vector<8x64xf32>
    %15 = arith.addf %12, %14 : vector<8x64xf32>
    %c0_17 = arith.constant 0 : index
    %c0_18 = arith.constant 0 : index
    %16 = vector.load %arg8[%c0_17, %c0_18] : memref<32x64xf32, #tpu.memory_space<vmem>>, vector<32x64xf32>
    %cst_19 = arith.constant dense<0.000000e+00> : vector<8x64xf32>
    %17 = tpu.matmul %5, %16, %cst_19 {dimension_numbers = #tpu.dot_dimension_numbers<[1], [0], [0], [1], [0, 0, 1, 1], [], []>} : vector<8x32xf32>, vector<32x64xf32>, vector<8x64xf32> -> vector<8x64xf32>
    %c0_20 = arith.constant 0 : index
    %c0_21 = arith.constant 0 : index
    %18 = vector.load %arg9[%c0_20, %c0_21] : memref<1x64xf32, #tpu.memory_space<vmem>>, vector<1x64xf32>
    %19 = vector.broadcast %18 : vector<1x64xf32> to vector<8x64xf32>
    %20 = arith.addf %17, %19 : vector<8x64xf32>
    %cst_22 = arith.constant 2.500000e-01 : f32
    %21 = vector.broadcast %cst_22 : f32 to vector<8x64xf32>
    %22 = arith.mulf %10, %21 : vector<8x64xf32>
    %c0_23 = arith.constant 0 : index
    %c0_24 = arith.constant 0 : index
    %23 = vector.load %arg13[%c0_23, %c0_24] : memref<8x64xf32, #tpu.memory_space<vmem>>, vector<8x64xf32>
    tpu.vector_store %arg13[%c0_23, %c0_24], %22 {strides = array<i32>} : memref<8x64xf32, #tpu.memory_space<vmem>>, vector<8x64xf32>,
    %c0_25 = arith.constant 0 : index
    %c0_26 = arith.constant 0 : index
    %24 = vector.load %arg14[%c0_25, %c0_26] : memref<8x64xf32, #tpu.memory_space<vmem>>, vector<8x64xf32>
    tpu.vector_store %arg14[%c0_25, %c0_26], %15 {strides = array<i32>} : memref<8x64xf32, #tpu.memory_space<vmem>>, vector<8x64xf32>,
    %c0_27 = arith.constant 0 : index
    %c0_28 = arith.constant 0 : index
    %25 = vector.load %arg15[%c0_27, %c0_28] : memref<8x64xf32, #tpu.memory_space<vmem>>, vector<8x64xf32>
    tpu.vector_store %arg15[%c0_27, %c0_28], %20 {strides = array<i32>} : memref<8x64xf32, #tpu.memory_space<vmem>>, vector<8x64xf32>,
    %c0_29 = arith.constant 0 : index
    %c0_30 = arith.constant 0 : index
    %26 = vector.load %arg13[%c0_29, %c0_30] : memref<8x64xf32, #tpu.memory_space<vmem>>, vector<8x16xf32>
    %27 = vector.shape_cast %26 : vector<8x16xf32> to vector<1x8x16xf32>
    %c0_31 = arith.constant 0 : index
    %c0_32 = arith.constant 0 : index
    %28 = vector.load %arg14[%c0_31, %c0_32] : memref<8x64xf32, #tpu.memory_space<vmem>>, vector<8x16xf32>
    %29 = vector.shape_cast %28 : vector<8x16xf32> to vector<1x8x16xf32>
    %c0_33 = arith.constant 0 : index
    %c0_34 = arith.constant 0 : index
    %30 = vector.load %arg15[%c0_33, %c0_34] : memref<8x64xf32, #tpu.memory_space<vmem>>, vector<8x16xf32>
    %31 = vector.shape_cast %30 : vector<8x16xf32> to vector<1x8x16xf32>
    "tpu.trace_start"() <{level = 10 : i32, message = "bqd,bkd->bqk"}> : () -> ()
    %cst_35 = arith.constant dense<0.000000e+00> : vector<1x8x8xf32>
    %32 = tpu.matmul %27, %29, %cst_35 {dimension_numbers = #tpu.dot_dimension_numbers<[2], [2], [1], [1], [0, 0, 0, 1, 1, 1], [0], [0]>} : vector<1x8x16xf32>, vector<1x8x16xf32>, vector<1x8x8xf32> -> vector<1x8x8xf32>
    "tpu.trace_stop"() : () -> ()
    %cst_36 = arith.constant dense<0xFF800000> : vector<1x8xf32>
    %33 = vector.multi_reduction <maximumf>, %32, %cst_36 [2] : vector<1x8x8xf32> to vector<1x8xf32>
    %34 = vector.shape_cast %33 : vector<1x8xf32> to vector<1x8x1xf32>
    %35 = vector.broadcast %34 : vector<1x8x1xf32> to vector<1x8x8xf32>
    %36 = arith.subf %32, %35 : vector<1x8x8xf32>
    %37 = math.exp %36 : vector<1x8x8xf32>
    %cst_37 = arith.constant dense<0.000000e+00> : vector<1x8xf32>
    %38 = vector.multi_reduction <add>, %37, %cst_37 [2] : vector<1x8x8xf32> to vector<1x8xf32>
    %39 = vector.shape_cast %38 : vector<1x8xf32> to vector<1x8x1xf32>
    %40 = tpu.reciprocal %39 {approx = true} : vector<1x8x1xf32> -> vector<1x8x1xf32>
    %41 = vector.broadcast %40 : vector<1x8x1xf32> to vector<1x8x8xf32>
    %42 = arith.mulf %37, %41 : vector<1x8x8xf32>
    "tpu.trace_start"() <{level = 10 : i32, message = "bqk,bkd->bqd"}> : () -> ()
    %cst_38 = arith.constant dense<0.000000e+00> : vector<1x8x16xf32>
    %43 = tpu.matmul %42, %31, %cst_38 {dimension_numbers = #tpu.dot_dimension_numbers<[2], [1], [1], [2], [0, 0, 0, 1, 1, 2], [0], [0]>} : vector<1x8x8xf32>, vector<1x8x16xf32>, vector<1x8x16xf32> -> vector<1x8x16xf32>
    "tpu.trace_stop"() : () -> ()
    %44 = vector.shape_cast %43 : vector<1x8x16xf32> to vector<8x16xf32>
    %c0_39 = arith.constant 0 : index
    %c0_40 = arith.constant 0 : index
    %45 = vector.load %arg16[%c0_39, %c0_40] : memref<8x64xf32, #tpu.memory_space<vmem>>, vector<8x16xf32>
    tpu.vector_store %arg16[%c0_39, %c0_40], %44 {strides = array<i32>} : memref<8x64xf32, #tpu.memory_space<vmem>>, vector<8x16xf32>,
    %c0_41 = arith.constant 0 : index
    %c16 = arith.constant 16 : index
    %46 = vector.load %arg13[%c0_41, %c16] : memref<8x64xf32, #tpu.memory_space<vmem>>, vector<8x16xf32>
    %47 = vector.shape_cast %46 : vector<8x16xf32> to vector<1x8x16xf32>
    %c0_42 = arith.constant 0 : index
    %c16_43 = arith.constant 16 : index
    %48 = vector.load %arg14[%c0_42, %c16_43] : memref<8x64xf32, #tpu.memory_space<vmem>>, vector<8x16xf32>
    %49 = vector.shape_cast %48 : vector<8x16xf32> to vector<1x8x16xf32>
    %c0_44 = arith.constant 0 : index
    %c16_45 = arith.constant 16 : index
    %50 = vector.load %arg15[%c0_44, %c16_45] : memref<8x64xf32, #tpu.memory_space<vmem>>, vector<8x16xf32>
    %51 = vector.shape_cast %50 : vector<8x16xf32> to vector<1x8x16xf32>
    "tpu.trace_start"() <{level = 10 : i32, message = "bqd,bkd->bqk"}> : () -> ()
    %cst_46 = arith.constant dense<0.000000e+00> : vector<1x8x8xf32>
    %52 = tpu.matmul %47, %49, %cst_46 {dimension_numbers = #tpu.dot_dimension_numbers<[2], [2], [1], [1], [0, 0, 0, 1, 1, 1], [0], [0]>} : vector<1x8x16xf32>, vector<1x8x16xf32>, vector<1x8x8xf32> -> vector<1x8x8xf32>
    "tpu.trace_stop"() : () -> ()
    %cst_47 = arith.constant dense<0xFF800000> : vector<1x8xf32>
    %53 = vector.multi_reduction <maximumf>, %52, %cst_47 [2] : vector<1x8x8xf32> to vector<1x8xf32>
    %54 = vector.shape_cast %53 : vector<1x8xf32> to vector<1x8x1xf32>
    %55 = vector.broadcast %54 : vector<1x8x1xf32> to vector<1x8x8xf32>
    %56 = arith.subf %52, %55 : vector<1x8x8xf32>
    %57 = math.exp %56 : vector<1x8x8xf32>
    %cst_48 = arith.constant dense<0.000000e+00> : vector<1x8xf32>
    %58 = vector.multi_reduction <add>, %57, %cst_48 [2] : vector<1x8x8xf32> to vector<1x8xf32>
    %59 = vector.shape_cast %58 : vector<1x8xf32> to vector<1x8x1xf32>
    %60 = tpu.reciprocal %59 {approx = true} : vector<1x8x1xf32> -> vector<1x8x1xf32>
    %61 = vector.broadcast %60 : vector<1x8x1xf32> to vector<1x8x8xf32>
    %62 = arith.mulf %57, %61 : vector<1x8x8xf32>
    "tpu.trace_start"() <{level = 10 : i32, message = "bqk,bkd->bqd"}> : () -> ()
    %cst_49 = arith.constant dense<0.000000e+00> : vector<1x8x16xf32>
    %63 = tpu.matmul %62, %51, %cst_49 {dimension_numbers = #tpu.dot_dimension_numbers<[2], [1], [1], [2], [0, 0, 0, 1, 1, 2], [0], [0]>} : vector<1x8x8xf32>, vector<1x8x16xf32>, vector<1x8x16xf32> -> vector<1x8x16xf32>
    "tpu.trace_stop"() : () -> ()
    %64 = vector.shape_cast %63 : vector<1x8x16xf32> to vector<8x16xf32>
    %c0_50 = arith.constant 0 : index
    %c16_51 = arith.constant 16 : index
    %65 = vector.load %arg16[%c0_50, %c16_51] : memref<8x64xf32, #tpu.memory_space<vmem>>, vector<8x16xf32>
    tpu.vector_store %arg16[%c0_50, %c16_51], %64 {strides = array<i32>} : memref<8x64xf32, #tpu.memory_space<vmem>>, vector<8x16xf32>,
    %c0_52 = arith.constant 0 : index
    %c32 = arith.constant 32 : index
    %66 = vector.load %arg13[%c0_52, %c32] : memref<8x64xf32, #tpu.memory_space<vmem>>, vector<8x16xf32>
    %67 = vector.shape_cast %66 : vector<8x16xf32> to vector<1x8x16xf32>
    %c0_53 = arith.constant 0 : index
    %c32_54 = arith.constant 32 : index
    %68 = vector.load %arg14[%c0_53, %c32_54] : memref<8x64xf32, #tpu.memory_space<vmem>>, vector<8x16xf32>
    %69 = vector.shape_cast %68 : vector<8x16xf32> to vector<1x8x16xf32>
    %c0_55 = arith.constant 0 : index
    %c32_56 = arith.constant 32 : index
    %70 = vector.load %arg15[%c0_55, %c32_56] : memref<8x64xf32, #tpu.memory_space<vmem>>, vector<8x16xf32>
    %71 = vector.shape_cast %70 : vector<8x16xf32> to vector<1x8x16xf32>
    "tpu.trace_start"() <{level = 10 : i32, message = "bqd,bkd->bqk"}> : () -> ()
    %cst_57 = arith.constant dense<0.000000e+00> : vector<1x8x8xf32>
    %72 = tpu.matmul %67, %69, %cst_57 {dimension_numbers = #tpu.dot_dimension_numbers<[2], [2], [1], [1], [0, 0, 0, 1, 1, 1], [0], [0]>} : vector<1x8x16xf32>, vector<1x8x16xf32>, vector<1x8x8xf32> -> vector<1x8x8xf32>
    "tpu.trace_stop"() : () -> ()
    %cst_58 = arith.constant dense<0xFF800000> : vector<1x8xf32>
    %73 = vector.multi_reduction <maximumf>, %72, %cst_58 [2] : vector<1x8x8xf32> to vector<1x8xf32>
    %74 = vector.shape_cast %73 : vector<1x8xf32> to vector<1x8x1xf32>
    %75 = vector.broadcast %74 : vector<1x8x1xf32> to vector<1x8x8xf32>
    %76 = arith.subf %72, %75 : vector<1x8x8xf32>
    %77 = math.exp %76 : vector<1x8x8xf32>
    %cst_59 = arith.constant dense<0.000000e+00> : vector<1x8xf32>
    %78 = vector.multi_reduction <add>, %77, %cst_59 [2] : vector<1x8x8xf32> to vector<1x8xf32>
    %79 = vector.shape_cast %78 : vector<1x8xf32> to vector<1x8x1xf32>
    %80 = tpu.reciprocal %79 {approx = true} : vector<1x8x1xf32> -> vector<1x8x1xf32>
    %81 = vector.broadcast %80 : vector<1x8x1xf32> to vector<1x8x8xf32>
    %82 = arith.mulf %77, %81 : vector<1x8x8xf32>
    "tpu.trace_start"() <{level = 10 : i32, message = "bqk,bkd->bqd"}> : () -> ()
    %cst_60 = arith.constant dense<0.000000e+00> : vector<1x8x16xf32>
    %83 = tpu.matmul %82, %71, %cst_60 {dimension_numbers = #tpu.dot_dimension_numbers<[2], [1], [1], [2], [0, 0, 0, 1, 1, 2], [0], [0]>} : vector<1x8x8xf32>, vector<1x8x16xf32>, vector<1x8x16xf32> -> vector<1x8x16xf32>
    "tpu.trace_stop"() : () -> ()
    %84 = vector.shape_cast %83 : vector<1x8x16xf32> to vector<8x16xf32>
    %c0_61 = arith.constant 0 : index
    %c32_62 = arith.constant 32 : index
    %85 = vector.load %arg16[%c0_61, %c32_62] : memref<8x64xf32, #tpu.memory_space<vmem>>, vector<8x16xf32>
    tpu.vector_store %arg16[%c0_61, %c32_62], %84 {strides = array<i32>} : memref<8x64xf32, #tpu.memory_space<vmem>>, vector<8x16xf32>,
    %c0_63 = arith.constant 0 : index
    %c48 = arith.constant 48 : index
    %86 = vector.load %arg13[%c0_63, %c48] : memref<8x64xf32, #tpu.memory_space<vmem>>, vector<8x16xf32>
    %87 = vector.shape_cast %86 : vector<8x16xf32> to vector<1x8x16xf32>
    %c0_64 = arith.constant 0 : index
    %c48_65 = arith.constant 48 : index
    %88 = vector.load %arg14[%c0_64, %c48_65] : memref<8x64xf32, #tpu.memory_space<vmem>>, vector<8x16xf32>
    %89 = vector.shape_cast %88 : vector<8x16xf32> to vector<1x8x16xf32>
    %c0_66 = arith.constant 0 : index
    %c48_67 = arith.constant 48 : index
    %90 = vector.load %arg15[%c0_66, %c48_67] : memref<8x64xf32, #tpu.memory_space<vmem>>, vector<8x16xf32>
    %91 = vector.shape_cast %90 : vector<8x16xf32> to vector<1x8x16xf32>
    "tpu.trace_start"() <{level = 10 : i32, message = "bqd,bkd->bqk"}> : () -> ()
    %cst_68 = arith.constant dense<0.000000e+00> : vector<1x8x8xf32>
    %92 = tpu.matmul %87, %89, %cst_68 {dimension_numbers = #tpu.dot_dimension_numbers<[2], [2], [1], [1], [0, 0, 0, 1, 1, 1], [0], [0]>} : vector<1x8x16xf32>, vector<1x8x16xf32>, vector<1x8x8xf32> -> vector<1x8x8xf32>
    "tpu.trace_stop"() : () -> ()
    %cst_69 = arith.constant dense<0xFF800000> : vector<1x8xf32>
    %93 = vector.multi_reduction <maximumf>, %92, %cst_69 [2] : vector<1x8x8xf32> to vector<1x8xf32>
    %94 = vector.shape_cast %93 : vector<1x8xf32> to vector<1x8x1xf32>
    %95 = vector.broadcast %94 : vector<1x8x1xf32> to vector<1x8x8xf32>
    %96 = arith.subf %92, %95 : vector<1x8x8xf32>
    %97 = math.exp %96 : vector<1x8x8xf32>
    %cst_70 = arith.constant dense<0.000000e+00> : vector<1x8xf32>
    %98 = vector.multi_reduction <add>, %97, %cst_70 [2] : vector<1x8x8xf32> to vector<1x8xf32>
    %99 = vector.shape_cast %98 : vector<1x8xf32> to vector<1x8x1xf32>
    %100 = tpu.reciprocal %99 {approx = true} : vector<1x8x1xf32> -> vector<1x8x1xf32>
    %101 = vector.broadcast %100 : vector<1x8x1xf32> to vector<1x8x8xf32>
    %102 = arith.mulf %97, %101 : vector<1x8x8xf32>
    "tpu.trace_start"() <{level = 10 : i32, message = "bqk,bkd->bqd"}> : () -> ()
    %cst_71 = arith.constant dense<0.000000e+00> : vector<1x8x16xf32>
    %103 = tpu.matmul %102, %91, %cst_71 {dimension_numbers = #tpu.dot_dimension_numbers<[2], [1], [1], [2], [0, 0, 0, 1, 1, 2], [0], [0]>} : vector<1x8x8xf32>, vector<1x8x16xf32>, vector<1x8x16xf32> -> vector<1x8x16xf32>
    "tpu.trace_stop"() : () -> ()
    %104 = vector.shape_cast %103 : vector<1x8x16xf32> to vector<8x16xf32>
    %c0_72 = arith.constant 0 : index
    %c48_73 = arith.constant 48 : index
    %105 = vector.load %arg16[%c0_72, %c48_73] : memref<8x64xf32, #tpu.memory_space<vmem>>, vector<8x16xf32>
    tpu.vector_store %arg16[%c0_72, %c48_73], %104 {strides = array<i32>} : memref<8x64xf32, #tpu.memory_space<vmem>>, vector<8x16xf32>,
    %c0_74 = arith.constant 0 : index
    %c0_75 = arith.constant 0 : index
    %106 = vector.load %arg16[%c0_74, %c0_75] : memref<8x64xf32, #tpu.memory_space<vmem>>, vector<8x64xf32>
    %c0_76 = arith.constant 0 : index
    %c0_77 = arith.constant 0 : index
    %107 = vector.load %arg10[%c0_76, %c0_77] : memref<64x32xf32, #tpu.memory_space<vmem>>, vector<64x32xf32>
    %cst_78 = arith.constant dense<0.000000e+00> : vector<8x32xf32>
    %108 = tpu.matmul %106, %107, %cst_78 {dimension_numbers = #tpu.dot_dimension_numbers<[1], [0], [0], [1], [0, 0, 1, 1], [], []>} : vector<8x64xf32>, vector<64x32xf32>, vector<8x32xf32> -> vector<8x32xf32>
    %c0_79 = arith.constant 0 : index
    %c0_80 = arith.constant 0 : index
    %109 = vector.load %arg11[%c0_79, %c0_80] : memref<1x32xf32, #tpu.memory_space<vmem>>, vector<1x32xf32>
    %110 = vector.broadcast %109 : vector<1x32xf32> to vector<8x32xf32>
    %111 = arith.addf %108, %110 : vector<8x32xf32>
    %112 = vector.shape_cast %111 : vector<8x32xf32> to vector<1x8x32xf32>
    %c0_81 = arith.constant 0 : index
    %c0_82 = arith.constant 0 : index
    %c0_83 = arith.constant 0 : index
    %113 = vector.load %arg12[%c0_81, %c0_82, %c0_83] : memref<1x8x32xf32, #tpu.memory_space<vmem>>, vector<1x8x32xf32>
    tpu.vector_store %arg12[%c0_81, %c0_82, %c0_83], %112 {strides = array<i32>} : memref<1x8x32xf32, #tpu.memory_space<vmem>>, vector<1x8x32xf32>,
    return
  }
  func.func @transform_0(%arg0: i32) -> (i32, i32, i32) {
    %c0_i32 = arith.constant 0 : i32
    %c0_i32_0 = arith.constant 0 : i32
    %c0_i32_1 = arith.constant 0 : i32
    return %arg0, %c0_i32, %c0_i32_0 : i32, i32, i32
  }
  func.func @transform_1(%arg0: i32) -> (i32, i32, i32) {
    %c0_i32 = arith.constant 0 : i32
    %c0_i32_0 = arith.constant 0 : i32
    %c0_i32_1 = arith.constant 0 : i32
    return %arg0, %c0_i32, %c0_i32_0 : i32, i32, i32
  }
  func.func @transform_2(%arg0: i32) -> (i32, i32, i32) {
    %c0_i32 = arith.constant 0 : i32
    %c0_i32_0 = arith.constant 0 : i32
    %c0_i32_1 = arith.constant 0 : i32
    return %arg0, %c0_i32, %c0_i32_0 : i32, i32, i32
  }
  func.func @transform_3(%arg0: i32) -> (i32, i32) {
    %c0_i32 = arith.constant 0 : i32
    %c0_i32_0 = arith.constant 0 : i32
    %c0_i32_1 = arith.constant 0 : i32
    return %c0_i32, %c0_i32_0 : i32, i32
  }
  func.func @transform_4(%arg0: i32) -> (i32, i32) {
    %c0_i32 = arith.constant 0 : i32
    %c0_i32_0 = arith.constant 0 : i32
    %c0_i32_1 = arith.constant 0 : i32
    return %c0_i32, %c0_i32_0 : i32, i32
  }
  func.func @transform_5(%arg0: i32) -> (i32, i32) {
    %c0_i32 = arith.constant 0 : i32
    %c0_i32_0 = arith.constant 0 : i32
    %c0_i32_1 = arith.constant 0 : i32
    return %c0_i32, %c0_i32_0 : i32, i32
  }
  func.func @transform_6(%arg0: i32) -> (i32, i32) {
    %c0_i32 = arith.constant 0 : i32
    %c0_i32_0 = arith.constant 0 : i32
    %c0_i32_1 = arith.constant 0 : i32
    return %c0_i32, %c0_i32_0 : i32, i32
  }
  func.func @transform_7(%arg0: i32) -> (i32, i32) {
    %c0_i32 = arith.constant 0 : i32
    %c0_i32_0 = arith.constant 0 : i32
    %c0_i32_1 = arith.constant 0 : i32
    return %c0_i32, %c0_i32_0 : i32, i32
  }
  func.func @transform_8(%arg0: i32) -> (i32, i32) {
    %c0_i32 = arith.constant 0 : i32
    %c0_i32_0 = arith.constant 0 : i32
    %c0_i32_1 = arith.constant 0 : i32
    return %c0_i32, %c0_i32_0 : i32, i32
  }
  func.func @transform_9(%arg0: i32) -> (i32, i32) {
    %c0_i32 = arith.constant 0 : i32
    %c0_i32_0 = arith.constant 0 : i32
    %c0_i32_1 = arith.constant 0 : i32
    return %c0_i32, %c0_i32_0 : i32, i32
  }
  func.func @transform_10(%arg0: i32) -> (i32, i32) {
    %c0_i32 = arith.constant 0 : i32
    %c0_i32_0 = arith.constant 0 : i32
    %c0_i32_1 = arith.constant 0 : i32
    return %c0_i32, %c0_i32_0 : i32, i32
  }
  func.func @transform_11(%arg0: i32) -> (i32, i32, i32) {
    %c0_i32 = arith.constant 0 : i32
    %c0_i32_0 = arith.constant 0 : i32
    %c0_i32_1 = arith.constant 0 : i32
    return %arg0, %c0_i32, %c0_i32_0 : i32, i32, i32
  }
}

</mosaic_0001>

<llo_original>
// kernel: tpu_custom_call.1
$region0: #{tpu_custom_call.1}
  #allocation0 [shape = 'u32[]', space=smem, size = 0x4, offset = 0x4, fixed_abs, tag = 'smem constant byte address 0x4 - core index']
  #allocation1 [shape = 'u32[144,128]{1,0:T(1,128)}', space=vmem, size = 0x12000, scoped, tag = 'internal scratch']
  #allocation2 [shape = 'f32[8,64]{1,0:T(8,128)}', space=vmem, size = 0x1000, scoped, tag = 'scratch operand']
  #allocation3 [shape = 'f32[8,64]{1,0:T(8,128)}', space=vmem, size = 0x1000, scoped, tag = 'scratch operand']
  #allocation4 [shape = 'f32[8,64]{1,0:T(8,128)}', space=vmem, size = 0x1000, scoped, tag = 'scratch operand']
  #allocation5 [shape = 'f32[8,64]{1,0:T(8,128)}', space=vmem, size = 0x1000, scoped, tag = 'scratch operand']
  %s0 = inlined_call_operand.hbm [shape: f32[2,8,32], index: 0, kind: input, shape index: {}]
  %s1 = inlined_call_operand.hbm [shape: f32[2,8,32], index: 1, kind: input, shape index: {}]
  %s2 = inlined_call_operand.hbm [shape: f32[2,8,32], index: 2, kind: input, shape index: {}]
  %s3 = inlined_call_operand.vmem [shape: f32[32,64], index: 3, kind: input, shape index: {}]
  %s4 = inlined_call_operand.vmem [shape: f32[1,64], index: 4, kind: input, shape index: {}]
  %s5 = inlined_call_operand.vmem [shape: f32[32,64], index: 5, kind: input, shape index: {}]
  %s6 = inlined_call_operand.vmem [shape: f32[1,64], index: 6, kind: input, shape index: {}]
  %s7 = inlined_call_operand.vmem [shape: f32[32,64], index: 7, kind: input, shape index: {}]
  %s8 = inlined_call_operand.vmem [shape: f32[1,64], index: 8, kind: input, shape index: {}]
  %s9 = inlined_call_operand.vmem [shape: f32[64,32], index: 9, kind: input, shape index: {}]
  %s10 = inlined_call_operand.vmem [shape: f32[1,32], index: 10, kind: input, shape index: {}]
  %s11 = inlined_call_operand.hbm [shape: f32[2,8,32], index: 11, kind: output, shape index: {}]
  %s12 = sld [smem:[#allocation0]]
  $region89: #{tpu_custom_call.1} parent=0
    _
  %s14 = ssub.s32 1, %s12
  %s15 = scalar_select 0, %s14, %s12
  $region1: #{tpu_custom_call.1} parent=0
    #allocation6 [shape = 'u8[8192]{0}', space=vmem, size = 0x2000, scoped, tag = 'input window, operand 0']
    #allocation7 [shape = 's32[2]{0}', space=sflag, size = 0x8, scoped, tag = 'scoped memory for tpu_custom_call.1']
    #allocation8 [shape = 's32[2]{0}', space=sflag, size = 0x8, scoped, tag = 'scoped memory for tpu_custom_call.1']
    #allocation9 [shape = 'u8[8192]{0}', space=vmem, size = 0x2000, scoped, tag = 'input window, operand 1']
    #allocation10 [shape = 's32[2]{0}', space=sflag, size = 0x8, scoped, tag = 'scoped memory for tpu_custom_call.1']
    #allocation11 [shape = 'u8[8192]{0}', space=vmem, size = 0x2000, scoped, tag = 'input window, operand 2']
    #allocation12 [shape = 'u8[8192]{0}', space=vmem, size = 0x2000, scoped, tag = 'output window, operand 0']
    %16 = vsyncpa [#allocation7], 0
    %s17 = scalar_lea.sflag [#allocation7], 1
    %18 = vsyncpa %s17, 0
    %19 = vsyncpa [#allocation10], 0
    %s20 = scalar_lea.sflag [#allocation10], 1
    %21 = vsyncpa %s20, 0
    %22 = vsyncpa [#allocation8], 0
    %s23 = scalar_lea.sflag [#allocation8], 1
    %24 = vsyncpa %s23, 0
    loop: start=0, step=1, limit=4
    $region2: #{tpu_custom_call.1} parent=1 // loop_pre_header
      _
    $region3: #{tpu_custom_call.1} parent=1 // loop_header
      %s26 = sphi 0, %s30
      %p27 = scmp.ge.s32.totalorder %s26, 4
      %s36 = sphi 0, %s38
      %s39 = sphi 0, %s36
      %s40 = sphi 0, %s39
      %s56 = sphi 0, %s40
      %s62 = sphi 0, %s64
      %s65 = sphi 0, %s62
      %s66 = sphi 0, %s65
      %s82 = sphi 0, %s66
      %s88 = sphi 0, %s90
      %s91 = sphi 0, %s88
      %s92 = sphi 0, %s91
      %s108 = sphi 0, %s92
      %s112 = sphi 0, %s112
      %s114 = sphi 0, %s112
      %s115 = sphi 0, %s114
      %s129 = sphi 0, %s115
      %s133 = sphi 0, %s133
      %s135 = sphi 0, %s133
      %s136 = sphi 0, %s135
      %s150 = sphi 0, %s136
      %s154 = sphi 0, %s154
      %s156 = sphi 0, %s154
      %s157 = sphi 0, %s156
      %s171 = sphi 0, %s157
      %s175 = sphi 0, %s175
      %s177 = sphi 0, %s175
      %s178 = sphi 0, %s177
      %s192 = sphi 0, %s178
      %s196 = sphi 0, %s196
      %s198 = sphi 0, %s196
      %s199 = sphi 0, %s198
      %s213 = sphi 0, %s199
      %s217 = sphi 0, %s217
      %s219 = sphi 0, %s217
      %s220 = sphi 0, %s219
      %s234 = sphi 0, %s220
      %s238 = sphi 0, %s238
      %s240 = sphi 0, %s238
      %s241 = sphi 0, %s240
      %s255 = sphi 0, %s241
      %s259 = sphi 0, %s259
      %s261 = sphi 0, %s259
      %s262 = sphi 0, %s261
      %s276 = sphi 0, %s262
      %s282 = sphi 0, %s284
      %s285 = sphi 0, %s282
      %s286 = sphi 0, %s285
      %s302 = sphi 0, %s286
    $region4: #{tpu_custom_call.1} parent=1 // loop_header_branch
      %29 = sbr.rel (%p27) target = $region8
    $region5: #{tpu_custom_call.1} parent=1 // loop_body
      %s31 = ssub.s32 %s26, 1
      %s32 = ssub.s32 %s26, 2
      %s33 = sadd.s32 %s26, 1
      %s34 = ssub.s32 %s26, %s33
      %p35 = scmp.eq.s32.totalorder %s34, 0
      %s37 = sadd.s32 %s36, 1
      %s38 = scalar_select %p35, %s36, %s37
      %p41 = pneg %p35
      %p42 = scmp.eq.s32.totalorder %s26, 1
      %p43 = por %p41, %p42
      %p44 = scmp.ne.s32.totalorder %s36, %s39
      %p45 = scmp.eq.s32.totalorder %s26, 0
      %p46 = por %p44, %p45
      %p47 = scmp.ne.s32.totalorder %s36, %s39
      %p48 = scmp.eq.s32.totalorder %s31, 1
      %p49 = por %p47, %p48
      %p50 = scmp.ne.s32.totalorder %s39, %s40
      %p51 = scmp.eq.s32.totalorder %s31, 0
      %p52 = por %p50, %p51
      %p53 = scmp.ne.s32.totalorder %s39, %s40
      %p54 = scmp.eq.s32.totalorder %s32, 1
      %p55 = por %p53, %p54
      %p57 = scmp.ne.s32.totalorder %s40, %s56
      %p58 = scmp.eq.s32.totalorder %s32, 0
      %p59 = por %p57, %p58
      %s60 = ssub.s32 %s26, %s33
      %p61 = scmp.eq.s32.totalorder %s60, 0
      %s63 = sadd.s32 %s62, 1
      %s64 = scalar_select %p61, %s62, %s63
      %p67 = pneg %p61
      %p68 = scmp.eq.s32.totalorder %s26, 1
      %p69 = por %p67, %p68
      %p70 = scmp.ne.s32.totalorder %s62, %s65
      %p71 = scmp.eq.s32.totalorder %s26, 0
      %p72 = por %p70, %p71
      %p73 = scmp.ne.s32.totalorder %s62, %s65
      %p74 = scmp.eq.s32.totalorder %s31, 1
      %p75 = por %p73, %p74
      %p76 = scmp.ne.s32.totalorder %s65, %s66
      %p77 = scmp.eq.s32.totalorder %s31, 0
      %p78 = por %p76, %p77
      %p79 = scmp.ne.s32.totalorder %s65, %s66
      %p80 = scmp.eq.s32.totalorder %s32, 1
      %p81 = por %p79, %p80
      %p83 = scmp.ne.s32.totalorder %s66, %s82
      %p84 = scmp.eq.s32.totalorder %s32, 0
      %p85 = por %p83, %p84
      %s86 = ssub.s32 %s26, %s33
      %p87 = scmp.eq.s32.totalorder %s86, 0
      %s89 = sadd.s32 %s88, 1
      %s90 = scalar_select %p87, %s88, %s89
      %p93 = pneg %p87
      %p94 = scmp.eq.s32.totalorder %s26, 1
      %p95 = por %p93, %p94
      %p96 = scmp.ne.s32.totalorder %s88, %s91
      %p97 = scmp.eq.s32.totalorder %s26, 0
      %p98 = por %p96, %p97
      %p99 = scmp.ne.s32.totalorder %s88, %s91
      %p100 = scmp.eq.s32.totalorder %s31, 1
      %p101 = por %p99, %p100
      %p102 = scmp.ne.s32.totalorder %s91, %s92
      %p103 = scmp.eq.s32.totalorder %s31, 0
      %p104 = por %p102, %p103
      %p105 = scmp.ne.s32.totalorder %s91, %s92
      %p106 = scmp.eq.s32.totalorder %s32, 1
      %p107 = por %p105, %p106
      %p109 = scmp.ne.s32.totalorder %s92, %s108
      %p110 = scmp.eq.s32.totalorder %s32, 0
      %p111 = por %p109, %p110
      %s113 = sadd.s32 %s112, 1
      %p116 = scmp.eq.s32.totalorder %s26, 1
      %p117 = scmp.ne.s32.totalorder %s112, %s114
      %p118 = scmp.eq.s32.totalorder %s26, 0
      %p119 = por %p117, %p118
      %p120 = scmp.ne.s32.totalorder %s112, %s114
      %p121 = scmp.eq.s32.totalorder %s31, 1
      %p122 = por %p120, %p121
      %p123 = scmp.ne.s32.totalorder %s114, %s115
      %p124 = scmp.eq.s32.totalorder %s31, 0
      %p125 = por %p123, %p124
      %p126 = scmp.ne.s32.totalorder %s114, %s115
      %p127 = scmp.eq.s32.totalorder %s32, 1
      %p128 = por %p126, %p127
      %p130 = scmp.ne.s32.totalorder %s115, %s129
      %p131 = scmp.eq.s32.totalorder %s32, 0
      %p132 = por %p130, %p131
      %s134 = sadd.s32 %s133, 1
      %p137 = scmp.eq.s32.totalorder %s26, 1
      %p138 = scmp.ne.s32.totalorder %s133, %s135
      %p139 = scmp.eq.s32.totalorder %s26, 0
      %p140 = por %p138, %p139
      %p141 = scmp.ne.s32.totalorder %s133, %s135
      %p142 = scmp.eq.s32.totalorder %s31, 1
      %p143 = por %p141, %p142
      %p144 = scmp.ne.s32.totalorder %s135, %s136
      %p145 = scmp.eq.s32.totalorder %s31, 0
      %p146 = por %p144, %p145
      %p147 = scmp.ne.s32.totalorder %s135, %s136
      %p148 = scmp.eq.s32.totalorder %s32, 1
      %p149 = por %p147, %p148
      %p151 = scmp.ne.s32.totalorder %s136, %s150
      %p152 = scmp.eq.s32.totalorder %s32, 0
      %p153 = por %p151, %p152
      %s155 = sadd.s32 %s154, 1
      %p158 = scmp.eq.s32.totalorder %s26, 1
      %p159 = scmp.ne.s32.totalorder %s154, %s156
      %p160 = scmp.eq.s32.totalorder %s26, 0
      %p161 = por %p159, %p160
      %p162 = scmp.ne.s32.totalorder %s154, %s156
      %p163 = scmp.eq.s32.totalorder %s31, 1
      %p164 = por %p162, %p163
      %p165 = scmp.ne.s32.totalorder %s156, %s157
      %p166 = scmp.eq.s32.totalorder %s31, 0
      %p167 = por %p165, %p166
      %p168 = scmp.ne.s32.totalorder %s156, %s157
      %p169 = scmp.eq.s32.totalorder %s32, 1
      %p170 = por %p168, %p169
      %p172 = scmp.ne.s32.totalorder %s157, %s171
      %p173 = scmp.eq.s32.totalorder %s32, 0
      %p174 = por %p172, %p173
      %s176 = sadd.s32 %s175, 1
      %p179 = scmp.eq.s32.totalorder %s26, 1
      %p180 = scmp.ne.s32.totalorder %s175, %s177
      %p181 = scmp.eq.s32.totalorder %s26, 0
      %p182 = por %p180, %p181
      %p183 = scmp.ne.s32.totalorder %s175, %s177
      %p184 = scmp.eq.s32.totalorder %s31, 1
      %p185 = por %p183, %p184
      %p186 = scmp.ne.s32.totalorder %s177, %s178
      %p187 = scmp.eq.s32.totalorder %s31, 0
      %p188 = por %p186, %p187
      %p189 = scmp.ne.s32.totalorder %s177, %s178
      %p190 = scmp.eq.s32.totalorder %s32, 1
      %p191 = por %p189, %p190
      %p193 = scmp.ne.s32.totalorder %s178, %s192
      %p194 = scmp.eq.s32.totalorder %s32, 0
      %p195 = por %p193, %p194
      %s197 = sadd.s32 %s196, 1
      %p200 = scmp.eq.s32.totalorder %s26, 1
      %p201 = scmp.ne.s32.totalorder %s196, %s198
      %p202 = scmp.eq.s32.totalorder %s26, 0
      %p203 = por %p201, %p202
      %p204 = scmp.ne.s32.totalorder %s196, %s198
      %p205 = scmp.eq.s32.totalorder %s31, 1
      %p206 = por %p204, %p205
      %p207 = scmp.ne.s32.totalorder %s198, %s199
      %p208 = scmp.eq.s32.totalorder %s31, 0
      %p209 = por %p207, %p208
      %p210 = scmp.ne.s32.totalorder %s198, %s199
      %p211 = scmp.eq.s32.totalorder %s32, 1
      %p212 = por %p210, %p211
      %p214 = scmp.ne.s32.totalorder %s199, %s213
      %p215 = scmp.eq.s32.totalorder %s32, 0
      %p216 = por %p214, %p215
      %s218 = sadd.s32 %s217, 1
      %p221 = scmp.eq.s32.totalorder %s26, 1
      %p222 = scmp.ne.s32.totalorder %s217, %s219
      %p223 = scmp.eq.s32.totalorder %s26, 0
      %p224 = por %p222, %p223
      %p225 = scmp.ne.s32.totalorder %s217, %s219
      %p226 = scmp.eq.s32.totalorder %s31, 1
      %p227 = por %p225, %p226
      %p228 = scmp.ne.s32.totalorder %s219, %s220
      %p229 = scmp.eq.s32.totalorder %s31, 0
      %p230 = por %p228, %p229
      %p231 = scmp.ne.s32.totalorder %s219, %s220
      %p232 = scmp.eq.s32.totalorder %s32, 1
      %p233 = por %p231, %p232
      %p235 = scmp.ne.s32.totalorder %s220, %s234
      %p236 = scmp.eq.s32.totalorder %s32, 0
      %p237 = por %p235, %p236
      %s239 = sadd.s32 %s238, 1
      %p242 = scmp.eq.s32.totalorder %s26, 1
      %p243 = scmp.ne.s32.totalorder %s238, %s240
      %p244 = scmp.eq.s32.totalorder %s26, 0
      %p245 = por %p243, %p244
      %p246 = scmp.ne.s32.totalorder %s238, %s240
      %p247 = scmp.eq.s32.totalorder %s31, 1
      %p248 = por %p246, %p247
      %p249 = scmp.ne.s32.totalorder %s240, %s241
      %p250 = scmp.eq.s32.totalorder %s31, 0
      %p251 = por %p249, %p250
      %p252 = scmp.ne.s32.totalorder %s240, %s241
      %p253 = scmp.eq.s32.totalorder %s32, 1
      %p254 = por %p252, %p253
      %p256 = scmp.ne.s32.totalorder %s241, %s255
      %p257 = scmp.eq.s32.totalorder %s32, 0
      %p258 = por %p256, %p257
      %s260 = sadd.s32 %s259, 1
      %p263 = scmp.eq.s32.totalorder %s26, 1
      %p264 = scmp.ne.s32.totalorder %s259, %s261
      %p265 = scmp.eq.s32.totalorder %s26, 0
      %p266 = por %p264, %p265
      %p267 = scmp.ne.s32.totalorder %s259, %s261
      %p268 = scmp.eq.s32.totalorder %s31, 1
      %p269 = por %p267, %p268
      %p270 = scmp.ne.s32.totalorder %s261, %s262
      %p271 = scmp.eq.s32.totalorder %s31, 0
      %p272 = por %p270, %p271
      %p273 = scmp.ne.s32.totalorder %s261, %s262
      %p274 = scmp.eq.s32.totalorder %s32, 1
      %p275 = por %p273, %p274
      %p277 = scmp.ne.s32.totalorder %s262, %s276
      %p278 = scmp.eq.s32.totalorder %s32, 0
      %p279 = por %p277, %p278
      %s280 = ssub.s32 %s26, %s33
      %p281 = scmp.eq.s32.totalorder %s280, 0
      %s283 = sadd.s32 %s282, 1
      %s284 = scalar_select %p281, %s282, %s283
      %p287 = pneg %p281
      %p288 = scmp.eq.s32.totalorder %s26, 1
      %p289 = por %p287, %p288
      %p290 = scmp.ne.s32.totalorder %s282, %s285
      %p291 = scmp.eq.s32.totalorder %s26, 0
      %p292 = por %p290, %p291
      %p293 = scmp.ne.s32.totalorder %s282, %s285
      %p294 = scmp.eq.s32.totalorder %s31, 1
      %p295 = por %p293, %p294
      %p296 = scmp.ne.s32.totalorder %s285, %s286
      %p297 = scmp.eq.s32.totalorder %s31, 0
      %p298 = por %p296, %p297
      %p299 = scmp.ne.s32.totalorder %s285, %s286
      %p300 = scmp.eq.s32.totalorder %s32, 1
      %p301 = por %p299, %p300
      %p303 = scmp.ne.s32.totalorder %s286, %s302
      %p304 = scmp.eq.s32.totalorder %s32, 0
      %p305 = por %p303, %p304
      %p306 = scmp.le.s32.totalorder 1, %s26
      %p307 = scmp.lt.s32.totalorder %s26, 3
      %p308 = pnand %p306, %p307
      %p309 = pneg %p308
      // Predicated region
      $region9: #{tpu_custom_call.1} parent=5 // pred_check
        _
      $region10: #{tpu_custom_call.1} parent=5 // pred_check_branch
        %311 = sbr.rel (%p308) target = $region12
      $region11: #{tpu_custom_call.1} parent=5 // pred_region
        %s312 = ssub.s32 %s26, 1
        // Predicated region
        $region13: #{tpu_custom_call.1} parent=11 // pred_check
          %p313 = pneg %p125
        $region14: #{tpu_custom_call.1} parent=11 // pred_check_branch
          %315 = sbr.rel (%p313) target = $region16
        $region15: #{tpu_custom_call.1} parent=11 // pred_region
          _
        $region16: #{tpu_custom_call.1} parent=11 // pred_fallthru
          _
        // Predicated region
        $region17: #{tpu_custom_call.1} parent=11 // pred_check
          %p316 = pneg %p146
        $region18: #{tpu_custom_call.1} parent=11 // pred_check_branch
          %318 = sbr.rel (%p316) target = $region20
        $region19: #{tpu_custom_call.1} parent=11 // pred_region
          _
        $region20: #{tpu_custom_call.1} parent=11 // pred_fallthru
          _
        // Predicated region
        $region21: #{tpu_custom_call.1} parent=11 // pred_check
          %p319 = pneg %p167
        $region22: #{tpu_custom_call.1} parent=11 // pred_check_branch
          %321 = sbr.rel (%p319) target = $region24
        $region23: #{tpu_custom_call.1} parent=11 // pred_region
          _
        $region24: #{tpu_custom_call.1} parent=11 // pred_fallthru
          _
        // Predicated region
        $region25: #{tpu_custom_call.1} parent=11 // pred_check
          %p322 = pneg %p188
        $region26: #{tpu_custom_call.1} parent=11 // pred_check_branch
          %324 = sbr.rel (%p322) target = $region28
        $region27: #{tpu_custom_call.1} parent=11 // pred_region
          _
        $region28: #{tpu_custom_call.1} parent=11 // pred_fallthru
          _
        // Predicated region
        $region29: #{tpu_custom_call.1} parent=11 // pred_check
          %p325 = pneg %p209
        $region30: #{tpu_custom_call.1} parent=11 // pred_check_branch
          %327 = sbr.rel (%p325) target = $region32
        $region31: #{tpu_custom_call.1} parent=11 // pred_region
          _
        $region32: #{tpu_custom_call.1} parent=11 // pred_fallthru
          _
        // Predicated region
        $region33: #{tpu_custom_call.1} parent=11 // pred_check
          %p328 = pneg %p230
        $region34: #{tpu_custom_call.1} parent=11 // pred_check_branch
          %330 = sbr.rel (%p328) target = $region36
        $region35: #{tpu_custom_call.1} parent=11 // pred_region
          _
        $region36: #{tpu_custom_call.1} parent=11 // pred_fallthru
          _
        // Predicated region
        $region37: #{tpu_custom_call.1} parent=11 // pred_check
          %p331 = pneg %p251
        $region38: #{tpu_custom_call.1} parent=11 // pred_check_branch
          %333 = sbr.rel (%p331) target = $region40
        $region39: #{tpu_custom_call.1} parent=11 // pred_region
          _
        $region40: #{tpu_custom_call.1} parent=11 // pred_fallthru
          _
        // Predicated region
        $region41: #{tpu_custom_call.1} parent=11 // pred_check
          %p334 = pneg %p272
        $region42: #{tpu_custom_call.1} parent=11 // pred_check_branch
          %336 = sbr.rel (%p334) target = $region44
        $region43: #{tpu_custom_call.1} parent=11 // pred_region
          _
        $region44: #{tpu_custom_call.1} parent=11 // pred_fallthru
          _
      $region12: #{tpu_custom_call.1} parent=5 // pred_fallthru
        _
      %p337 = scmp.lt.s32.totalorder %s26, 2
      // Predicated region
      $region45: #{tpu_custom_call.1} parent=5 // pred_check
        %p338 = pneg %p337
      $region46: #{tpu_custom_call.1} parent=5 // pred_check_branch
        %340 = sbr.rel (%p338) target = $region48
      $region47: #{tpu_custom_call.1} parent=5 // pred_region
        // Predicated region
        $region49: #{tpu_custom_call.1} parent=47 // pred_check
          %p341 = pneg %p46
        $region50: #{tpu_custom_call.1} parent=47 // pred_check_branch
          %343 = sbr.rel (%p341) target = $region52
        $region51: #{tpu_custom_call.1} parent=47 // pred_region
          %s344 = sand.u32 %s36, 1
          %s345 = scalar_lea.sflag [#allocation7], %s344
          %s346 = sand.u32 %s36, 1
          %s347 = smul.addr %s346, 8
          %s348 = scalar_lea.vmem [#allocation6], %s347
          %s350 = ssub.s32 128, 128
          %351 = vsyncadd %s345, %s350
          %s352 = smul.addr %s26, 128
          %s353 = scalar_lea.hbm %s0, %s352
          %s355 = sshll.u32 %s348, 4
          %s356 = int_to_ptr.vmem [resolvable:$true] %s355
          %358 = dma.hbm_to_vmem [thread:$0]  %s353, 128, %s356, %s345
        $region52: #{tpu_custom_call.1} parent=47 // pred_fallthru
          _
        // Predicated region
        $region53: #{tpu_custom_call.1} parent=47 // pred_check
          %p359 = pneg %p72
        $region54: #{tpu_custom_call.1} parent=47 // pred_check_branch
          %361 = sbr.rel (%p359) target = $region56
        $region55: #{tpu_custom_call.1} parent=47 // pred_region
          %s362 = sand.u32 %s26, 1
          %s363 = scalar_lea.sflag [#allocation10], %s362
          %s364 = sand.u32 %s62, 1
          %s365 = smul.addr %s364, 8
          %s366 = scalar_lea.vmem [#allocation9], %s365
          %s368 = ssub.s32 128, 128
          %369 = vsyncadd %s363, %s368
          %s370 = smul.addr %s26, 128
          %s371 = scalar_lea.hbm %s1, %s370
          %s373 = sshll.u32 %s366, 4
          %s374 = int_to_ptr.vmem [resolvable:$true] %s373
          %376 = dma.hbm_to_vmem [thread:$0]  %s371, 128, %s374, %s363
        $region56: #{tpu_custom_call.1} parent=47 // pred_fallthru
          _
        // Predicated region
        $region57: #{tpu_custom_call.1} parent=47 // pred_check
          %p377 = pneg %p98
        $region58: #{tpu_custom_call.1} parent=47 // pred_check_branch
          %379 = sbr.rel (%p377) target = $region60
        $region59: #{tpu_custom_call.1} parent=47 // pred_region
          %s380 = sand.u32 %s26, 1
          %s381 = scalar_lea.sflag [#allocation10], %s380
          %s382 = sand.u32 %s88, 1
          %s383 = smul.addr %s382, 8
          %s384 = scalar_lea.vmem [#allocation11], %s383
          %s386 = ssub.s32 128, 128
          %387 = vsyncadd %s381, %s386
          %s388 = smul.addr %s26, 128
          %s389 = scalar_lea.hbm %s2, %s388
          %s391 = sshll.u32 %s384, 4
          %s392 = int_to_ptr.vmem [resolvable:$true] %s391
          %394 = dma.hbm_to_vmem [thread:$0]  %s389, 128, %s392, %s381
        $region60: #{tpu_custom_call.1} parent=47 // pred_fallthru
          _
      $region48: #{tpu_custom_call.1} parent=5 // pred_fallthru
        _
      %p395 = scmp.le.s32.totalorder 1, %s26
      %p396 = scmp.lt.s32.totalorder %s26, 3
      %p397 = pnand %p395, %p396
      %p398 = pneg %p397
      // Predicated region
      $region61: #{tpu_custom_call.1} parent=5 // pred_check
        _
      $region62: #{tpu_custom_call.1} parent=5 // pred_check_branch
        %400 = sbr.rel (%p397) target = $region64
      $region63: #{tpu_custom_call.1} parent=5 // pred_region
        %s401 = ssub.s32 %s26, 1
        %s402 = sand.u32 %s39, 1
        %s403 = scalar_lea.sflag [#allocation7], %s402
        %s404 = sand.u32 %s39, 1
        %s405 = smul.addr %s404, 8
        %s406 = scalar_lea.vmem [#allocation6], %s405
        // Predicated region
        $region65: #{tpu_custom_call.1} parent=63 // pred_check
          %p407 = pneg %p52
        $region66: #{tpu_custom_call.1} parent=63 // pred_check_branch
          %409 = sbr.rel (%p407) target = $region68
        $region67: #{tpu_custom_call.1} parent=63 // pred_region
          %410 = dma.done %s403, 128
        $region68: #{tpu_custom_call.1} parent=63 // pred_fallthru
          _
        %s411 = sand.u32 %s31, 1
        %s412 = scalar_lea.sflag [#allocation10], %s411
        %s413 = sand.u32 %s65, 1
        %s414 = smul.addr %s413, 8
        %s415 = scalar_lea.vmem [#allocation9], %s414
        // Predicated region
        $region69: #{tpu_custom_call.1} parent=63 // pred_check
          %p416 = pneg %p78
        $region70: #{tpu_custom_call.1} parent=63 // pred_check_branch
          %418 = sbr.rel (%p416) target = $region72
        $region71: #{tpu_custom_call.1} parent=63 // pred_region
          %419 = dma.done %s412, 128
        $region72: #{tpu_custom_call.1} parent=63 // pred_fallthru
          _
        %s420 = sand.u32 %s31, 1
        %s421 = scalar_lea.sflag [#allocation10], %s420
        %s422 = sand.u32 %s91, 1
        %s423 = smul.addr %s422, 8
        %s424 = scalar_lea.vmem [#allocation11], %s423
        // Predicated region
        $region73: #{tpu_custom_call.1} parent=63 // pred_check
          %p425 = pneg %p104
        $region74: #{tpu_custom_call.1} parent=63 // pred_check_branch
          %427 = sbr.rel (%p425) target = $region76
        $region75: #{tpu_custom_call.1} parent=63 // pred_region
          %428 = dma.done %s421, 128
        $region76: #{tpu_custom_call.1} parent=63 // pred_fallthru
          _
        %s429 = sand.u32 %s39, 1
        %s430 = scalar_lea.sflag [#allocation7], %s429
        %s431 = sand.u32 %s39, 1
        %s432 = smul.addr %s431, 8
        %s433 = scalar_lea.vmem [#allocation6], %s432
        %p434 = pneg %p52
        %p435 = pneg %p49
        %s436 = sand.u32 %s31, 1
        %s437 = scalar_lea.sflag [#allocation10], %s436
        %s438 = sand.u32 %s65, 1
        %s439 = smul.addr %s438, 8
        %s440 = scalar_lea.vmem [#allocation9], %s439
        %p441 = pneg %p78
        %p442 = pneg %p75
        %s443 = sand.u32 %s31, 1
        %s444 = scalar_lea.sflag [#allocation10], %s443
        %s445 = sand.u32 %s91, 1
        %s446 = smul.addr %s445, 8
        %s447 = scalar_lea.vmem [#allocation11], %s446
        %p448 = pneg %p104
        %p449 = pneg %p101
        %p450 = pneg %p125
        %p451 = pneg %p122
        %p452 = pneg %p146
        %p453 = pneg %p143
        %p454 = pneg %p167
        %p455 = pneg %p164
        %p456 = pneg %p188
        %p457 = pneg %p185
        %p458 = pneg %p209
        %p459 = pneg %p206
        %p460 = pneg %p230
        %p461 = pneg %p227
        %p462 = pneg %p251
        %p463 = pneg %p248
        %p464 = pneg %p272
        %p465 = pneg %p269
        %p466 = pneg %p298
        %p467 = pneg %p295
        %s468 = sand.u32 %s285, 1
        %s469 = scalar_lea.sflag [#allocation8], %s468
        %s470 = sand.u32 %s285, 1
        %s471 = smul.addr %s470, 8
        %s472 = scalar_lea.vmem [#allocation12], %s471
        %v473 = vld [vmem:[%s406] sm:$0xff]
        %v474 = vld [vmem:[%s415] sm:$0xff]
        %v475 = vld [vmem:[%s424] sm:$0xff]
        %v476 = vld [vmem:[%s3] sm:$0xff]
        %v477 = vld [vmem:[%s3 + $0x8] sm:$0xff]
        %v478 = vld [vmem:[%s3 + $0x10] sm:$0xff]
        %v479 = vld [vmem:[%s3 + $0x18] sm:$0xff]
        %v480 = vld [vmem:[%s4] sm:$0x1]
        %v482 = vlaneseq
        %v483 = vshrl.u32 %v482, 7
        %v484 = vsub.s32 0, %v483
        %v485 = vrot.slane %v480, %v484
        %vm487 = vcmask 261120
        %v489 = vsel %vm487, %v473, 0
        %491 = vmatprep.subr.mxu0 0.0
        %492 = vmatpush1.msra.mxu0 0.0
        %493 = vmatprep.subr.mxu0 0.0
        %494 = vmatpush1.msra.mxu0 0.0
        %495 = vmatprep.subr.mxu0 0.0
        %496 = vmatpush1.msra.mxu0 0.0
        %497 = vmatprep.subr.mxu0 0.0
        %498 = vmatpush1.msra.mxu0 0.0
        %499 = vmatprep.subr.mxu0 0.0
        %500 = vmatpush1.msra.mxu0 0.0
        %501 = vmatprep.subr.mxu0 0.0
        %502 = vmatpush1.msra.mxu0 0.0
        %503 = vmatprep.subr.mxu0 0.0
        %504 = vmatpush1.msra.mxu0 0.0
        %505 = vmatprep.subr.mxu0 0.0
        %506 = vmatpush1.msra.mxu0 0.0
        %507 = vmatprep.subr.mxu0 0.0
        %508 = vmatpush1.msra.mxu0 0.0
        %509 = vmatprep.subr.mxu0 0.0
        %510 = vmatpush1.msra.mxu0 0.0
        %511 = vmatprep.subr.mxu0 0.0
        %512 = vmatpush1.msra.mxu0 0.0
        %513 = vmatprep.subr.mxu0 0.0
        %514 = vmatpush1.msra.mxu0 0.0
        %515 = vmatprep.subr.mxu0 0.0
        %516 = vmatpush1.msra.mxu0 %v479
        %517 = vmatprep.subr.mxu0 0.0
        %518 = vmatpush1.msra.mxu0 %v478
        %519 = vmatprep.subr.mxu0 0.0
        %520 = vmatpush1.msra.mxu0 %v477
        %521 = vmatprep.subr.mxu0 0.0
        %522 = vmatpush1.msra.mxu0 %v476
        %523 = vmatprep.subr.mxu0 0.0
        %524 = vmatpush2.msra.mxu0 0.0
        %525 = vmatprep.subr.mxu0 0.0
        %526 = vmatpush2.msra.mxu0 0.0
        %527 = vmatprep.subr.mxu0 0.0
        %528 = vmatpush2.msra.mxu0 0.0
        %529 = vmatprep.subr.mxu0 0.0
        %530 = vmatpush2.msra.mxu0 0.0
        %531 = vmatprep.subr.mxu0 0.0
        %532 = vmatpush2.msra.mxu0 0.0
        %533 = vmatprep.subr.mxu0 0.0
        %534 = vmatpush2.msra.mxu0 0.0
        %535 = vmatprep.subr.mxu0 0.0
        %536 = vmatpush2.msra.mxu0 0.0
        %537 = vmatprep.subr.mxu0 0.0
        %538 = vmatpush2.msra.mxu0 0.0
        %539 = vmatprep.subr.mxu0 0.0
        %540 = vmatpush2.msra.mxu0 0.0
        %541 = vmatprep.subr.mxu0 0.0
        %542 = vmatpush2.msra.mxu0 0.0
        %543 = vmatprep.subr.mxu0 0.0
        %544 = vmatpush2.msra.mxu0 0.0
        %545 = vmatprep.subr.mxu0 0.0
        %546 = vmatpush2.msra.mxu0 0.0
        %547 = vmatprep.subr.mxu0 0.0
        %548 = vmatpush2.msra.mxu0 0.0
        %549 = vmatprep.subr.mxu0 0.0
        %550 = vmatpush2.msra.mxu0 0.0
        %551 = vmatprep.subr.mxu0 0.0
        %552 = vmatpush2.msra.mxu0 0.0
        %553 = vmatprep.subr.mxu0 0.0
        %554 = vmatpush2.msra.mxu0 0.0
        %555 = vmatprep.mubr.f32.mxu0 0.0
        %556 = vmatmul.mubr.f32.gmra.mxu0 %v489
        %v557 = vpop.f32.mrf.mxu0
        %v558 = vadd.f32 %v485, %v557
        %v559 = vpop.f32.mrf.mxu0
        %560 = vdwg.mxu0
        %v561 = vld [vmem:[%s5] sm:$0xff]
        %v562 = vld [vmem:[%s5 + $0x8] sm:$0xff]
        %v563 = vld [vmem:[%s5 + $0x10] sm:$0xff]
        %v564 = vld [vmem:[%s5 + $0x18] sm:$0xff]
        %v565 = vld [vmem:[%s6] sm:$0x1]
        %v567 = vlaneseq
        %v568 = vshrl.u32 %v567, 7
        %v569 = vsub.s32 0, %v568
        %v570 = vrot.slane %v565, %v569
        %v573 = vsel %vm487, %v474, 0
        %575 = vmatprep.subr.mxu0 0.0
        %576 = vmatpush1.msra.mxu0 0.0
        %577 = vmatprep.subr.mxu0 0.0
        %578 = vmatpush1.msra.mxu0 0.0
        %579 = vmatprep.subr.mxu0 0.0
        %580 = vmatpush1.msra.mxu0 0.0
        %581 = vmatprep.subr.mxu0 0.0
        %582 = vmatpush1.msra.mxu0 0.0
        %583 = vmatprep.subr.mxu0 0.0
        %584 = vmatpush1.msra.mxu0 0.0
        %585 = vmatprep.subr.mxu0 0.0
        %586 = vmatpush1.msra.mxu0 0.0
        %587 = vmatprep.subr.mxu0 0.0
        %588 = vmatpush1.msra.mxu0 0.0
        %589 = vmatprep.subr.mxu0 0.0
        %590 = vmatpush1.msra.mxu0 0.0
        %591 = vmatprep.subr.mxu0 0.0
        %592 = vmatpush1.msra.mxu0 0.0
        %593 = vmatprep.subr.mxu0 0.0
        %594 = vmatpush1.msra.mxu0 0.0
        %595 = vmatprep.subr.mxu0 0.0
        %596 = vmatpush1.msra.mxu0 0.0
        %597 = vmatprep.subr.mxu0 0.0
        %598 = vmatpush1.msra.mxu0 0.0
        %599 = vmatprep.subr.mxu0 0.0
        %600 = vmatpush1.msra.mxu0 %v564
        %601 = vmatprep.subr.mxu0 0.0
        %602 = vmatpush1.msra.mxu0 %v563
        %603 = vmatprep.subr.mxu0 0.0
        %604 = vmatpush1.msra.mxu0 %v562
        %605 = vmatprep.subr.mxu0 0.0
        %606 = vmatpush1.msra.mxu0 %v561
        %607 = vmatprep.subr.mxu0 0.0
        %608 = vmatpush2.msra.mxu0 0.0
        %609 = vmatprep.subr.mxu0 0.0
        %610 = vmatpush2.msra.mxu0 0.0
        %611 = vmatprep.subr.mxu0 0.0
        %612 = vmatpush2.msra.mxu0 0.0
        %613 = vmatprep.subr.mxu0 0.0
        %614 = vmatpush2.msra.mxu0 0.0
        %615 = vmatprep.subr.mxu0 0.0
        %616 = vmatpush2.msra.mxu0 0.0
        %617 = vmatprep.subr.mxu0 0.0
        %618 = vmatpush2.msra.mxu0 0.0
        %619 = vmatprep.subr.mxu0 0.0
        %620 = vmatpush2.msra.mxu0 0.0
        %621 = vmatprep.subr.mxu0 0.0
        %622 = vmatpush2.msra.mxu0 0.0
        %623 = vmatprep.subr.mxu0 0.0
        %624 = vmatpush2.msra.mxu0 0.0
        %625 = vmatprep.subr.mxu0 0.0
        %626 = vmatpush2.msra.mxu0 0.0
        %627 = vmatprep.subr.mxu0 0.0
        %628 = vmatpush2.msra.mxu0 0.0
        %629 = vmatprep.subr.mxu0 0.0
        %630 = vmatpush2.msra.mxu0 0.0
        %631 = vmatprep.subr.mxu0 0.0
        %632 = vmatpush2.msra.mxu0 0.0
        %633 = vmatprep.subr.mxu0 0.0
        %634 = vmatpush2.msra.mxu0 0.0
        %635 = vmatprep.subr.mxu0 0.0
        %636 = vmatpush2.msra.mxu0 0.0
        %637 = vmatprep.subr.mxu0 0.0
        %638 = vmatpush2.msra.mxu0 0.0
        %639 = vmatprep.mubr.f32.mxu0 0.0
        %640 = vmatmul.mubr.f32.gmra.mxu0 %v573
        %v641 = vpop.f32.mrf.mxu0
        %v642 = vadd.f32 %v570, %v641
        %v643 = vpop.f32.mrf.mxu0
        %644 = vdwg.mxu0
        %v645 = vld [vmem:[%s7] sm:$0xff]
        %v646 = vld [vmem:[%s7 + $0x8] sm:$0xff]
        %v647 = vld [vmem:[%s7 + $0x10] sm:$0xff]
        %v648 = vld [vmem:[%s7 + $0x18] sm:$0xff]
        %v649 = vld [vmem:[%s8] sm:$0x1]
        %v651 = vlaneseq
        %v652 = vshrl.u32 %v651, 7
        %v653 = vsub.s32 0, %v652
        %v654 = vrot.slane %v649, %v653
        %v657 = vsel %vm487, %v475, 0
        %659 = vmatprep.subr.mxu0 0.0
        %660 = vmatpush1.msra.mxu0 0.0
        %661 = vmatprep.subr.mxu0 0.0
        %662 = vmatpush1.msra.mxu0 0.0
        %663 = vmatprep.subr.mxu0 0.0
        %664 = vmatpush1.msra.mxu0 0.0
        %665 = vmatprep.subr.mxu0 0.0
        %666 = vmatpush1.msra.mxu0 0.0
        %667 = vmatprep.subr.mxu0 0.0
        %668 = vmatpush1.msra.mxu0 0.0
        %669 = vmatprep.subr.mxu0 0.0
        %670 = vmatpush1.msra.mxu0 0.0
        %671 = vmatprep.subr.mxu0 0.0
        %672 = vmatpush1.msra.mxu0 0.0
        %673 = vmatprep.subr.mxu0 0.0
        %674 = vmatpush1.msra.mxu0 0.0
        %675 = vmatprep.subr.mxu0 0.0
        %676 = vmatpush1.msra.mxu0 0.0
        %677 = vmatprep.subr.mxu0 0.0
        %678 = vmatpush1.msra.mxu0 0.0
        %679 = vmatprep.subr.mxu0 0.0
        %680 = vmatpush1.msra.mxu0 0.0
        %681 = vmatprep.subr.mxu0 0.0
        %682 = vmatpush1.msra.mxu0 0.0
        %683 = vmatprep.subr.mxu0 0.0
        %684 = vmatpush1.msra.mxu0 %v648
        %685 = vmatprep.subr.mxu0 0.0
        %686 = vmatpush1.msra.mxu0 %v647
        %687 = vmatprep.subr.mxu0 0.0
        %688 = vmatpush1.msra.mxu0 %v646
        %689 = vmatprep.subr.mxu0 0.0
        %690 = vmatpush1.msra.mxu0 %v645
        %691 = vmatprep.subr.mxu0 0.0
        %692 = vmatpush2.msra.mxu0 0.0
        %693 = vmatprep.subr.mxu0 0.0
        %694 = vmatpush2.msra.mxu0 0.0
        %695 = vmatprep.subr.mxu0 0.0
        %696 = vmatpush2.msra.mxu0 0.0
        %697 = vmatprep.subr.mxu0 0.0
        %698 = vmatpush2.msra.mxu0 0.0
        %699 = vmatprep.subr.mxu0 0.0
        %700 = vmatpush2.msra.mxu0 0.0
        %701 = vmatprep.subr.mxu0 0.0
        %702 = vmatpush2.msra.mxu0 0.0
        %703 = vmatprep.subr.mxu0 0.0
        %704 = vmatpush2.msra.mxu0 0.0
        %705 = vmatprep.subr.mxu0 0.0
        %706 = vmatpush2.msra.mxu0 0.0
        %707 = vmatprep.subr.mxu0 0.0
        %708 = vmatpush2.msra.mxu0 0.0
        %709 = vmatprep.subr.mxu0 0.0
        %710 = vmatpush2.msra.mxu0 0.0
        %711 = vmatprep.subr.mxu0 0.0
        %712 = vmatpush2.msra.mxu0 0.0
        %713 = vmatprep.subr.mxu0 0.0
        %714 = vmatpush2.msra.mxu0 0.0
        %715 = vmatprep.subr.mxu0 0.0
        %716 = vmatpush2.msra.mxu0 0.0
        %717 = vmatprep.subr.mxu0 0.0
        %718 = vmatpush2.msra.mxu0 0.0
        %719 = vmatprep.subr.mxu0 0.0
        %720 = vmatpush2.msra.mxu0 0.0
        %721 = vmatprep.subr.mxu0 0.0
        %722 = vmatpush2.msra.mxu0 0.0
        %723 = vmatprep.mubr.f32.mxu0 0.0
        %724 = vmatmul.mubr.f32.gmra.mxu0 %v657
        %v725 = vpop.f32.mrf.mxu0
        %v726 = vadd.f32 %v654, %v725
        %v727 = vpop.f32.mrf.mxu0
        %728 = vdwg.mxu0
        %v729 = vmul.f32 %v558, 0.25
        %vm730 = vcmask 523264
        %731 = vst.msk [vmem:[#allocation2] sm:$0xff] %vm730, %v729
        %732 = vst.msk [vmem:[#allocation3] sm:$0xff] %vm730, %v642
        %733 = vst.msk [vmem:[#allocation4] sm:$0xff] %vm730, %v726
        %v734 = vld [vmem:[#allocation2] sm:$0xff]
        %v735 = vld [vmem:[#allocation3] sm:$0xff]
        %v736 = vld [vmem:[#allocation4] sm:$0xff]
        %vm737 = vcmask 130048
        %v739 = vsel %vm737, %v734, 0
        %v742 = vsel %vm737, %v735, 0
        %744 = vmatprep.subr.mxu0 0.0
        %745 = vmatpush1.xpose.msra.mxu0 0.0
        %746 = vmatprep.subr.mxu0 0.0
        %747 = vmatpush1.xpose.msra.mxu0 0.0
        %748 = vmatprep.subr.mxu0 0.0
        %749 = vmatpush1.xpose.msra.mxu0 0.0
        %750 = vmatprep.subr.mxu0 0.0
        %751 = vmatpush1.xpose.msra.mxu0 0.0
        %752 = vmatprep.subr.mxu0 0.0
        %753 = vmatpush1.xpose.msra.mxu0 0.0
        %754 = vmatprep.subr.mxu0 0.0
        %755 = vmatpush1.xpose.msra.mxu0 0.0
        %756 = vmatprep.subr.mxu0 0.0
        %757 = vmatpush1.xpose.msra.mxu0 0.0
        %758 = vmatprep.subr.mxu0 0.0
        %759 = vmatpush1.xpose.msra.mxu0 0.0
        %760 = vmatprep.subr.mxu0 0.0
        %761 = vmatpush1.xpose.msra.mxu0 0.0
        %762 = vmatprep.subr.mxu0 0.0
        %763 = vmatpush1.xpose.msra.mxu0 0.0
        %764 = vmatprep.subr.mxu0 0.0
        %765 = vmatpush1.xpose.msra.mxu0 0.0
        %766 = vmatprep.subr.mxu0 0.0
        %767 = vmatpush1.xpose.msra.mxu0 0.0
        %768 = vmatprep.subr.mxu0 0.0
        %769 = vmatpush1.xpose.msra.mxu0 0.0
        %770 = vmatprep.subr.mxu0 0.0
        %771 = vmatpush1.xpose.msra.mxu0 0.0
        %772 = vmatprep.subr.mxu0 0.0
        %773 = vmatpush1.xpose.msra.mxu0 0.0
        %774 = vmatprep.subr.mxu0 0.0
        %775 = vmatpush1.xpose.msra.mxu0 %v742
        %776 = vmatprep.subr.mxu0 0.0
        %777 = vmatpush2.xpose.msra.mxu0 0.0
        %778 = vmatprep.subr.mxu0 0.0
        %779 = vmatpush2.xpose.msra.mxu0 0.0
        %780 = vmatprep.subr.mxu0 0.0
        %781 = vmatpush2.xpose.msra.mxu0 0.0
        %782 = vmatprep.subr.mxu0 0.0
        %783 = vmatpush2.xpose.msra.mxu0 0.0
        %784 = vmatprep.subr.mxu0 0.0
        %785 = vmatpush2.xpose.msra.mxu0 0.0
        %786 = vmatprep.subr.mxu0 0.0
        %787 = vmatpush2.xpose.msra.mxu0 0.0
        %788 = vmatprep.subr.mxu0 0.0
        %789 = vmatpush2.xpose.msra.mxu0 0.0
        %790 = vmatprep.subr.mxu0 0.0
        %791 = vmatpush2.xpose.msra.mxu0 0.0
        %792 = vmatprep.subr.mxu0 0.0
        %793 = vmatpush2.xpose.msra.mxu0 0.0
        %794 = vmatprep.subr.mxu0 0.0
        %795 = vmatpush2.xpose.msra.mxu0 0.0
        %796 = vmatprep.subr.mxu0 0.0
        %797 = vmatpush2.xpose.msra.mxu0 0.0
        %798 = vmatprep.subr.mxu0 0.0
        %799 = vmatpush2.xpose.msra.mxu0 0.0
        %800 = vmatprep.subr.mxu0 0.0
        %801 = vmatpush2.xpose.msra.mxu0 0.0
        %802 = vmatprep.subr.mxu0 0.0
        %803 = vmatpush2.xpose.msra.mxu0 0.0
        %804 = vmatprep.subr.mxu0 0.0
        %805 = vmatpush2.xpose.msra.mxu0 0.0
        %806 = vmatprep.subr.mxu0 0.0
        %807 = vmatpush2.xpose.msra.mxu0 0.0
        %808 = vmatprep.mubr.f32.mxu0 0.0
        %809 = vmatmul.mubr.f32.gmra.mxu0 %v739
        %v810 = vpop.f32.mrf.mxu0
        %v811 = vadd.f32 0.0, %v810
        %v812 = vpop.f32.mrf.mxu0
        %813 = vdwg.mxu0
        %vm814 = vcmask 64512
        %v815 = vsel %vm814, %v811, -inf
        %816 = vmax.xlane.f32.xlu0 %v815
        %v817 = vpop.xlane.xlu0 %816
        %v818 = vsub.f32 %v811, %v817
        %v819 = vmul.f32 %v818, 1.442695
        %v820 = vpow.pop %v819
        %v821 = vsel %vm814, %v820, 0.0
        %822 = vadd.xlane.f32.xlu0 %v821
        %v823 = vpop.xlane.xlu0 %822
        %v824 = vrcp.pop %v823
        %v825 = vmul.f32 %v820, %v824
        %v827 = vsel %vm814, %v825, 0
        %829 = vmatprep.subr.mxu0 0.0
        %830 = vmatpush1.msra.mxu0 0.0
        %831 = vmatprep.subr.mxu0 0.0
        %832 = vmatpush1.msra.mxu0 0.0
        %833 = vmatprep.subr.mxu0 0.0
        %834 = vmatpush1.msra.mxu0 0.0
        %835 = vmatprep.subr.mxu0 0.0
        %836 = vmatpush1.msra.mxu0 0.0
        %837 = vmatprep.subr.mxu0 0.0
        %838 = vmatpush1.msra.mxu0 0.0
        %839 = vmatprep.subr.mxu0 0.0
        %840 = vmatpush1.msra.mxu0 0.0
        %841 = vmatprep.subr.mxu0 0.0
        %842 = vmatpush1.msra.mxu0 0.0
        %843 = vmatprep.subr.mxu0 0.0
        %844 = vmatpush1.msra.mxu0 0.0
        %845 = vmatprep.subr.mxu0 0.0
        %846 = vmatpush1.msra.mxu0 0.0
        %847 = vmatprep.subr.mxu0 0.0
        %848 = vmatpush1.msra.mxu0 0.0
        %849 = vmatprep.subr.mxu0 0.0
        %850 = vmatpush1.msra.mxu0 0.0
        %851 = vmatprep.subr.mxu0 0.0
        %852 = vmatpush1.msra.mxu0 0.0
        %853 = vmatprep.subr.mxu0 0.0
        %854 = vmatpush1.msra.mxu0 0.0
        %855 = vmatprep.subr.mxu0 0.0
        %856 = vmatpush1.msra.mxu0 0.0
        %857 = vmatprep.subr.mxu0 0.0
        %858 = vmatpush1.msra.mxu0 0.0
        %859 = vmatprep.subr.mxu0 0.0
        %860 = vmatpush1.msra.mxu0 %v736
        %861 = vmatprep.subr.mxu0 0.0
        %862 = vmatpush2.msra.mxu0 0.0
        %863 = vmatprep.subr.mxu0 0.0
        %864 = vmatpush2.msra.mxu0 0.0
        %865 = vmatprep.subr.mxu0 0.0
        %866 = vmatpush2.msra.mxu0 0.0
        %867 = vmatprep.subr.mxu0 0.0
        %868 = vmatpush2.msra.mxu0 0.0
        %869 = vmatprep.subr.mxu0 0.0
        %870 = vmatpush2.msra.mxu0 0.0
        %871 = vmatprep.subr.mxu0 0.0
        %872 = vmatpush2.msra.mxu0 0.0
        %873 = vmatprep.subr.mxu0 0.0
        %874 = vmatpush2.msra.mxu0 0.0
        %875 = vmatprep.subr.mxu0 0.0
        %876 = vmatpush2.msra.mxu0 0.0
        %877 = vmatprep.subr.mxu0 0.0
        %878 = vmatpush2.msra.mxu0 0.0
        %879 = vmatprep.subr.mxu0 0.0
        %880 = vmatpush2.msra.mxu0 0.0
        %881 = vmatprep.subr.mxu0 0.0
        %882 = vmatpush2.msra.mxu0 0.0
        %883 = vmatprep.subr.mxu0 0.0
        %884 = vmatpush2.msra.mxu0 0.0
        %885 = vmatprep.subr.mxu0 0.0
        %886 = vmatpush2.msra.mxu0 0.0
        %887 = vmatprep.subr.mxu0 0.0
        %888 = vmatpush2.msra.mxu0 0.0
        %889 = vmatprep.subr.mxu0 0.0
        %890 = vmatpush2.msra.mxu0 0.0
        %891 = vmatprep.subr.mxu0 0.0
        %892 = vmatpush2.msra.mxu0 0.0
        %893 = vmatprep.mubr.f32.mxu0 0.0
        %894 = vmatmul.mubr.f32.gmra.mxu0 %v827
        %v895 = vpop.f32.mrf.mxu0
        %v896 = vadd.f32 0.0, %v895
        %v897 = vpop.f32.mrf.mxu0
        %898 = vdwg.mxu0
        %899 = vst.msk [vmem:[#allocation5] sm:$0xff] %vm737, %v896
        %v900 = vld [vmem:[#allocation2] sm:$0xff]
        %v901 = vld [vmem:[#allocation3] sm:$0xff]
        %v902 = vld [vmem:[#allocation4] sm:$0xff]
        %904 = vrot.lane.b32.xlu0 %v900, 112
        %v905 = vpop.permute.xlu0 %904
        %907 = vrot.lane.b32.xlu0 %v901, 112
        %v908 = vpop.permute.xlu0 %907
        %v909 = vsel %vm737, %v905, 0
        %v911 = vsel %vm737, %v908, 0
        %913 = vmatprep.subr.mxu0 0.0
        %914 = vmatpush1.xpose.msra.mxu0 0.0
        %915 = vmatprep.subr.mxu0 0.0
        %916 = vmatpush1.xpose.msra.mxu0 0.0
        %917 = vmatprep.subr.mxu0 0.0
        %918 = vmatpush1.xpose.msra.mxu0 0.0
        %919 = vmatprep.subr.mxu0 0.0
        %920 = vmatpush1.xpose.msra.mxu0 0.0
        %921 = vmatprep.subr.mxu0 0.0
        %922 = vmatpush1.xpose.msra.mxu0 0.0
        %923 = vmatprep.subr.mxu0 0.0
        %924 = vmatpush1.xpose.msra.mxu0 0.0
        %925 = vmatprep.subr.mxu0 0.0
        %926 = vmatpush1.xpose.msra.mxu0 0.0
        %927 = vmatprep.subr.mxu0 0.0
        %928 = vmatpush1.xpose.msra.mxu0 0.0
        %929 = vmatprep.subr.mxu0 0.0
        %930 = vmatpush1.xpose.msra.mxu0 0.0
        %931 = vmatprep.subr.mxu0 0.0
        %932 = vmatpush1.xpose.msra.mxu0 0.0
        %933 = vmatprep.subr.mxu0 0.0
        %934 = vmatpush1.xpose.msra.mxu0 0.0
        %935 = vmatprep.subr.mxu0 0.0
        %936 = vmatpush1.xpose.msra.mxu0 0.0
        %937 = vmatprep.subr.mxu0 0.0
        %938 = vmatpush1.xpose.msra.mxu0 0.0
        %939 = vmatprep.subr.mxu0 0.0
        %940 = vmatpush1.xpose.msra.mxu0 0.0
        %941 = vmatprep.subr.mxu0 0.0
        %942 = vmatpush1.xpose.msra.mxu0 0.0
        %943 = vmatprep.subr.mxu0 0.0
        %944 = vmatpush1.xpose.msra.mxu0 %v911
        %945 = vmatprep.subr.mxu0 0.0
        %946 = vmatpush2.xpose.msra.mxu0 0.0
        %947 = vmatprep.subr.mxu0 0.0
        %948 = vmatpush2.xpose.msra.mxu0 0.0
        %949 = vmatprep.subr.mxu0 0.0
        %950 = vmatpush2.xpose.msra.mxu0 0.0
        %951 = vmatprep.subr.mxu0 0.0
        %952 = vmatpush2.xpose.msra.mxu0 0.0
        %953 = vmatprep.subr.mxu0 0.0
        %954 = vmatpush2.xpose.msra.mxu0 0.0
        %955 = vmatprep.subr.mxu0 0.0
        %956 = vmatpush2.xpose.msra.mxu0 0.0
        %957 = vmatprep.subr.mxu0 0.0
        %958 = vmatpush2.xpose.msra.mxu0 0.0
        %959 = vmatprep.subr.mxu0 0.0
        %960 = vmatpush2.xpose.msra.mxu0 0.0
        %961 = vmatprep.subr.mxu0 0.0
        %962 = vmatpush2.xpose.msra.mxu0 0.0
        %963 = vmatprep.subr.mxu0 0.0
        %964 = vmatpush2.xpose.msra.mxu0 0.0
        %965 = vmatprep.subr.mxu0 0.0
        %966 = vmatpush2.xpose.msra.mxu0 0.0
        %967 = vmatprep.subr.mxu0 0.0
        %968 = vmatpush2.xpose.msra.mxu0 0.0
        %969 = vmatprep.subr.mxu0 0.0
        %970 = vmatpush2.xpose.msra.mxu0 0.0
        %971 = vmatprep.subr.mxu0 0.0
        %972 = vmatpush2.xpose.msra.mxu0 0.0
        %973 = vmatprep.subr.mxu0 0.0
        %974 = vmatpush2.xpose.msra.mxu0 0.0
        %975 = vmatprep.subr.mxu0 0.0
        %976 = vmatpush2.xpose.msra.mxu0 0.0
        %977 = vmatprep.mubr.f32.mxu0 0.0
        %978 = vmatmul.mubr.f32.gmra.mxu0 %v909
        %v979 = vpop.f32.mrf.mxu0
        %v980 = vadd.f32 0.0, %v979
        %v981 = vpop.f32.mrf.mxu0
        %982 = vdwg.mxu0
        %v983 = vsel %vm814, %v980, -inf
        %984 = vmax.xlane.f32.xlu0 %v983
        %v985 = vpop.xlane.xlu0 %984
        %v986 = vsub.f32 %v980, %v985
        %v987 = vmul.f32 %v986, 1.442695
        %v988 = vpow.pop %v987
        %v989 = vsel %vm814, %v988, 0.0
        %990 = vadd.xlane.f32.xlu0 %v989
        %v991 = vpop.xlane.xlu0 %990
        %v992 = vrcp.pop %v991
        %v993 = vmul.f32 %v988, %v992
        %995 = vrot.lane.b32.xlu0 %v902, 112
        %v996 = vpop.permute.xlu0 %995
        %v999 = vsel %vm814, %v993, 0
        %1001 = vmatprep.subr.mxu0 0.0
        %1002 = vmatpush1.msra.mxu0 0.0
        %1003 = vmatprep.subr.mxu0 0.0
        %1004 = vmatpush1.msra.mxu0 0.0
        %1005 = vmatprep.subr.mxu0 0.0
        %1006 = vmatpush1.msra.mxu0 0.0
        %1007 = vmatprep.subr.mxu0 0.0
        %1008 = vmatpush1.msra.mxu0 0.0
        %1009 = vmatprep.subr.mxu0 0.0
        %1010 = vmatpush1.msra.mxu0 0.0
        %1011 = vmatprep.subr.mxu0 0.0
        %1012 = vmatpush1.msra.mxu0 0.0
        %1013 = vmatprep.subr.mxu0 0.0
        %1014 = vmatpush1.msra.mxu0 0.0
        %1015 = vmatprep.subr.mxu0 0.0
        %1016 = vmatpush1.msra.mxu0 0.0
        %1017 = vmatprep.subr.mxu0 0.0
        %1018 = vmatpush1.msra.mxu0 0.0
        %1019 = vmatprep.subr.mxu0 0.0
        %1020 = vmatpush1.msra.mxu0 0.0
        %1021 = vmatprep.subr.mxu0 0.0
        %1022 = vmatpush1.msra.mxu0 0.0
        %1023 = vmatprep.subr.mxu0 0.0
        %1024 = vmatpush1.msra.mxu0 0.0
        %1025 = vmatprep.subr.mxu0 0.0
        %1026 = vmatpush1.msra.mxu0 0.0
        %1027 = vmatprep.subr.mxu0 0.0
        %1028 = vmatpush1.msra.mxu0 0.0
        %1029 = vmatprep.subr.mxu0 0.0
        %1030 = vmatpush1.msra.mxu0 0.0
        %1031 = vmatprep.subr.mxu0 0.0
        %1032 = vmatpush1.msra.mxu0 %v996
        %1033 = vmatprep.subr.mxu0 0.0
        %1034 = vmatpush2.msra.mxu0 0.0
        %1035 = vmatprep.subr.mxu0 0.0
        %1036 = vmatpush2.msra.mxu0 0.0
        %1037 = vmatprep.subr.mxu0 0.0
        %1038 = vmatpush2.msra.mxu0 0.0
        %1039 = vmatprep.subr.mxu0 0.0
        %1040 = vmatpush2.msra.mxu0 0.0
        %1041 = vmatprep.subr.mxu0 0.0
        %1042 = vmatpush2.msra.mxu0 0.0
        %1043 = vmatprep.subr.mxu0 0.0
        %1044 = vmatpush2.msra.mxu0 0.0
        %1045 = vmatprep.subr.mxu0 0.0
        %1046 = vmatpush2.msra.mxu0 0.0
        %1047 = vmatprep.subr.mxu0 0.0
        %1048 = vmatpush2.msra.mxu0 0.0
        %1049 = vmatprep.subr.mxu0 0.0
        %1050 = vmatpush2.msra.mxu0 0.0
        %1051 = vmatprep.subr.mxu0 0.0
        %1052 = vmatpush2.msra.mxu0 0.0
        %1053 = vmatprep.subr.mxu0 0.0
        %1054 = vmatpush2.msra.mxu0 0.0
        %1055 = vmatprep.subr.mxu0 0.0
        %1056 = vmatpush2.msra.mxu0 0.0
        %1057 = vmatprep.subr.mxu0 0.0
        %1058 = vmatpush2.msra.mxu0 0.0
        %1059 = vmatprep.subr.mxu0 0.0
        %1060 = vmatpush2.msra.mxu0 0.0
        %1061 = vmatprep.subr.mxu0 0.0
        %1062 = vmatpush2.msra.mxu0 0.0
        %1063 = vmatprep.subr.mxu0 0.0
        %1064 = vmatpush2.msra.mxu0 0.0
        %1065 = vmatprep.mubr.f32.mxu0 0.0
        %1066 = vmatmul.mubr.f32.gmra.mxu0 %v999
        %v1067 = vpop.f32.mrf.mxu0
        %v1068 = vadd.f32 0.0, %v1067
        %v1069 = vpop.f32.mrf.mxu0
        %1070 = vdwg.mxu0
        %1072 = vrot.lane.b32.xlu0 %v1068, 16
        %v1073 = vpop.permute.xlu0 %1072
        %vm1075 = vcmask 261248
        %1076 = vst.msk [vmem:[#allocation5] sm:$0xff] %vm1075, %v1073
        %v1077 = vld [vmem:[#allocation2] sm:$0xff]
        %v1078 = vld [vmem:[#allocation3] sm:$0xff]
        %v1079 = vld [vmem:[#allocation4] sm:$0xff]
        %1081 = vrot.lane.b32.xlu0 %v1077, 96
        %v1082 = vpop.permute.xlu0 %1081
        %1084 = vrot.lane.b32.xlu0 %v1078, 96
        %v1085 = vpop.permute.xlu0 %1084
        %v1086 = vsel %vm737, %v1082, 0
        %v1088 = vsel %vm737, %v1085, 0
        %1090 = vmatprep.subr.mxu0 0.0
        %1091 = vmatpush1.xpose.msra.mxu0 0.0
        %1092 = vmatprep.subr.mxu0 0.0
        %1093 = vmatpush1.xpose.msra.mxu0 0.0
        %1094 = vmatprep.subr.mxu0 0.0
        %1095 = vmatpush1.xpose.msra.mxu0 0.0
        %1096 = vmatprep.subr.mxu0 0.0
        %1097 = vmatpush1.xpose.msra.mxu0 0.0
        %1098 = vmatprep.subr.mxu0 0.0
        %1099 = vmatpush1.xpose.msra.mxu0 0.0
        %1100 = vmatprep.subr.mxu0 0.0
        %1101 = vmatpush1.xpose.msra.mxu0 0.0
        %1102 = vmatprep.subr.mxu0 0.0
        %1103 = vmatpush1.xpose.msra.mxu0 0.0
        %1104 = vmatprep.subr.mxu0 0.0
        %1105 = vmatpush1.xpose.msra.mxu0 0.0
        %1106 = vmatprep.subr.mxu0 0.0
        %1107 = vmatpush1.xpose.msra.mxu0 0.0
        %1108 = vmatprep.subr.mxu0 0.0
        %1109 = vmatpush1.xpose.msra.mxu0 0.0
        %1110 = vmatprep.subr.mxu0 0.0
        %1111 = vmatpush1.xpose.msra.mxu0 0.0
        %1112 = vmatprep.subr.mxu0 0.0
        %1113 = vmatpush1.xpose.msra.mxu0 0.0
        %1114 = vmatprep.subr.mxu0 0.0
        %1115 = vmatpush1.xpose.msra.mxu0 0.0
        %1116 = vmatprep.subr.mxu0 0.0
        %1117 = vmatpush1.xpose.msra.mxu0 0.0
        %1118 = vmatprep.subr.mxu0 0.0
        %1119 = vmatpush1.xpose.msra.mxu0 0.0
        %1120 = vmatprep.subr.mxu0 0.0
        %1121 = vmatpush1.xpose.msra.mxu0 %v1088
        %1122 = vmatprep.subr.mxu0 0.0
        %1123 = vmatpush2.xpose.msra.mxu0 0.0
        %1124 = vmatprep.subr.mxu0 0.0
        %1125 = vmatpush2.xpose.msra.mxu0 0.0
        %1126 = vmatprep.subr.mxu0 0.0
        %1127 = vmatpush2.xpose.msra.mxu0 0.0
        %1128 = vmatprep.subr.mxu0 0.0
        %1129 = vmatpush2.xpose.msra.mxu0 0.0
        %1130 = vmatprep.subr.mxu0 0.0
        %1131 = vmatpush2.xpose.msra.mxu0 0.0
        %1132 = vmatprep.subr.mxu0 0.0
        %1133 = vmatpush2.xpose.msra.mxu0 0.0
        %1134 = vmatprep.subr.mxu0 0.0
        %1135 = vmatpush2.xpose.msra.mxu0 0.0
        %1136 = vmatprep.subr.mxu0 0.0
        %1137 = vmatpush2.xpose.msra.mxu0 0.0
        %1138 = vmatprep.subr.mxu0 0.0
        %1139 = vmatpush2.xpose.msra.mxu0 0.0
        %1140 = vmatprep.subr.mxu0 0.0
        %1141 = vmatpush2.xpose.msra.mxu0 0.0
        %1142 = vmatprep.subr.mxu0 0.0
        %1143 = vmatpush2.xpose.msra.mxu0 0.0
        %1144 = vmatprep.subr.mxu0 0.0
        %1145 = vmatpush2.xpose.msra.mxu0 0.0
        %1146 = vmatprep.subr.mxu0 0.0
        %1147 = vmatpush2.xpose.msra.mxu0 0.0
        %1148 = vmatprep.subr.mxu0 0.0
        %1149 = vmatpush2.xpose.msra.mxu0 0.0
        %1150 = vmatprep.subr.mxu0 0.0
        %1151 = vmatpush2.xpose.msra.mxu0 0.0
        %1152 = vmatprep.subr.mxu0 0.0
        %1153 = vmatpush2.xpose.msra.mxu0 0.0
        %1154 = vmatprep.mubr.f32.mxu0 0.0
        %1155 = vmatmul.mubr.f32.gmra.mxu0 %v1086
        %v1156 = vpop.f32.mrf.mxu0
        %v1157 = vadd.f32 0.0, %v1156
        %v1158 = vpop.f32.mrf.mxu0
        %1159 = vdwg.mxu0
        %v1160 = vsel %vm814, %v1157, -inf
        %1161 = vmax.xlane.f32.xlu0 %v1160
        %v1162 = vpop.xlane.xlu0 %1161
        %v1163 = vsub.f32 %v1157, %v1162
        %v1164 = vmul.f32 %v1163, 1.442695
        %v1165 = vpow.pop %v1164
        %v1166 = vsel %vm814, %v1165, 0.0
        %1167 = vadd.xlane.f32.xlu0 %v1166
        %v1168 = vpop.xlane.xlu0 %1167
        %v1169 = vrcp.pop %v1168
        %v1170 = vmul.f32 %v1165, %v1169
        %1172 = vrot.lane.b32.xlu0 %v1079, 96
        %v1173 = vpop.permute.xlu0 %1172
        %v1176 = vsel %vm814, %v1170, 0
        %1178 = vmatprep.subr.mxu0 0.0
        %1179 = vmatpush1.msra.mxu0 0.0
        %1180 = vmatprep.subr.mxu0 0.0
        %1181 = vmatpush1.msra.mxu0 0.0
        %1182 = vmatprep.subr.mxu0 0.0
        %1183 = vmatpush1.msra.mxu0 0.0
        %1184 = vmatprep.subr.mxu0 0.0
        %1185 = vmatpush1.msra.mxu0 0.0
        %1186 = vmatprep.subr.mxu0 0.0
        %1187 = vmatpush1.msra.mxu0 0.0
        %1188 = vmatprep.subr.mxu0 0.0
        %1189 = vmatpush1.msra.mxu0 0.0
        %1190 = vmatprep.subr.mxu0 0.0
        %1191 = vmatpush1.msra.mxu0 0.0
        %1192 = vmatprep.subr.mxu0 0.0
        %1193 = vmatpush1.msra.mxu0 0.0
        %1194 = vmatprep.subr.mxu0 0.0
        %1195 = vmatpush1.msra.mxu0 0.0
        %1196 = vmatprep.subr.mxu0 0.0
        %1197 = vmatpush1.msra.mxu0 0.0
        %1198 = vmatprep.subr.mxu0 0.0
        %1199 = vmatpush1.msra.mxu0 0.0
        %1200 = vmatprep.subr.mxu0 0.0
        %1201 = vmatpush1.msra.mxu0 0.0
        %1202 = vmatprep.subr.mxu0 0.0
        %1203 = vmatpush1.msra.mxu0 0.0
        %1204 = vmatprep.subr.mxu0 0.0
        %1205 = vmatpush1.msra.mxu0 0.0
        %1206 = vmatprep.subr.mxu0 0.0
        %1207 = vmatpush1.msra.mxu0 0.0
        %1208 = vmatprep.subr.mxu0 0.0
        %1209 = vmatpush1.msra.mxu0 %v1173
        %1210 = vmatprep.subr.mxu0 0.0
        %1211 = vmatpush2.msra.mxu0 0.0
        %1212 = vmatprep.subr.mxu0 0.0
        %1213 = vmatpush2.msra.mxu0 0.0
        %1214 = vmatprep.subr.mxu0 0.0
        %1215 = vmatpush2.msra.mxu0 0.0
        %1216 = vmatprep.subr.mxu0 0.0
        %1217 = vmatpush2.msra.mxu0 0.0
        %1218 = vmatprep.subr.mxu0 0.0
        %1219 = vmatpush2.msra.mxu0 0.0
        %1220 = vmatprep.subr.mxu0 0.0
        %1221 = vmatpush2.msra.mxu0 0.0
        %1222 = vmatprep.subr.mxu0 0.0
        %1223 = vmatpush2.msra.mxu0 0.0
        %1224 = vmatprep.subr.mxu0 0.0
        %1225 = vmatpush2.msra.mxu0 0.0
        %1226 = vmatprep.subr.mxu0 0.0
        %1227 = vmatpush2.msra.mxu0 0.0
        %1228 = vmatprep.subr.mxu0 0.0
        %1229 = vmatpush2.msra.mxu0 0.0
        %1230 = vmatprep.subr.mxu0 0.0
        %1231 = vmatpush2.msra.mxu0 0.0
        %1232 = vmatprep.subr.mxu0 0.0
        %1233 = vmatpush2.msra.mxu0 0.0
        %1234 = vmatprep.subr.mxu0 0.0
        %1235 = vmatpush2.msra.mxu0 0.0
        %1236 = vmatprep.subr.mxu0 0.0
        %1237 = vmatpush2.msra.mxu0 0.0
        %1238 = vmatprep.subr.mxu0 0.0
        %1239 = vmatpush2.msra.mxu0 0.0
        %1240 = vmatprep.subr.mxu0 0.0
        %1241 = vmatpush2.msra.mxu0 0.0
        %1242 = vmatprep.mubr.f32.mxu0 0.0
        %1243 = vmatmul.mubr.f32.gmra.mxu0 %v1176
        %v1244 = vpop.f32.mrf.mxu0
        %v1245 = vadd.f32 0.0, %v1244
        %v1246 = vpop.f32.mrf.mxu0
        %1247 = vdwg.mxu0
        %1249 = vrot.lane.b32.xlu0 %v1245, 32
        %v1250 = vpop.permute.xlu0 %1249
        %vm1252 = vcmask 392448
        %1253 = vst.msk [vmem:[#allocation5] sm:$0xff] %vm1252, %v1250
        %v1254 = vld [vmem:[#allocation2] sm:$0xff]
        %v1255 = vld [vmem:[#allocation3] sm:$0xff]
        %v1256 = vld [vmem:[#allocation4] sm:$0xff]
        %1258 = vrot.lane.b32.xlu0 %v1254, 80
        %v1259 = vpop.permute.xlu0 %1258
        %1261 = vrot.lane.b32.xlu0 %v1255, 80
        %v1262 = vpop.permute.xlu0 %1261
        %v1263 = vsel %vm737, %v1259, 0
        %v1265 = vsel %vm737, %v1262, 0
        %1267 = vmatprep.subr.mxu0 0.0
        %1268 = vmatpush1.xpose.msra.mxu0 0.0
        %1269 = vmatprep.subr.mxu0 0.0
        %1270 = vmatpush1.xpose.msra.mxu0 0.0
        %1271 = vmatprep.subr.mxu0 0.0
        %1272 = vmatpush1.xpose.msra.mxu0 0.0
        %1273 = vmatprep.subr.mxu0 0.0
        %1274 = vmatpush1.xpose.msra.mxu0 0.0
        %1275 = vmatprep.subr.mxu0 0.0
        %1276 = vmatpush1.xpose.msra.mxu0 0.0
        %1277 = vmatprep.subr.mxu0 0.0
        %1278 = vmatpush1.xpose.msra.mxu0 0.0
        %1279 = vmatprep.subr.mxu0 0.0
        %1280 = vmatpush1.xpose.msra.mxu0 0.0
        %1281 = vmatprep.subr.mxu0 0.0
        %1282 = vmatpush1.xpose.msra.mxu0 0.0
        %1283 = vmatprep.subr.mxu0 0.0
        %1284 = vmatpush1.xpose.msra.mxu0 0.0
        %1285 = vmatprep.subr.mxu0 0.0
        %1286 = vmatpush1.xpose.msra.mxu0 0.0
        %1287 = vmatprep.subr.mxu0 0.0
        %1288 = vmatpush1.xpose.msra.mxu0 0.0
        %1289 = vmatprep.subr.mxu0 0.0
        %1290 = vmatpush1.xpose.msra.mxu0 0.0
        %1291 = vmatprep.subr.mxu0 0.0
        %1292 = vmatpush1.xpose.msra.mxu0 0.0
        %1293 = vmatprep.subr.mxu0 0.0
        %1294 = vmatpush1.xpose.msra.mxu0 0.0
        %1295 = vmatprep.subr.mxu0 0.0
        %1296 = vmatpush1.xpose.msra.mxu0 0.0
        %1297 = vmatprep.subr.mxu0 0.0
        %1298 = vmatpush1.xpose.msra.mxu0 %v1265
        %1299 = vmatprep.subr.mxu0 0.0
        %1300 = vmatpush2.xpose.msra.mxu0 0.0
        %1301 = vmatprep.subr.mxu0 0.0
        %1302 = vmatpush2.xpose.msra.mxu0 0.0
        %1303 = vmatprep.subr.mxu0 0.0
        %1304 = vmatpush2.xpose.msra.mxu0 0.0
        %1305 = vmatprep.subr.mxu0 0.0
        %1306 = vmatpush2.xpose.msra.mxu0 0.0
        %1307 = vmatprep.subr.mxu0 0.0
        %1308 = vmatpush2.xpose.msra.mxu0 0.0
        %1309 = vmatprep.subr.mxu0 0.0
        %1310 = vmatpush2.xpose.msra.mxu0 0.0
        %1311 = vmatprep.subr.mxu0 0.0
        %1312 = vmatpush2.xpose.msra.mxu0 0.0
        %1313 = vmatprep.subr.mxu0 0.0
        %1314 = vmatpush2.xpose.msra.mxu0 0.0
        %1315 = vmatprep.subr.mxu0 0.0
        %1316 = vmatpush2.xpose.msra.mxu0 0.0
        %1317 = vmatprep.subr.mxu0 0.0
        %1318 = vmatpush2.xpose.msra.mxu0 0.0
        %1319 = vmatprep.subr.mxu0 0.0
        %1320 = vmatpush2.xpose.msra.mxu0 0.0
        %1321 = vmatprep.subr.mxu0 0.0
        %1322 = vmatpush2.xpose.msra.mxu0 0.0
        %1323 = vmatprep.subr.mxu0 0.0
        %1324 = vmatpush2.xpose.msra.mxu0 0.0
        %1325 = vmatprep.subr.mxu0 0.0
        %1326 = vmatpush2.xpose.msra.mxu0 0.0
        %1327 = vmatprep.subr.mxu0 0.0
        %1328 = vmatpush2.xpose.msra.mxu0 0.0
        %1329 = vmatprep.subr.mxu0 0.0
        %1330 = vmatpush2.xpose.msra.mxu0 0.0
        %1331 = vmatprep.mubr.f32.mxu0 0.0
        %1332 = vmatmul.mubr.f32.gmra.mxu0 %v1263
        %v1333 = vpop.f32.mrf.mxu0
        %v1334 = vadd.f32 0.0, %v1333
        %v1335 = vpop.f32.mrf.mxu0
        %1336 = vdwg.mxu0
        %v1337 = vsel %vm814, %v1334, -inf
        %1338 = vmax.xlane.f32.xlu0 %v1337
        %v1339 = vpop.xlane.xlu0 %1338
        %v1340 = vsub.f32 %v1334, %v1339
        %v1341 = vmul.f32 %v1340, 1.442695
        %v1342 = vpow.pop %v1341
        %v1343 = vsel %vm814, %v1342, 0.0
        %1344 = vadd.xlane.f32.xlu0 %v1343
        %v1345 = vpop.xlane.xlu0 %1344
        %v1346 = vrcp.pop %v1345
        %v1347 = vmul.f32 %v1342, %v1346
        %1349 = vrot.lane.b32.xlu0 %v1256, 80
        %v1350 = vpop.permute.xlu0 %1349
        %v1353 = vsel %vm814, %v1347, 0
        %1355 = vmatprep.subr.mxu0 0.0
        %1356 = vmatpush1.msra.mxu0 0.0
        %1357 = vmatprep.subr.mxu0 0.0
        %1358 = vmatpush1.msra.mxu0 0.0
        %1359 = vmatprep.subr.mxu0 0.0
        %1360 = vmatpush1.msra.mxu0 0.0
        %1361 = vmatprep.subr.mxu0 0.0
        %1362 = vmatpush1.msra.mxu0 0.0
        %1363 = vmatprep.subr.mxu0 0.0
        %1364 = vmatpush1.msra.mxu0 0.0
        %1365 = vmatprep.subr.mxu0 0.0
        %1366 = vmatpush1.msra.mxu0 0.0
        %1367 = vmatprep.subr.mxu0 0.0
        %1368 = vmatpush1.msra.mxu0 0.0
        %1369 = vmatprep.subr.mxu0 0.0
        %1370 = vmatpush1.msra.mxu0 0.0
        %1371 = vmatprep.subr.mxu0 0.0
        %1372 = vmatpush1.msra.mxu0 0.0
        %1373 = vmatprep.subr.mxu0 0.0
        %1374 = vmatpush1.msra.mxu0 0.0
        %1375 = vmatprep.subr.mxu0 0.0
        %1376 = vmatpush1.msra.mxu0 0.0
        %1377 = vmatprep.subr.mxu0 0.0
        %1378 = vmatpush1.msra.mxu0 0.0
        %1379 = vmatprep.subr.mxu0 0.0
        %1380 = vmatpush1.msra.mxu0 0.0
        %1381 = vmatprep.subr.mxu0 0.0
        %1382 = vmatpush1.msra.mxu0 0.0
        %1383 = vmatprep.subr.mxu0 0.0
        %1384 = vmatpush1.msra.mxu0 0.0
        %1385 = vmatprep.subr.mxu0 0.0
        %1386 = vmatpush1.msra.mxu0 %v1350
        %1387 = vmatprep.subr.mxu0 0.0
        %1388 = vmatpush2.msra.mxu0 0.0
        %1389 = vmatprep.subr.mxu0 0.0
        %1390 = vmatpush2.msra.mxu0 0.0
        %1391 = vmatprep.subr.mxu0 0.0
        %1392 = vmatpush2.msra.mxu0 0.0
        %1393 = vmatprep.subr.mxu0 0.0
        %1394 = vmatpush2.msra.mxu0 0.0
        %1395 = vmatprep.subr.mxu0 0.0
        %1396 = vmatpush2.msra.mxu0 0.0
        %1397 = vmatprep.subr.mxu0 0.0
        %1398 = vmatpush2.msra.mxu0 0.0
        %1399 = vmatprep.subr.mxu0 0.0
        %1400 = vmatpush2.msra.mxu0 0.0
        %1401 = vmatprep.subr.mxu0 0.0
        %1402 = vmatpush2.msra.mxu0 0.0
        %1403 = vmatprep.subr.mxu0 0.0
        %1404 = vmatpush2.msra.mxu0 0.0
        %1405 = vmatprep.subr.mxu0 0.0
        %1406 = vmatpush2.msra.mxu0 0.0
        %1407 = vmatprep.subr.mxu0 0.0
        %1408 = vmatpush2.msra.mxu0 0.0
        %1409 = vmatprep.subr.mxu0 0.0
        %1410 = vmatpush2.msra.mxu0 0.0
        %1411 = vmatprep.subr.mxu0 0.0
        %1412 = vmatpush2.msra.mxu0 0.0
        %1413 = vmatprep.subr.mxu0 0.0
        %1414 = vmatpush2.msra.mxu0 0.0
        %1415 = vmatprep.subr.mxu0 0.0
        %1416 = vmatpush2.msra.mxu0 0.0
        %1417 = vmatprep.subr.mxu0 0.0
        %1418 = vmatpush2.msra.mxu0 0.0
        %1419 = vmatprep.mubr.f32.mxu0 0.0
        %1420 = vmatmul.mubr.f32.gmra.mxu0 %v1353
        %v1421 = vpop.f32.mrf.mxu0
        %v1422 = vadd.f32 0.0, %v1421
        %v1423 = vpop.f32.mrf.mxu0
        %1424 = vdwg.mxu0
        %1426 = vrot.lane.b32.xlu0 %v1422, 48
        %v1427 = vpop.permute.xlu0 %1426
        %vm1429 = vcmask 523648
        %1430 = vst.msk [vmem:[#allocation5] sm:$0xff] %vm1429, %v1427
        %v1431 = vld [vmem:[#allocation5] sm:$0xff]
        %v1432 = vld [vmem:[%s9] sm:$0xff]
        %v1433 = vld [vmem:[%s9 + $0x8] sm:$0xff]
        %v1434 = vld [vmem:[%s9 + $0x10] sm:$0xff]
        %v1435 = vld [vmem:[%s9 + $0x18] sm:$0xff]
        %v1436 = vld [vmem:[%s9 + $0x20] sm:$0xff]
        %v1437 = vld [vmem:[%s9 + $0x28] sm:$0xff]
        %v1438 = vld [vmem:[%s9 + $0x30] sm:$0xff]
        %v1439 = vld [vmem:[%s9 + $0x38] sm:$0xff]
        %v1440 = vld [vmem:[%s10] sm:$0x1]
        %v1442 = vlaneseq
        %v1443 = vshrl.u32 %v1442, 7
        %v1444 = vsub.s32 0, %v1443
        %v1445 = vrot.slane %v1440, %v1444
        %v1448 = vsel %vm730, %v1431, 0
        %1450 = vmatprep.subr.mxu0 0.0
        %1451 = vmatpush1.msra.mxu0 0.0
        %1452 = vmatprep.subr.mxu0 0.0
        %1453 = vmatpush1.msra.mxu0 0.0
        %1454 = vmatprep.subr.mxu0 0.0
        %1455 = vmatpush1.msra.mxu0 0.0
        %1456 = vmatprep.subr.mxu0 0.0
        %1457 = vmatpush1.msra.mxu0 0.0
        %1458 = vmatprep.subr.mxu0 0.0
        %1459 = vmatpush1.msra.mxu0 0.0
        %1460 = vmatprep.subr.mxu0 0.0
        %1461 = vmatpush1.msra.mxu0 0.0
        %1462 = vmatprep.subr.mxu0 0.0
        %1463 = vmatpush1.msra.mxu0 0.0
        %1464 = vmatprep.subr.mxu0 0.0
        %1465 = vmatpush1.msra.mxu0 0.0
        %1466 = vmatprep.subr.mxu0 0.0
        %1467 = vmatpush1.msra.mxu0 %v1439
        %1468 = vmatprep.subr.mxu0 0.0
        %1469 = vmatpush1.msra.mxu0 %v1438
        %1470 = vmatprep.subr.mxu0 0.0
        %1471 = vmatpush1.msra.mxu0 %v1437
        %1472 = vmatprep.subr.mxu0 0.0
        %1473 = vmatpush1.msra.mxu0 %v1436
        %1474 = vmatprep.subr.mxu0 0.0
        %1475 = vmatpush1.msra.mxu0 %v1435
        %1476 = vmatprep.subr.mxu0 0.0
        %1477 = vmatpush1.msra.mxu0 %v1434
        %1478 = vmatprep.subr.mxu0 0.0
        %1479 = vmatpush1.msra.mxu0 %v1433
        %1480 = vmatprep.subr.mxu0 0.0
        %1481 = vmatpush1.msra.mxu0 %v1432
        %1482 = vmatprep.subr.mxu0 0.0
        %1483 = vmatpush2.msra.mxu0 0.0
        %1484 = vmatprep.subr.mxu0 0.0
        %1485 = vmatpush2.msra.mxu0 0.0
        %1486 = vmatprep.subr.mxu0 0.0
        %1487 = vmatpush2.msra.mxu0 0.0
        %1488 = vmatprep.subr.mxu0 0.0
        %1489 = vmatpush2.msra.mxu0 0.0
        %1490 = vmatprep.subr.mxu0 0.0
        %1491 = vmatpush2.msra.mxu0 0.0
        %1492 = vmatprep.subr.mxu0 0.0
        %1493 = vmatpush2.msra.mxu0 0.0
        %1494 = vmatprep.subr.mxu0 0.0
        %1495 = vmatpush2.msra.mxu0 0.0
        %1496 = vmatprep.subr.mxu0 0.0
        %1497 = vmatpush2.msra.mxu0 0.0
        %1498 = vmatprep.subr.mxu0 0.0
        %1499 = vmatpush2.msra.mxu0 0.0
        %1500 = vmatprep.subr.mxu0 0.0
        %1501 = vmatpush2.msra.mxu0 0.0
        %1502 = vmatprep.subr.mxu0 0.0
        %1503 = vmatpush2.msra.mxu0 0.0
        %1504 = vmatprep.subr.mxu0 0.0
        %1505 = vmatpush2.msra.mxu0 0.0
        %1506 = vmatprep.subr.mxu0 0.0
        %1507 = vmatpush2.msra.mxu0 0.0
        %1508 = vmatprep.subr.mxu0 0.0
        %1509 = vmatpush2.msra.mxu0 0.0
        %1510 = vmatprep.subr.mxu0 0.0
        %1511 = vmatpush2.msra.mxu0 0.0
        %1512 = vmatprep.subr.mxu0 0.0
        %1513 = vmatpush2.msra.mxu0 0.0
        %1514 = vmatprep.mubr.f32.mxu0 0.0
        %1515 = vmatmul.mubr.f32.gmra.mxu0 %v1448
        %v1516 = vpop.f32.mrf.mxu0
        %v1517 = vadd.f32 %v1445, %v1516
        %v1518 = vpop.f32.mrf.mxu0
        %1519 = vdwg.mxu0
        %1520 = vst.msk [vmem:[%s472] sm:$0xff] %vm487, %v1517
        %s1521 = sand.u32 %s285, 1
        %s1522 = scalar_lea.sflag [#allocation8], %s1521
        %s1523 = sand.u32 %s285, 1
        %s1524 = smul.addr %s1523, 8
        %s1525 = scalar_lea.vmem [#allocation12], %s1524
        // Predicated region
        $region77: #{tpu_custom_call.1} parent=63 // pred_check
          %p1526 = pneg %p295
        $region78: #{tpu_custom_call.1} parent=63 // pred_check_branch
          %1528 = sbr.rel (%p1526) target = $region80
        $region79: #{tpu_custom_call.1} parent=63 // pred_region
          %s1530 = ssub.s32 128, 128
          %1531 = vsyncadd %s1522, %s1530
          %s1532 = smul.addr %s31, 128
          %s1533 = scalar_lea.hbm %s11, %s1532
          %s1535 = sshll.u32 %s1525, 4
          %s1536 = int_to_ptr.vmem [resolvable:$true] %s1535
          %1538 = dma.vmem_to_hbm [thread:$0]  %s1536, 128, %s1533, %s1522
        $region80: #{tpu_custom_call.1} parent=63 // pred_fallthru
          _
      $region64: #{tpu_custom_call.1} parent=5 // pred_fallthru
        _
      %p1539 = scmp.le.s32.totalorder 2, %s26
      // Predicated region
      $region81: #{tpu_custom_call.1} parent=5 // pred_check
        %p1540 = pneg %p1539
      $region82: #{tpu_custom_call.1} parent=5 // pred_check_branch
        %1542 = sbr.rel (%p1540) target = $region84
      $region83: #{tpu_custom_call.1} parent=5 // pred_region
        %s1543 = ssub.s32 %s26, 2
        // Predicated region
        $region85: #{tpu_custom_call.1} parent=83 // pred_check
          %p1544 = pneg %p301
        $region86: #{tpu_custom_call.1} parent=83 // pred_check_branch
          %1546 = sbr.rel (%p1544) target = $region88
        $region87: #{tpu_custom_call.1} parent=83 // pred_region
          %s1547 = sand.u32 %s286, 1
          %s1548 = scalar_lea.sflag [#allocation8], %s1547
          %s1549 = sand.u32 %s286, 1
          %s1550 = smul.addr %s1549, 8
          %s1551 = scalar_lea.vmem [#allocation12], %s1550
          %1552 = dma.done %s1548, 128
        $region88: #{tpu_custom_call.1} parent=83 // pred_fallthru
          _
      $region84: #{tpu_custom_call.1} parent=5 // pred_fallthru
        _
    $region6: #{tpu_custom_call.1} parent=1 // loop_footer
      %s30 = sadd.s32 1, %s26
    $region7: #{tpu_custom_call.1} parent=1 // loop_footer_branch
      %25 = sbr.rel target = $region3
    $region8: #{tpu_custom_call.1} parent=1 // loop_exit
      _
    %1553 = vsyncpa [#allocation7], 1
    %s1554 = scalar_lea.sflag [#allocation7], 1
    %1555 = vsyncpa %s1554, 1
    %1556 = vsyncpa [#allocation10], 1
    %s1557 = scalar_lea.sflag [#allocation10], 1
    %1558 = vsyncpa %s1557, 1
    %1559 = vsyncpa [#allocation8], 1
    %s1560 = scalar_lea.sflag [#allocation8], 1
    %1561 = vsyncpa %s1560, 1

// kernel: tpu_custom_call.1
$region0: #{tpu_custom_call.1}
  #allocation0 [shape = 'u32[]', space=smem, size = 0x4, offset = 0x4, fixed_abs, tag = 'smem constant byte address 0x4 - core index']
  #allocation1 [shape = 'u32[144,128]{1,0:T(1,128)}', space=vmem, size = 0x12000, scoped, tag = 'internal scratch']
  #allocation2 [shape = 'f32[8,64]{1,0:T(8,128)}', space=vmem, size = 0x1000, scoped, tag = 'scratch operand']
  #allocation3 [shape = 'f32[8,64]{1,0:T(8,128)}', space=vmem, size = 0x1000, scoped, tag = 'scratch operand']
  #allocation4 [shape = 'f32[8,64]{1,0:T(8,128)}', space=vmem, size = 0x1000, scoped, tag = 'scratch operand']
  #allocation5 [shape = 'f32[8,64]{1,0:T(8,128)}', space=vmem, size = 0x1000, scoped, tag = 'scratch operand']
  %s0 = inlined_call_operand.hbm [shape: f32[2,8,32], index: 0, kind: input, shape index: {}]
  %s1 = inlined_call_operand.hbm [shape: f32[2,8,32], index: 1, kind: input, shape index: {}]
  %s2 = inlined_call_operand.hbm [shape: f32[2,8,32], index: 2, kind: input, shape index: {}]
  %s3 = inlined_call_operand.vmem [shape: f32[32,64], index: 3, kind: input, shape index: {}]
  %s4 = inlined_call_operand.vmem [shape: f32[1,64], index: 4, kind: input, shape index: {}]
  %s5 = inlined_call_operand.vmem [shape: f32[32,64], index: 5, kind: input, shape index: {}]
  %s6 = inlined_call_operand.vmem [shape: f32[1,64], index: 6, kind: input, shape index: {}]
  %s7 = inlined_call_operand.vmem [shape: f32[32,64], index: 7, kind: input, shape index: {}]
  %s8 = inlined_call_operand.vmem [shape: f32[1,64], index: 8, kind: input, shape index: {}]
  %s9 = inlined_call_operand.vmem [shape: f32[64,32], index: 9, kind: input, shape index: {}]
  %s10 = inlined_call_operand.vmem [shape: f32[1,32], index: 10, kind: input, shape index: {}]
  %s11 = inlined_call_operand.hbm [shape: f32[2,8,32], index: 11, kind: output, shape index: {}]
  %s12 = sld [smem:[#allocation0]]
  $region89: #{tpu_custom_call.1} parent=0
    _
  %s14 = ssub.s32 1, %s12
  %s15 = scalar_select 0, %s14, %s12
  $region1: #{tpu_custom_call.1} parent=0
    #allocation6 [shape = 'u8[8192]{0}', space=vmem, size = 0x2000, scoped, tag = 'input window, operand 0']
    #allocation7 [shape = 's32[2]{0}', space=sflag, size = 0x8, scoped, tag = 'scoped memory for tpu_custom_call.1']
    #allocation8 [shape = 's32[2]{0}', space=sflag, size = 0x8, scoped, tag = 'scoped memory for tpu_custom_call.1']
    #allocation9 [shape = 'u8[8192]{0}', space=vmem, size = 0x2000, scoped, tag = 'input window, operand 1']
    #allocation10 [shape = 's32[2]{0}', space=sflag, size = 0x8, scoped, tag = 'scoped memory for tpu_custom_call.1']
    #allocation11 [shape = 'u8[8192]{0}', space=vmem, size = 0x2000, scoped, tag = 'input window, operand 2']
    #allocation12 [shape = 'u8[8192]{0}', space=vmem, size = 0x2000, scoped, tag = 'output window, operand 0']
    %16 = vsyncpa [#allocation7], 0
    %s17 = scalar_lea.sflag [#allocation7], 1
    %18 = vsyncpa %s17, 0
    %19 = vsyncpa [#allocation10], 0
    %s20 = scalar_lea.sflag [#allocation10], 1
    %21 = vsyncpa %s20, 0
    %22 = vsyncpa [#allocation8], 0
    %s23 = scalar_lea.sflag [#allocation8], 1
    %24 = vsyncpa %s23, 0
    loop: start=0, step=1, limit=4
    $region2: #{tpu_custom_call.1} parent=1 // loop_pre_header
      _
    $region3: #{tpu_custom_call.1} parent=1 // loop_header
      %s26 = sphi 0, %s30
      %p27 = scmp.ge.s32.totalorder %s26, 4
      %s36 = sphi 0, %s38
      %s39 = sphi 0, %s36
      %s40 = sphi 0, %s39
      %s56 = sphi 0, %s40
      %s62 = sphi 0, %s64
      %s65 = sphi 0, %s62
      %s66 = sphi 0, %s65
      %s82 = sphi 0, %s66
      %s88 = sphi 0, %s90
      %s91 = sphi 0, %s88
      %s92 = sphi 0, %s91
      %s108 = sphi 0, %s92
      %s112 = sphi 0, %s112
      %s114 = sphi 0, %s112
      %s115 = sphi 0, %s114
      %s129 = sphi 0, %s115
      %s133 = sphi 0, %s133
      %s135 = sphi 0, %s133
      %s136 = sphi 0, %s135
      %s150 = sphi 0, %s136
      %s154 = sphi 0, %s154
      %s156 = sphi 0, %s154
      %s157 = sphi 0, %s156
      %s171 = sphi 0, %s157
      %s175 = sphi 0, %s175
      %s177 = sphi 0, %s175
      %s178 = sphi 0, %s177
      %s192 = sphi 0, %s178
      %s196 = sphi 0, %s196
      %s198 = sphi 0, %s196
      %s199 = sphi 0, %s198
      %s213 = sphi 0, %s199
      %s217 = sphi 0, %s217
      %s219 = sphi 0, %s217
      %s220 = sphi 0, %s219
      %s234 = sphi 0, %s220
      %s238 = sphi 0, %s238
      %s240 = sphi 0, %s238
      %s241 = sphi 0, %s240
      %s255 = sphi 0, %s241
      %s259 = sphi 0, %s259
      %s261 = sphi 0, %s259
      %s262 = sphi 0, %s261
      %s276 = sphi 0, %s262
      %s282 = sphi 0, %s284
      %s285 = sphi 0, %s282
      %s286 = sphi 0, %s285
      %s302 = sphi 0, %s286
    $region4: #{tpu_custom_call.1} parent=1 // loop_header_branch
      %29 = sbr.rel (%p27) target = $region8
    $region5: #{tpu_custom_call.1} parent=1 // loop_body
      %s31 = ssub.s32 %s26, 1
      %s32 = ssub.s32 %s26, 2
      %s33 = sadd.s32 %s26, 1
      %s34 = ssub.s32 %s26, %s33
      %p35 = scmp.eq.s32.totalorder %s34, 0
      %s37 = sadd.s32 %s36, 1
      %s38 = scalar_select %p35, %s36, %s37
      %p41 = pneg %p35
      %p42 = scmp.eq.s32.totalorder %s26, 1
      %p43 = por %p41, %p42
      %p44 = scmp.ne.s32.totalorder %s36, %s39
      %p45 = scmp.eq.s32.totalorder %s26, 0
      %p46 = por %p44, %p45
      %p47 = scmp.ne.s32.totalorder %s36, %s39
      %p48 = scmp.eq.s32.totalorder %s31, 1
      %p49 = por %p47, %p48
      %p50 = scmp.ne.s32.totalorder %s39, %s40
      %p51 = scmp.eq.s32.totalorder %s31, 0
      %p52 = por %p50, %p51
      %p53 = scmp.ne.s32.totalorder %s39, %s40
      %p54 = scmp.eq.s32.totalorder %s32, 1
      %p55 = por %p53, %p54
      %p57 = scmp.ne.s32.totalorder %s40, %s56
      %p58 = scmp.eq.s32.totalorder %s32, 0
      %p59 = por %p57, %p58
      %s60 = ssub.s32 %s26, %s33
      %p61 = scmp.eq.s32.totalorder %s60, 0
      %s63 = sadd.s32 %s62, 1
      %s64 = scalar_select %p61, %s62, %s63
      %p67 = pneg %p61
      %p68 = scmp.eq.s32.totalorder %s26, 1
      %p69 = por %p67, %p68
      %p70 = scmp.ne.s32.totalorder %s62, %s65
      %p71 = scmp.eq.s32.totalorder %s26, 0
      %p72 = por %p70, %p71
      %p73 = scmp.ne.s32.totalorder %s62, %s65
      %p74 = scmp.eq.s32.totalorder %s31, 1
      %p75 = por %p73, %p74
      %p76 = scmp.ne.s32.totalorder %s65, %s66
      %p77 = scmp.eq.s32.totalorder %s31, 0
      %p78 = por %p76, %p77
      %p79 = scmp.ne.s32.totalorder %s65, %s66
      %p80 = scmp.eq.s32.totalorder %s32, 1
      %p81 = por %p79, %p80
      %p83 = scmp.ne.s32.totalorder %s66, %s82
      %p84 = scmp.eq.s32.totalorder %s32, 0
      %p85 = por %p83, %p84
      %s86 = ssub.s32 %s26, %s33
      %p87 = scmp.eq.s32.totalorder %s86, 0
      %s89 = sadd.s32 %s88, 1
      %s90 = scalar_select %p87, %s88, %s89
      %p93 = pneg %p87
      %p94 = scmp.eq.s32.totalorder %s26, 1
      %p95 = por %p93, %p94
      %p96 = scmp.ne.s32.totalorder %s88, %s91
      %p97 = scmp.eq.s32.totalorder %s26, 0
      %p98 = por %p96, %p97
      %p99 = scmp.ne.s32.totalorder %s88, %s91
      %p100 = scmp.eq.s32.totalorder %s31, 1
      %p101 = por %p99, %p100
      %p102 = scmp.ne.s32.totalorder %s91, %s92
      %p103 = scmp.eq.s32.totalorder %s31, 0
      %p104 = por %p102, %p103
      %p105 = scmp.ne.s32.totalorder %s91, %s92
      %p106 = scmp.eq.s32.totalorder %s32, 1
      %p107 = por %p105, %p106
      %p109 = scmp.ne.s32.totalorder %s92, %s108
      %p110 = scmp.eq.s32.totalorder %s32, 0
      %p111 = por %p109, %p110
      %s113 = sadd.s32 %s112, 1
      %p116 = scmp.eq.s32.totalorder %s26, 1
      %p117 = scmp.ne.s32.totalorder %s112, %s114
      %p118 = scmp.eq.s32.totalorder %s26, 0
      %p119 = por %p117, %p118
      %p120 = scmp.ne.s32.totalorder %s112, %s114
      %p121 = scmp.eq.s32.totalorder %s31, 1
      %p122 = por %p120, %p121
      %p123 = scmp.ne.s32.totalorder %s114, %s115
      %p124 = scmp.eq.s32.totalorder %s31, 0
      %p125 = por %p123, %p124
      %p126 = scmp.ne.s32.totalorder %s114, %s115
      %p127 = scmp.eq.s32.totalorder %s32, 1
      %p128 = por %p126, %p127
      %p130 = scmp.ne.s32.totalorder %s115, %s129
      %p131 = scmp.eq.s32.totalorder %s32, 0
      %p132 = por %p130, %p131
      %s134 = sadd.s32 %s133, 1
      %p137 = scmp.eq.s32.totalorder %s26, 1
      %p138 = scmp.ne.s32.totalorder %s133, %s135
      %p139 = scmp.eq.s32.totalorder %s26, 0
      %p140 = por %p138, %p139
      %p141 = scmp.ne.s32.totalorder %s133, %s135
      %p142 = scmp.eq.s32.totalorder %s31, 1
      %p143 = por %p141, %p142
      %p144 = scmp.ne.s32.totalorder %s135, %s136
      %p145 = scmp.eq.s32.totalorder %s31, 0
      %p146 = por %p144, %p145
      %p147 = scmp.ne.s32.totalorder %s135, %s136
      %p148 = scmp.eq.s32.totalorder %s32, 1
      %p149 = por %p147, %p148
      %p151 = scmp.ne.s32.totalorder %s136, %s150
      %p152 = scmp.eq.s32.totalorder %s32, 0
      %p153 = por %p151, %p152
      %s155 = sadd.s32 %s154, 1
      %p158 = scmp.eq.s32.totalorder %s26, 1
      %p159 = scmp.ne.s32.totalorder %s154, %s156
      %p160 = scmp.eq.s32.totalorder %s26, 0
      %p161 = por %p159, %p160
      %p162 = scmp.ne.s32.totalorder %s154, %s156
      %p163 = scmp.eq.s32.totalorder %s31, 1
      %p164 = por %p162, %p163
      %p165 = scmp.ne.s32.totalorder %s156, %s157
      %p166 = scmp.eq.s32.totalorder %s31, 0
      %p167 = por %p165, %p166
      %p168 = scmp.ne.s32.totalorder %s156, %s157
      %p169 = scmp.eq.s32.totalorder %s32, 1
      %p170 = por %p168, %p169
      %p172 = scmp.ne.s32.totalorder %s157, %s171
      %p173 = scmp.eq.s32.totalorder %s32, 0
      %p174 = por %p172, %p173
      %s176 = sadd.s32 %s175, 1
      %p179 = scmp.eq.s32.totalorder %s26, 1
      %p180 = scmp.ne.s32.totalorder %s175, %s177
      %p181 = scmp.eq.s32.totalorder %s26, 0
      %p182 = por %p180, %p181
      %p183 = scmp.ne.s32.totalorder %s175, %s177
      %p184 = scmp.eq.s32.totalorder %s31, 1
      %p185 = por %p183, %p184
      %p186 = scmp.ne.s32.totalorder %s177, %s178
      %p187 = scmp.eq.s32.totalorder %s31, 0
      %p188 = por %p186, %p187
      %p189 = scmp.ne.s32.totalorder %s177, %s178
      %p190 = scmp.eq.s32.totalorder %s32, 1
      %p191 = por %p189, %p190
      %p193 = scmp.ne.s32.totalorder %s178, %s192
      %p194 = scmp.eq.s32.totalorder %s32, 0
      %p195 = por %p193, %p194
      %s197 = sadd.s32 %s196, 1
      %p200 = scmp.eq.s32.totalorder %s26, 1
      %p201 = scmp.ne.s32.totalorder %s196, %s198
      %p202 = scmp.eq.s32.totalorder %s26, 0
      %p203 = por %p201, %p202
      %p204 = scmp.ne.s32.totalorder %s196, %s198
      %p205 = scmp.eq.s32.totalorder %s31, 1
      %p206 = por %p204, %p205
      %p207 = scmp.ne.s32.totalorder %s198, %s199
      %p208 = scmp.eq.s32.totalorder %s31, 0
      %p209 = por %p207, %p208
      %p210 = scmp.ne.s32.totalorder %s198, %s199
      %p211 = scmp.eq.s32.totalorder %s32, 1
      %p212 = por %p210, %p211
      %p214 = scmp.ne.s32.totalorder %s199, %s213
      %p215 = scmp.eq.s32.totalorder %s32, 0
      %p216 = por %p214, %p215
      %s218 = sadd.s32 %s217, 1
      %p221 = scmp.eq.s32.totalorder %s26, 1
      %p222 = scmp.ne.s32.totalorder %s217, %s219
      %p223 = scmp.eq.s32.totalorder %s26, 0
      %p224 = por %p222, %p223
      %p225 = scmp.ne.s32.totalorder %s217, %s219
      %p226 = scmp.eq.s32.totalorder %s31, 1
      %p227 = por %p225, %p226
      %p228 = scmp.ne.s32.totalorder %s219, %s220
      %p229 = scmp.eq.s32.totalorder %s31, 0
      %p230 = por %p228, %p229
      %p231 = scmp.ne.s32.totalorder %s219, %s220
      %p232 = scmp.eq.s32.totalorder %s32, 1
      %p233 = por %p231, %p232
      %p235 = scmp.ne.s32.totalorder %s220, %s234
      %p236 = scmp.eq.s32.totalorder %s32, 0
      %p237 = por %p235, %p236
      %s239 = sadd.s32 %s238, 1
      %p242 = scmp.eq.s32.totalorder %s26, 1
      %p243 = scmp.ne.s32.totalorder %s238, %s240
      %p244 = scmp.eq.s32.totalorder %s26, 0
      %p245 = por %p243, %p244
      %p246 = scmp.ne.s32.totalorder %s238, %s240
      %p247 = scmp.eq.s32.totalorder %s31, 1
      %p248 = por %p246, %p247
      %p249 = scmp.ne.s32.totalorder %s240, %s241
      %p250 = scmp.eq.s32.totalorder %s31, 0
      %p251 = por %p249, %p250
      %p252 = scmp.ne.s32.totalorder %s240, %s241
      %p253 = scmp.eq.s32.totalorder %s32, 1
      %p254 = por %p252, %p253
      %p256 = scmp.ne.s32.totalorder %s241, %s255
      %p257 = scmp.eq.s32.totalorder %s32, 0
      %p258 = por %p256, %p257
      %s260 = sadd.s32 %s259, 1
      %p263 = scmp.eq.s32.totalorder %s26, 1
      %p264 = scmp.ne.s32.totalorder %s259, %s261
      %p265 = scmp.eq.s32.totalorder %s26, 0
      %p266 = por %p264, %p265
      %p267 = scmp.ne.s32.totalorder %s259, %s261
      %p268 = scmp.eq.s32.totalorder %s31, 1
      %p269 = por %p267, %p268
      %p270 = scmp.ne.s32.totalorder %s261, %s262
      %p271 = scmp.eq.s32.totalorder %s31, 0
      %p272 = por %p270, %p271
      %p273 = scmp.ne.s32.totalorder %s261, %s262
      %p274 = scmp.eq.s32.totalorder %s32, 1
      %p275 = por %p273, %p274
      %p277 = scmp.ne.s32.totalorder %s262, %s276
      %p278 = scmp.eq.s32.totalorder %s32, 0
      %p279 = por %p277, %p278
      %s280 = ssub.s32 %s26, %s33
      %p281 = scmp.eq.s32.totalorder %s280, 0
      %s283 = sadd.s32 %s282, 1
      %s284 = scalar_select %p281, %s282, %s283
      %p287 = pneg %p281
      %p288 = scmp.eq.s32.totalorder %s26, 1
      %p289 = por %p287, %p288
      %p290 = scmp.ne.s32.totalorder %s282, %s285
      %p291 = scmp.eq.s32.totalorder %s26, 0
      %p292 = por %p290, %p291
      %p293 = scmp.ne.s32.totalorder %s282, %s285
      %p294 = scmp.eq.s32.totalorder %s31, 1
      %p295 = por %p293, %p294
      %p296 = scmp.ne.s32.totalorder %s285, %s286
      %p297 = scmp.eq.s32.totalorder %s31, 0
      %p298 = por %p296, %p297
      %p299 = scmp.ne.s32.totalorder %s285, %s286
      %p300 = scmp.eq.s32.totalorder %s32, 1
      %p301 = por %p299, %p300
      %p303 = scmp.ne.s32.totalorder %s286, %s302
      %p304 = scmp.eq.s32.totalorder %s32, 0
      %p305 = por %p303, %p304
      %p306 = scmp.le.s32.totalorder 1, %s26
      %p307 = scmp.lt.s32.totalorder %s26, 3
      %p308 = pnand %p306, %p307
      %p309 = pneg %p308
      // Predicated region
      $region9: #{tpu_custom_call.1} parent=5 // pred_check
        _
      $region10: #{tpu_custom_call.1} parent=5 // pred_check_branch
        %311 = sbr.rel (%p308) target = $region12
      $region11: #{tpu_custom_call.1} parent=5 // pred_region
        %s312 = ssub.s32 %s26, 1
        // Predicated region
        $region13: #{tpu_custom_call.1} parent=11 // pred_check
          %p313 = pneg %p125
        $region14: #{tpu_custom_call.1} parent=11 // pred_check_branch
          %315 = sbr.rel (%p313) target = $region16
        $region15: #{tpu_custom_call.1} parent=11 // pred_region
          _
        $region16: #{tpu_custom_call.1} parent=11 // pred_fallthru
          _
        // Predicated region
        $region17: #{tpu_custom_call.1} parent=11 // pred_check
          %p316 = pneg %p146
        $region18: #{tpu_custom_call.1} parent=11 // pred_check_branch
          %318 = sbr.rel (%p316) target = $region20
        $region19: #{tpu_custom_call.1} parent=11 // pred_region
          _
        $region20: #{tpu_custom_call.1} parent=11 // pred_fallthru
          _
        // Predicated region
        $region21: #{tpu_custom_call.1} parent=11 // pred_check
          %p319 = pneg %p167
        $region22: #{tpu_custom_call.1} parent=11 // pred_check_branch
          %321 = sbr.rel (%p319) target = $region24
        $region23: #{tpu_custom_call.1} parent=11 // pred_region
          _
        $region24: #{tpu_custom_call.1} parent=11 // pred_fallthru
          _
        // Predicated region
        $region25: #{tpu_custom_call.1} parent=11 // pred_check
          %p322 = pneg %p188
        $region26: #{tpu_custom_call.1} parent=11 // pred_check_branch
          %324 = sbr.rel (%p322) target = $region28
        $region27: #{tpu_custom_call.1} parent=11 // pred_region
          _
        $region28: #{tpu_custom_call.1} parent=11 // pred_fallthru
          _
        // Predicated region
        $region29: #{tpu_custom_call.1} parent=11 // pred_check
          %p325 = pneg %p209
        $region30: #{tpu_custom_call.1} parent=11 // pred_check_branch
          %327 = sbr.rel (%p325) target = $region32
        $region31: #{tpu_custom_call.1} parent=11 // pred_region
          _
        $region32: #{tpu_custom_call.1} parent=11 // pred_fallthru
          _
        // Predicated region
        $region33: #{tpu_custom_call.1} parent=11 // pred_check
          %p328 = pneg %p230
        $region34: #{tpu_custom_call.1} parent=11 // pred_check_branch
          %330 = sbr.rel (%p328) target = $region36
        $region35: #{tpu_custom_call.1} parent=11 // pred_region
          _
        $region36: #{tpu_custom_call.1} parent=11 // pred_fallthru
          _
        // Predicated region
        $region37: #{tpu_custom_call.1} parent=11 // pred_check
          %p331 = pneg %p251
        $region38: #{tpu_custom_call.1} parent=11 // pred_check_branch
          %333 = sbr.rel (%p331) target = $region40
        $region39: #{tpu_custom_call.1} parent=11 // pred_region
          _
        $region40: #{tpu_custom_call.1} parent=11 // pred_fallthru
          _
        // Predicated region
        $region41: #{tpu_custom_call.1} parent=11 // pred_check
          %p334 = pneg %p272
        $region42: #{tpu_custom_call.1} parent=11 // pred_check_branch
          %336 = sbr.rel (%p334) target = $region44
        $region43: #{tpu_custom_call.1} parent=11 // pred_region
          _
        $region44: #{tpu_custom_call.1} parent=11 // pred_fallthru
          _
      $region12: #{tpu_custom_call.1} parent=5 // pred_fallthru
        _
      %p337 = scmp.lt.s32.totalorder %s26, 2
      // Predicated region
      $region45: #{tpu_custom_call.1} parent=5 // pred_check
        %p338 = pneg %p337
      $region46: #{tpu_custom_call.1} parent=5 // pred_check_branch
        %340 = sbr.rel (%p338) target = $region48
      $region47: #{tpu_custom_call.1} parent=5 // pred_region
        // Predicated region
        $region49: #{tpu_custom_call.1} parent=47 // pred_check
          %p341 = pneg %p46
        $region50: #{tpu_custom_call.1} parent=47 // pred_check_branch
          %343 = sbr.rel (%p341) target = $region52
        $region51: #{tpu_custom_call.1} parent=47 // pred_region
          %s344 = sand.u32 %s36, 1
          %s345 = scalar_lea.sflag [#allocation7], %s344
          %s346 = sand.u32 %s36, 1
          %s347 = smul.addr %s346, 8
          %s348 = scalar_lea.vmem [#allocation6], %s347
          %s350 = ssub.s32 128, 128
          %351 = vsyncadd %s345, %s350
          %s352 = smul.addr %s26, 128
          %s353 = scalar_lea.hbm %s0, %s352
          %s355 = sshll.u32 %s348, 4
          %s356 = int_to_ptr.vmem [resolvable:$true] %s355
          %358 = dma.hbm_to_vmem [thread:$0]  %s353, 128, %s356, %s345
        $region52: #{tpu_custom_call.1} parent=47 // pred_fallthru
          _
        // Predicated region
        $region53: #{tpu_custom_call.1} parent=47 // pred_check
          %p359 = pneg %p72
        $region54: #{tpu_custom_call.1} parent=47 // pred_check_branch
          %361 = sbr.rel (%p359) target = $region56
        $region55: #{tpu_custom_call.1} parent=47 // pred_region
          %s362 = sand.u32 %s26, 1
          %s363 = scalar_lea.sflag [#allocation10], %s362
          %s364 = sand.u32 %s62, 1
          %s365 = smul.addr %s364, 8
          %s366 = scalar_lea.vmem [#allocation9], %s365
          %s368 = ssub.s32 128, 128
          %369 = vsyncadd %s363, %s368
          %s370 = smul.addr %s26, 128
          %s371 = scalar_lea.hbm %s1, %s370
          %s373 = sshll.u32 %s366, 4
          %s374 = int_to_ptr.vmem [resolvable:$true] %s373
          %376 = dma.hbm_to_vmem [thread:$0]  %s371, 128, %s374, %s363
        $region56: #{tpu_custom_call.1} parent=47 // pred_fallthru
          _
        // Predicated region
        $region57: #{tpu_custom_call.1} parent=47 // pred_check
          %p377 = pneg %p98
        $region58: #{tpu_custom_call.1} parent=47 // pred_check_branch
          %379 = sbr.rel (%p377) target = $region60
        $region59: #{tpu_custom_call.1} parent=47 // pred_region
          %s380 = sand.u32 %s26, 1
          %s381 = scalar_lea.sflag [#allocation10], %s380
          %s382 = sand.u32 %s88, 1
          %s383 = smul.addr %s382, 8
          %s384 = scalar_lea.vmem [#allocation11], %s383
          %s386 = ssub.s32 128, 128
          %387 = vsyncadd %s381, %s386
          %s388 = smul.addr %s26, 128
          %s389 = scalar_lea.hbm %s2, %s388
          %s391 = sshll.u32 %s384, 4
          %s392 = int_to_ptr.vmem [resolvable:$true] %s391
          %394 = dma.hbm_to_vmem [thread:$0]  %s389, 128, %s392, %s381
        $region60: #{tpu_custom_call.1} parent=47 // pred_fallthru
          _
      $region48: #{tpu_custom_call.1} parent=5 // pred_fallthru
        _
      %p395 = scmp.le.s32.totalorder 1, %s26
      %p396 = scmp.lt.s32.totalorder %s26, 3
      %p397 = pnand %p395, %p396
      %p398 = pneg %p397
      // Predicated region
      $region61: #{tpu_custom_call.1} parent=5 // pred_check
        _
      $region62: #{tpu_custom_call.1} parent=5 // pred_check_branch
        %400 = sbr.rel (%p397) target = $region64
      $region63: #{tpu_custom_call.1} parent=5 // pred_region
        %s401 = ssub.s32 %s26, 1
        %s402 = sand.u32 %s39, 1
        %s403 = scalar_lea.sflag [#allocation7], %s402
        %s404 = sand.u32 %s39, 1
        %s405 = smul.addr %s404, 8
        %s406 = scalar_lea.vmem [#allocation6], %s405
        // Predicated region
        $region65: #{tpu_custom_call.1} parent=63 // pred_check
          %p407 = pneg %p52
        $region66: #{tpu_custom_call.1} parent=63 // pred_check_branch
          %409 = sbr.rel (%p407) target = $region68
        $region67: #{tpu_custom_call.1} parent=63 // pred_region
          %410 = dma.done %s403, 128
        $region68: #{tpu_custom_call.1} parent=63 // pred_fallthru
          _
        %s411 = sand.u32 %s31, 1
        %s412 = scalar_lea.sflag [#allocation10], %s411
        %s413 = sand.u32 %s65, 1
        %s414 = smul.addr %s413, 8
        %s415 = scalar_lea.vmem [#allocation9], %s414
        // Predicated region
        $region69: #{tpu_custom_call.1} parent=63 // pred_check
          %p416 = pneg %p78
        $region70: #{tpu_custom_call.1} parent=63 // pred_check_branch
          %418 = sbr.rel (%p416) target = $region72
        $region71: #{tpu_custom_call.1} parent=63 // pred_region
          %419 = dma.done %s412, 128
        $region72: #{tpu_custom_call.1} parent=63 // pred_fallthru
          _
        %s420 = sand.u32 %s31, 1
        %s421 = scalar_lea.sflag [#allocation10], %s420
        %s422 = sand.u32 %s91, 1
        %s423 = smul.addr %s422, 8
        %s424 = scalar_lea.vmem [#allocation11], %s423
        // Predicated region
        $region73: #{tpu_custom_call.1} parent=63 // pred_check
          %p425 = pneg %p104
        $region74: #{tpu_custom_call.1} parent=63 // pred_check_branch
          %427 = sbr.rel (%p425) target = $region76
        $region75: #{tpu_custom_call.1} parent=63 // pred_region
          %428 = dma.done %s421, 128
        $region76: #{tpu_custom_call.1} parent=63 // pred_fallthru
          _
        %s429 = sand.u32 %s39, 1
        %s430 = scalar_lea.sflag [#allocation7], %s429
        %s431 = sand.u32 %s39, 1
        %s432 = smul.addr %s431, 8
        %s433 = scalar_lea.vmem [#allocation6], %s432
        %p434 = pneg %p52
        %p435 = pneg %p49
        %s436 = sand.u32 %s31, 1
        %s437 = scalar_lea.sflag [#allocation10], %s436
        %s438 = sand.u32 %s65, 1
        %s439 = smul.addr %s438, 8
        %s440 = scalar_lea.vmem [#allocation9], %s439
        %p441 = pneg %p78
        %p442 = pneg %p75
        %s443 = sand.u32 %s31, 1
        %s444 = scalar_lea.sflag [#allocation10], %s443
        %s445 = sand.u32 %s91, 1
        %s446 = smul.addr %s445, 8
        %s447 = scalar_lea.vmem [#allocation11], %s446
        %p448 = pneg %p104
        %p449 = pneg %p101
        %p450 = pneg %p125
        %p451 = pneg %p122
        %p452 = pneg %p146
        %p453 = pneg %p143
        %p454 = pneg %p167
        %p455 = pneg %p164
        %p456 = pneg %p188
        %p457 = pneg %p185
        %p458 = pneg %p209
        %p459 = pneg %p206
        %p460 = pneg %p230
        %p461 = pneg %p227
        %p462 = pneg %p251
        %p463 = pneg %p248
        %p464 = pneg %p272
        %p465 = pneg %p269
        %p466 = pneg %p298
        %p467 = pneg %p295
        %s468 = sand.u32 %s285, 1
        %s469 = scalar_lea.sflag [#allocation8], %s468
        %s470 = sand.u32 %s285, 1
        %s471 = smul.addr %s470, 8
        %s472 = scalar_lea.vmem [#allocation12], %s471
        %v473 = vld [vmem:[%s406] sm:$0xff]
        %v474 = vld [vmem:[%s415] sm:$0xff]
        %v475 = vld [vmem:[%s424] sm:$0xff]
        %v476 = vld [vmem:[%s3] sm:$0xff]
        %v477 = vld [vmem:[%s3 + $0x8] sm:$0xff]
        %v478 = vld [vmem:[%s3 + $0x10] sm:$0xff]
        %v479 = vld [vmem:[%s3 + $0x18] sm:$0xff]
        %v480 = vld [vmem:[%s4] sm:$0x1]
        %v482 = vlaneseq
        %v483 = vshrl.u32 %v482, 7
        %v484 = vsub.s32 0, %v483
        %v485 = vrot.slane %v480, %v484
        %vm487 = vcmask 261120
        %v489 = vsel %vm487, %v473, 0
        %491 = vmatprep.subr.mxu0 0.0
        %492 = vmatpush1.msra.mxu0 0.0
        %493 = vmatprep.subr.mxu0 0.0
        %494 = vmatpush1.msra.mxu0 0.0
        %495 = vmatprep.subr.mxu0 0.0
        %496 = vmatpush1.msra.mxu0 0.0
        %497 = vmatprep.subr.mxu0 0.0
        %498 = vmatpush1.msra.mxu0 0.0
        %499 = vmatprep.subr.mxu0 0.0
        %500 = vmatpush1.msra.mxu0 0.0
        %501 = vmatprep.subr.mxu0 0.0
        %502 = vmatpush1.msra.mxu0 0.0
        %503 = vmatprep.subr.mxu0 0.0
        %504 = vmatpush1.msra.mxu0 0.0
        %505 = vmatprep.subr.mxu0 0.0
        %506 = vmatpush1.msra.mxu0 0.0
        %507 = vmatprep.subr.mxu0 0.0
        %508 = vmatpush1.msra.mxu0 0.0
        %509 = vmatprep.subr.mxu0 0.0
        %510 = vmatpush1.msra.mxu0 0.0
        %511 = vmatprep.subr.mxu0 0.0
        %512 = vmatpush1.msra.mxu0 0.0
        %513 = vmatprep.subr.mxu0 0.0
        %514 = vmatpush1.msra.mxu0 0.0
        %515 = vmatprep.subr.mxu0 0.0
        %516 = vmatpush1.msra.mxu0 %v479
        %517 = vmatprep.subr.mxu0 0.0
        %518 = vmatpush1.msra.mxu0 %v478
        %519 = vmatprep.subr.mxu0 0.0
        %520 = vmatpush1.msra.mxu0 %v477
        %521 = vmatprep.subr.mxu0 0.0
        %522 = vmatpush1.msra.mxu0 %v476
        %523 = vmatprep.subr.mxu0 0.0
        %524 = vmatpush2.msra.mxu0 0.0
        %525 = vmatprep.subr.mxu0 0.0
        %526 = vmatpush2.msra.mxu0 0.0
        %527 = vmatprep.subr.mxu0 0.0
        %528 = vmatpush2.msra.mxu0 0.0
        %529 = vmatprep.subr.mxu0 0.0
        %530 = vmatpush2.msra.mxu0 0.0
        %531 = vmatprep.subr.mxu0 0.0
        %532 = vmatpush2.msra.mxu0 0.0
        %533 = vmatprep.subr.mxu0 0.0
        %534 = vmatpush2.msra.mxu0 0.0
        %535 = vmatprep.subr.mxu0 0.0
        %536 = vmatpush2.msra.mxu0 0.0
        %537 = vmatprep.subr.mxu0 0.0
        %538 = vmatpush2.msra.mxu0 0.0
        %539 = vmatprep.subr.mxu0 0.0
        %540 = vmatpush2.msra.mxu0 0.0
        %541 = vmatprep.subr.mxu0 0.0
        %542 = vmatpush2.msra.mxu0 0.0
        %543 = vmatprep.subr.mxu0 0.0
        %544 = vmatpush2.msra.mxu0 0.0
        %545 = vmatprep.subr.mxu0 0.0
        %546 = vmatpush2.msra.mxu0 0.0
        %547 = vmatprep.subr.mxu0 0.0
        %548 = vmatpush2.msra.mxu0 0.0
        %549 = vmatprep.subr.mxu0 0.0
        %550 = vmatpush2.msra.mxu0 0.0
        %551 = vmatprep.subr.mxu0 0.0
        %552 = vmatpush2.msra.mxu0 0.0
        %553 = vmatprep.subr.mxu0 0.0
        %554 = vmatpush2.msra.mxu0 0.0
        %555 = vmatprep.mubr.f32.mxu0 0.0
        %556 = vmatmul.mubr.f32.gmra.mxu0 %v489
        %v557 = vpop.f32.mrf.mxu0
        %v558 = vadd.f32 %v485, %v557
        %v559 = vpop.f32.mrf.mxu0
        %560 = vdwg.mxu0
        %v561 = vld [vmem:[%s5] sm:$0xff]
        %v562 = vld [vmem:[%s5 + $0x8] sm:$0xff]
        %v563 = vld [vmem:[%s5 + $0x10] sm:$0xff]
        %v564 = vld [vmem:[%s5 + $0x18] sm:$0xff]
        %v565 = vld [vmem:[%s6] sm:$0x1]
        %v567 = vlaneseq
        %v568 = vshrl.u32 %v567, 7
        %v569 = vsub.s32 0, %v568
        %v570 = vrot.slane %v565, %v569
        %v573 = vsel %vm487, %v474, 0
        %575 = vmatprep.subr.mxu0 0.0
        %576 = vmatpush1.msra.mxu0 0.0
        %577 = vmatprep.subr.mxu0 0.0
        %578 = vmatpush1.msra.mxu0 0.0
        %579 = vmatprep.subr.mxu0 0.0
        %580 = vmatpush1.msra.mxu0 0.0
        %581 = vmatprep.subr.mxu0 0.0
        %582 = vmatpush1.msra.mxu0 0.0
        %583 = vmatprep.subr.mxu0 0.0
        %584 = vmatpush1.msra.mxu0 0.0
        %585 = vmatprep.subr.mxu0 0.0
        %586 = vmatpush1.msra.mxu0 0.0
        %587 = vmatprep.subr.mxu0 0.0
        %588 = vmatpush1.msra.mxu0 0.0
        %589 = vmatprep.subr.mxu0 0.0
        %590 = vmatpush1.msra.mxu0 0.0
        %591 = vmatprep.subr.mxu0 0.0
        %592 = vmatpush1.msra.mxu0 0.0
        %593 = vmatprep.subr.mxu0 0.0
        %594 = vmatpush1.msra.mxu0 0.0
        %595 = vmatprep.subr.mxu0 0.0
        %596 = vmatpush1.msra.mxu0 0.0
        %597 = vmatprep.subr.mxu0 0.0
        %598 = vmatpush1.msra.mxu0 0.0
        %599 = vmatprep.subr.mxu0 0.0
        %600 = vmatpush1.msra.mxu0 %v564
        %601 = vmatprep.subr.mxu0 0.0
        %602 = vmatpush1.msra.mxu0 %v563
        %603 = vmatprep.subr.mxu0 0.0
        %604 = vmatpush1.msra.mxu0 %v562
        %605 = vmatprep.subr.mxu0 0.0
        %606 = vmatpush1.msra.mxu0 %v561
        %607 = vmatprep.subr.mxu0 0.0
        %608 = vmatpush2.msra.mxu0 0.0
        %609 = vmatprep.subr.mxu0 0.0
        %610 = vmatpush2.msra.mxu0 0.0
        %611 = vmatprep.subr.mxu0 0.0
        %612 = vmatpush2.msra.mxu0 0.0
        %613 = vmatprep.subr.mxu0 0.0
        %614 = vmatpush2.msra.mxu0 0.0
        %615 = vmatprep.subr.mxu0 0.0
        %616 = vmatpush2.msra.mxu0 0.0
        %617 = vmatprep.subr.mxu0 0.0
        %618 = vmatpush2.msra.mxu0 0.0
        %619 = vmatprep.subr.mxu0 0.0
        %620 = vmatpush2.msra.mxu0 0.0
        %621 = vmatprep.subr.mxu0 0.0
        %622 = vmatpush2.msra.mxu0 0.0
        %623 = vmatprep.subr.mxu0 0.0
        %624 = vmatpush2.msra.mxu0 0.0
        %625 = vmatprep.subr.mxu0 0.0
        %626 = vmatpush2.msra.mxu0 0.0
        %627 = vmatprep.subr.mxu0 0.0
        %628 = vmatpush2.msra.mxu0 0.0
        %629 = vmatprep.subr.mxu0 0.0
        %630 = vmatpush2.msra.mxu0 0.0
        %631 = vmatprep.subr.mxu0 0.0
        %632 = vmatpush2.msra.mxu0 0.0
        %633 = vmatprep.subr.mxu0 0.0
        %634 = vmatpush2.msra.mxu0 0.0
        %635 = vmatprep.subr.mxu0 0.0
        %636 = vmatpush2.msra.mxu0 0.0
        %637 = vmatprep.subr.mxu0 0.0
        %638 = vmatpush2.msra.mxu0 0.0
        %639 = vmatprep.mubr.f32.mxu0 0.0
        %640 = vmatmul.mubr.f32.gmra.mxu0 %v573
        %v641 = vpop.f32.mrf.mxu0
        %v642 = vadd.f32 %v570, %v641
        %v643 = vpop.f32.mrf.mxu0
        %644 = vdwg.mxu0
        %v645 = vld [vmem:[%s7] sm:$0xff]
        %v646 = vld [vmem:[%s7 + $0x8] sm:$0xff]
        %v647 = vld [vmem:[%s7 + $0x10] sm:$0xff]
        %v648 = vld [vmem:[%s7 + $0x18] sm:$0xff]
        %v649 = vld [vmem:[%s8] sm:$0x1]
        %v651 = vlaneseq
        %v652 = vshrl.u32 %v651, 7
        %v653 = vsub.s32 0, %v652
        %v654 = vrot.slane %v649, %v653
        %v657 = vsel %vm487, %v475, 0
        %659 = vmatprep.subr.mxu0 0.0
        %660 = vmatpush1.msra.mxu0 0.0
        %661 = vmatprep.subr.mxu0 0.0
        %662 = vmatpush1.msra.mxu0 0.0
        %663 = vmatprep.subr.mxu0 0.0
        %664 = vmatpush1.msra.mxu0 0.0
        %665 = vmatprep.subr.mxu0 0.0
        %666 = vmatpush1.msra.mxu0 0.0
        %667 = vmatprep.subr.mxu0 0.0
        %668 = vmatpush1.msra.mxu0 0.0
        %669 = vmatprep.subr.mxu0 0.0
        %670 = vmatpush1.msra.mxu0 0.0
        %671 = vmatprep.subr.mxu0 0.0
        %672 = vmatpush1.msra.mxu0 0.0
        %673 = vmatprep.subr.mxu0 0.0
        %674 = vmatpush1.msra.mxu0 0.0
        %675 = vmatprep.subr.mxu0 0.0
        %676 = vmatpush1.msra.mxu0 0.0
        %677 = vmatprep.subr.mxu0 0.0
        %678 = vmatpush1.msra.mxu0 0.0
        %679 = vmatprep.subr.mxu0 0.0
        %680 = vmatpush1.msra.mxu0 0.0
        %681 = vmatprep.subr.mxu0 0.0
        %682 = vmatpush1.msra.mxu0 0.0
        %683 = vmatprep.subr.mxu0 0.0
        %684 = vmatpush1.msra.mxu0 %v648
        %685 = vmatprep.subr.mxu0 0.0
        %686 = vmatpush1.msra.mxu0 %v647
        %687 = vmatprep.subr.mxu0 0.0
        %688 = vmatpush1.msra.mxu0 %v646
        %689 = vmatprep.subr.mxu0 0.0
        %690 = vmatpush1.msra.mxu0 %v645
        %691 = vmatprep.subr.mxu0 0.0
        %692 = vmatpush2.msra.mxu0 0.0
        %693 = vmatprep.subr.mxu0 0.0
        %694 = vmatpush2.msra.mxu0 0.0
        %695 = vmatprep.subr.mxu0 0.0
        %696 = vmatpush2.msra.mxu0 0.0
        %697 = vmatprep.subr.mxu0 0.0
        %698 = vmatpush2.msra.mxu0 0.0
        %699 = vmatprep.subr.mxu0 0.0
        %700 = vmatpush2.msra.mxu0 0.0
        %701 = vmatprep.subr.mxu0 0.0
        %702 = vmatpush2.msra.mxu0 0.0
        %703 = vmatprep.subr.mxu0 0.0
        %704 = vmatpush2.msra.mxu0 0.0
        %705 = vmatprep.subr.mxu0 0.0
        %706 = vmatpush2.msra.mxu0 0.0
        %707 = vmatprep.subr.mxu0 0.0
        %708 = vmatpush2.msra.mxu0 0.0
        %709 = vmatprep.subr.mxu0 0.0
        %710 = vmatpush2.msra.mxu0 0.0
        %711 = vmatprep.subr.mxu0 0.0
        %712 = vmatpush2.msra.mxu0 0.0
        %713 = vmatprep.subr.mxu0 0.0
        %714 = vmatpush2.msra.mxu0 0.0
        %715 = vmatprep.subr.mxu0 0.0
        %716 = vmatpush2.msra.mxu0 0.0
        %717 = vmatprep.subr.mxu0 0.0
        %718 = vmatpush2.msra.mxu0 0.0
        %719 = vmatprep.subr.mxu0 0.0
        %720 = vmatpush2.msra.mxu0 0.0
        %721 = vmatprep.subr.mxu0 0.0
        %722 = vmatpush2.msra.mxu0 0.0
        %723 = vmatprep.mubr.f32.mxu0 0.0
        %724 = vmatmul.mubr.f32.gmra.mxu0 %v657
        %v725 = vpop.f32.mrf.mxu0
        %v726 = vadd.f32 %v654, %v725
        %v727 = vpop.f32.mrf.mxu0
        %728 = vdwg.mxu0
        %v729 = vmul.f32 %v558, 0.25
        %vm730 = vcmask 523264
        %731 = vst.msk [vmem:[#allocation2] sm:$0xff] %vm730, %v729
        %732 = vst.msk [vmem:[#allocation3] sm:$0xff] %vm730, %v642
        %733 = vst.msk [vmem:[#allocation4] sm:$0xff] %vm730, %v726
        %v734 = vld [vmem:[#allocation2] sm:$0xff]
        %v735 = vld [vmem:[#allocation3] sm:$0xff]
        %v736 = vld [vmem:[#allocation4] sm:$0xff]
        %vm737 = vcmask 130048
        %v739 = vsel %vm737, %v734, 0
        %v742 = vsel %vm737, %v735, 0
        %744 = vmatprep.subr.mxu0 0.0
        %745 = vmatpush1.xpose.msra.mxu0 0.0
        %746 = vmatprep.subr.mxu0 0.0
        %747 = vmatpush1.xpose.msra.mxu0 0.0
        %748 = vmatprep.subr.mxu0 0.0
        %749 = vmatpush1.xpose.msra.mxu0 0.0
        %750 = vmatprep.subr.mxu0 0.0
        %751 = vmatpush1.xpose.msra.mxu0 0.0
        %752 = vmatprep.subr.mxu0 0.0
        %753 = vmatpush1.xpose.msra.mxu0 0.0
        %754 = vmatprep.subr.mxu0 0.0
        %755 = vmatpush1.xpose.msra.mxu0 0.0
        %756 = vmatprep.subr.mxu0 0.0
        %757 = vmatpush1.xpose.msra.mxu0 0.0
        %758 = vmatprep.subr.mxu0 0.0
        %759 = vmatpush1.xpose.msra.mxu0 0.0
        %760 = vmatprep.subr.mxu0 0.0
        %761 = vmatpush1.xpose.msra.mxu0 0.0
        %762 = vmatprep.subr.mxu0 0.0
        %763 = vmatpush1.xpose.msra.mxu0 0.0
        %764 = vmatprep.subr.mxu0 0.0
        %765 = vmatpush1.xpose.msra.mxu0 0.0
        %766 = vmatprep.subr.mxu0 0.0
        %767 = vmatpush1.xpose.msra.mxu0 0.0
        %768 = vmatprep.subr.mxu0 0.0
        %769 = vmatpush1.xpose.msra.mxu0 0.0
        %770 = vmatprep.subr.mxu0 0.0
        %771 = vmatpush1.xpose.msra.mxu0 0.0
        %772 = vmatprep.subr.mxu0 0.0
        %773 = vmatpush1.xpose.msra.mxu0 0.0
        %774 = vmatprep.subr.mxu0 0.0
        %775 = vmatpush1.xpose.msra.mxu0 %v742
        %776 = vmatprep.subr.mxu0 0.0
        %777 = vmatpush2.xpose.msra.mxu0 0.0
        %778 = vmatprep.subr.mxu0 0.0
        %779 = vmatpush2.xpose.msra.mxu0 0.0
        %780 = vmatprep.subr.mxu0 0.0
        %781 = vmatpush2.xpose.msra.mxu0 0.0
        %782 = vmatprep.subr.mxu0 0.0
        %783 = vmatpush2.xpose.msra.mxu0 0.0
        %784 = vmatprep.subr.mxu0 0.0
        %785 = vmatpush2.xpose.msra.mxu0 0.0
        %786 = vmatprep.subr.mxu0 0.0
        %787 = vmatpush2.xpose.msra.mxu0 0.0
        %788 = vmatprep.subr.mxu0 0.0
        %789 = vmatpush2.xpose.msra.mxu0 0.0
        %790 = vmatprep.subr.mxu0 0.0
        %791 = vmatpush2.xpose.msra.mxu0 0.0
        %792 = vmatprep.subr.mxu0 0.0
        %793 = vmatpush2.xpose.msra.mxu0 0.0
        %794 = vmatprep.subr.mxu0 0.0
        %795 = vmatpush2.xpose.msra.mxu0 0.0
        %796 = vmatprep.subr.mxu0 0.0
        %797 = vmatpush2.xpose.msra.mxu0 0.0
        %798 = vmatprep.subr.mxu0 0.0
        %799 = vmatpush2.xpose.msra.mxu0 0.0
        %800 = vmatprep.subr.mxu0 0.0
        %801 = vmatpush2.xpose.msra.mxu0 0.0
        %802 = vmatprep.subr.mxu0 0.0
        %803 = vmatpush2.xpose.msra.mxu0 0.0
        %804 = vmatprep.subr.mxu0 0.0
        %805 = vmatpush2.xpose.msra.mxu0 0.0
        %806 = vmatprep.subr.mxu0 0.0
        %807 = vmatpush2.xpose.msra.mxu0 0.0
        %808 = vmatprep.mubr.f32.mxu0 0.0
        %809 = vmatmul.mubr.f32.gmra.mxu0 %v739
        %v810 = vpop.f32.mrf.mxu0
        %v811 = vadd.f32 0.0, %v810
        %v812 = vpop.f32.mrf.mxu0
        %813 = vdwg.mxu0
        %vm814 = vcmask 64512
        %v815 = vsel %vm814, %v811, -inf
        %816 = vmax.xlane.f32.xlu0 %v815
        %v817 = vpop.xlane.xlu0 %816
        %v818 = vsub.f32 %v811, %v817
        %v819 = vmul.f32 %v818, 1.442695
        %v820 = vpow.pop %v819
        %v821 = vsel %vm814, %v820, 0.0
        %822 = vadd.xlane.f32.xlu0 %v821
        %v823 = vpop.xlane.xlu0 %822
        %v824 = vrcp.pop %v823
        %v825 = vmul.f32 %v820, %v824
        %v827 = vsel %vm814, %v825, 0
        %829 = vmatprep.subr.mxu0 0.0
        %830 = vmatpush1.msra.mxu0 0.0
        %831 = vmatprep.subr.mxu0 0.0
        %832 = vmatpush1.msra.mxu0 0.0
        %833 = vmatprep.subr.mxu0 0.0
        %834 = vmatpush1.msra.mxu0 0.0
        %835 = vmatprep.subr.mxu0 0.0
        %836 = vmatpush1.msra.mxu0 0.0
        %837 = vmatprep.subr.mxu0 0.0
        %838 = vmatpush1.msra.mxu0 0.0
        %839 = vmatprep.subr.mxu0 0.0
        %840 = vmatpush1.msra.mxu0 0.0
        %841 = vmatprep.subr.mxu0 0.0
        %842 = vmatpush1.msra.mxu0 0.0
        %843 = vmatprep.subr.mxu0 0.0
        %844 = vmatpush1.msra.mxu0 0.0
        %845 = vmatprep.subr.mxu0 0.0
        %846 = vmatpush1.msra.mxu0 0.0
        %847 = vmatprep.subr.mxu0 0.0
        %848 = vmatpush1.msra.mxu0 0.0
        %849 = vmatprep.subr.mxu0 0.0
        %850 = vmatpush1.msra.mxu0 0.0
        %851 = vmatprep.subr.mxu0 0.0
        %852 = vmatpush1.msra.mxu0 0.0
        %853 = vmatprep.subr.mxu0 0.0
        %854 = vmatpush1.msra.mxu0 0.0
        %855 = vmatprep.subr.mxu0 0.0
        %856 = vmatpush1.msra.mxu0 0.0
        %857 = vmatprep.subr.mxu0 0.0
        %858 = vmatpush1.msra.mxu0 0.0
        %859 = vmatprep.subr.mxu0 0.0
        %860 = vmatpush1.msra.mxu0 %v736
        %861 = vmatprep.subr.mxu0 0.0
        %862 = vmatpush2.msra.mxu0 0.0
        %863 = vmatprep.subr.mxu0 0.0
        %864 = vmatpush2.msra.mxu0 0.0
        %865 = vmatprep.subr.mxu0 0.0
        %866 = vmatpush2.msra.mxu0 0.0
        %867 = vmatprep.subr.mxu0 0.0
        %868 = vmatpush2.msra.mxu0 0.0
        %869 = vmatprep.subr.mxu0 0.0
        %870 = vmatpush2.msra.mxu0 0.0
        %871 = vmatprep.subr.mxu0 0.0
        %872 = vmatpush2.msra.mxu0 0.0
        %873 = vmatprep.subr.mxu0 0.0
        %874 = vmatpush2.msra.mxu0 0.0
        %875 = vmatprep.subr.mxu0 0.0
        %876 = vmatpush2.msra.mxu0 0.0
        %877 = vmatprep.subr.mxu0 0.0
        %878 = vmatpush2.msra.mxu0 0.0
        %879 = vmatprep.subr.mxu0 0.0
        %880 = vmatpush2.msra.mxu0 0.0
        %881 = vmatprep.subr.mxu0 0.0
        %882 = vmatpush2.msra.mxu0 0.0
        %883 = vmatprep.subr.mxu0 0.0
        %884 = vmatpush2.msra.mxu0 0.0
        %885 = vmatprep.subr.mxu0 0.0
        %886 = vmatpush2.msra.mxu0 0.0
        %887 = vmatprep.subr.mxu0 0.0
        %888 = vmatpush2.msra.mxu0 0.0
        %889 = vmatprep.subr.mxu0 0.0
        %890 = vmatpush2.msra.mxu0 0.0
        %891 = vmatprep.subr.mxu0 0.0
        %892 = vmatpush2.msra.mxu0 0.0
        %893 = vmatprep.mubr.f32.mxu0 0.0
        %894 = vmatmul.mubr.f32.gmra.mxu0 %v827
        %v895 = vpop.f32.mrf.mxu0
        %v896 = vadd.f32 0.0, %v895
        %v897 = vpop.f32.mrf.mxu0
        %898 = vdwg.mxu0
        %899 = vst.msk [vmem:[#allocation5] sm:$0xff] %vm737, %v896
        %v900 = vld [vmem:[#allocation2] sm:$0xff]
        %v901 = vld [vmem:[#allocation3] sm:$0xff]
        %v902 = vld [vmem:[#allocation4] sm:$0xff]
        %904 = vrot.lane.b32.xlu0 %v900, 112
        %v905 = vpop.permute.xlu0 %904
        %907 = vrot.lane.b32.xlu0 %v901, 112
        %v908 = vpop.permute.xlu0 %907
        %v909 = vsel %vm737, %v905, 0
        %v911 = vsel %vm737, %v908, 0
        %913 = vmatprep.subr.mxu0 0.0
        %914 = vmatpush1.xpose.msra.mxu0 0.0
        %915 = vmatprep.subr.mxu0 0.0
        %916 = vmatpush1.xpose.msra.mxu0 0.0
        %917 = vmatprep.subr.mxu0 0.0
        %918 = vmatpush1.xpose.msra.mxu0 0.0
        %919 = vmatprep.subr.mxu0 0.0
        %920 = vmatpush1.xpose.msra.mxu0 0.0
        %921 = vmatprep.subr.mxu0 0.0
        %922 = vmatpush1.xpose.msra.mxu0 0.0
        %923 = vmatprep.subr.mxu0 0.0
        %924 = vmatpush1.xpose.msra.mxu0 0.0
        %925 = vmatprep.subr.mxu0 0.0
        %926 = vmatpush1.xpose.msra.mxu0 0.0
        %927 = vmatprep.subr.mxu0 0.0
        %928 = vmatpush1.xpose.msra.mxu0 0.0
        %929 = vmatprep.subr.mxu0 0.0
        %930 = vmatpush1.xpose.msra.mxu0 0.0
        %931 = vmatprep.subr.mxu0 0.0
        %932 = vmatpush1.xpose.msra.mxu0 0.0
        %933 = vmatprep.subr.mxu0 0.0
        %934 = vmatpush1.xpose.msra.mxu0 0.0
        %935 = vmatprep.subr.mxu0 0.0
        %936 = vmatpush1.xpose.msra.mxu0 0.0
        %937 = vmatprep.subr.mxu0 0.0
        %938 = vmatpush1.xpose.msra.mxu0 0.0
        %939 = vmatprep.subr.mxu0 0.0
        %940 = vmatpush1.xpose.msra.mxu0 0.0
        %941 = vmatprep.subr.mxu0 0.0
        %942 = vmatpush1.xpose.msra.mxu0 0.0
        %943 = vmatprep.subr.mxu0 0.0
        %944 = vmatpush1.xpose.msra.mxu0 %v911
        %945 = vmatprep.subr.mxu0 0.0
        %946 = vmatpush2.xpose.msra.mxu0 0.0
        %947 = vmatprep.subr.mxu0 0.0
        %948 = vmatpush2.xpose.msra.mxu0 0.0
        %949 = vmatprep.subr.mxu0 0.0
        %950 = vmatpush2.xpose.msra.mxu0 0.0
        %951 = vmatprep.subr.mxu0 0.0
        %952 = vmatpush2.xpose.msra.mxu0 0.0
        %953 = vmatprep.subr.mxu0 0.0
        %954 = vmatpush2.xpose.msra.mxu0 0.0
        %955 = vmatprep.subr.mxu0 0.0
        %956 = vmatpush2.xpose.msra.mxu0 0.0
        %957 = vmatprep.subr.mxu0 0.0
        %958 = vmatpush2.xpose.msra.mxu0 0.0
        %959 = vmatprep.subr.mxu0 0.0
        %960 = vmatpush2.xpose.msra.mxu0 0.0
        %961 = vmatprep.subr.mxu0 0.0
        %962 = vmatpush2.xpose.msra.mxu0 0.0
        %963 = vmatprep.subr.mxu0 0.0
        %964 = vmatpush2.xpose.msra.mxu0 0.0
        %965 = vmatprep.subr.mxu0 0.0
        %966 = vmatpush2.xpose.msra.mxu0 0.0
        %967 = vmatprep.subr.mxu0 0.0
        %968 = vmatpush2.xpose.msra.mxu0 0.0
        %969 = vmatprep.subr.mxu0 0.0
        %970 = vmatpush2.xpose.msra.mxu0 0.0
        %971 = vmatprep.subr.mxu0 0.0
        %972 = vmatpush2.xpose.msra.mxu0 0.0
        %973 = vmatprep.subr.mxu0 0.0
        %974 = vmatpush2.xpose.msra.mxu0 0.0
        %975 = vmatprep.subr.mxu0 0.0
        %976 = vmatpush2.xpose.msra.mxu0 0.0
        %977 = vmatprep.mubr.f32.mxu0 0.0
        %978 = vmatmul.mubr.f32.gmra.mxu0 %v909
        %v979 = vpop.f32.mrf.mxu0
        %v980 = vadd.f32 0.0, %v979
        %v981 = vpop.f32.mrf.mxu0
        %982 = vdwg.mxu0
        %v983 = vsel %vm814, %v980, -inf
        %984 = vmax.xlane.f32.xlu0 %v983
        %v985 = vpop.xlane.xlu0 %984
        %v986 = vsub.f32 %v980, %v985
        %v987 = vmul.f32 %v986, 1.442695
        %v988 = vpow.pop %v987
        %v989 = vsel %vm814, %v988, 0.0
        %990 = vadd.xlane.f32.xlu0 %v989
        %v991 = vpop.xlane.xlu0 %990
        %v992 = vrcp.pop %v991
        %v993 = vmul.f32 %v988, %v992
        %995 = vrot.lane.b32.xlu0 %v902, 112
        %v996 = vpop.permute.xlu0 %995
        %v999 = vsel %vm814, %v993, 0
        %1001 = vmatprep.subr.mxu0 0.0
        %1002 = vmatpush1.msra.mxu0 0.0
        %1003 = vmatprep.subr.mxu0 0.0
        %1004 = vmatpush1.msra.mxu0 0.0
        %1005 = vmatprep.subr.mxu0 0.0
        %1006 = vmatpush1.msra.mxu0 0.0
        %1007 = vmatprep.subr.mxu0 0.0
        %1008 = vmatpush1.msra.mxu0 0.0
        %1009 = vmatprep.subr.mxu0 0.0
        %1010 = vmatpush1.msra.mxu0 0.0
        %1011 = vmatprep.subr.mxu0 0.0
        %1012 = vmatpush1.msra.mxu0 0.0
        %1013 = vmatprep.subr.mxu0 0.0
        %1014 = vmatpush1.msra.mxu0 0.0
        %1015 = vmatprep.subr.mxu0 0.0
        %1016 = vmatpush1.msra.mxu0 0.0
        %1017 = vmatprep.subr.mxu0 0.0
        %1018 = vmatpush1.msra.mxu0 0.0
        %1019 = vmatprep.subr.mxu0 0.0
        %1020 = vmatpush1.msra.mxu0 0.0
        %1021 = vmatprep.subr.mxu0 0.0
        %1022 = vmatpush1.msra.mxu0 0.0
        %1023 = vmatprep.subr.mxu0 0.0
        %1024 = vmatpush1.msra.mxu0 0.0
        %1025 = vmatprep.subr.mxu0 0.0
        %1026 = vmatpush1.msra.mxu0 0.0
        %1027 = vmatprep.subr.mxu0 0.0
        %1028 = vmatpush1.msra.mxu0 0.0
        %1029 = vmatprep.subr.mxu0 0.0
        %1030 = vmatpush1.msra.mxu0 0.0
        %1031 = vmatprep.subr.mxu0 0.0
        %1032 = vmatpush1.msra.mxu0 %v996
        %1033 = vmatprep.subr.mxu0 0.0
        %1034 = vmatpush2.msra.mxu0 0.0
        %1035 = vmatprep.subr.mxu0 0.0
        %1036 = vmatpush2.msra.mxu0 0.0
        %1037 = vmatprep.subr.mxu0 0.0
        %1038 = vmatpush2.msra.mxu0 0.0
        %1039 = vmatprep.subr.mxu0 0.0
        %1040 = vmatpush2.msra.mxu0 0.0
        %1041 = vmatprep.subr.mxu0 0.0
        %1042 = vmatpush2.msra.mxu0 0.0
        %1043 = vmatprep.subr.mxu0 0.0
        %1044 = vmatpush2.msra.mxu0 0.0
        %1045 = vmatprep.subr.mxu0 0.0
        %1046 = vmatpush2.msra.mxu0 0.0
        %1047 = vmatprep.subr.mxu0 0.0
        %1048 = vmatpush2.msra.mxu0 0.0
        %1049 = vmatprep.subr.mxu0 0.0
        %1050 = vmatpush2.msra.mxu0 0.0
        %1051 = vmatprep.subr.mxu0 0.0
        %1052 = vmatpush2.msra.mxu0 0.0
        %1053 = vmatprep.subr.mxu0 0.0
        %1054 = vmatpush2.msra.mxu0 0.0
        %1055 = vmatprep.subr.mxu0 0.0
        %1056 = vmatpush2.msra.mxu0 0.0
        %1057 = vmatprep.subr.mxu0 0.0
        %1058 = vmatpush2.msra.mxu0 0.0
        %1059 = vmatprep.subr.mxu0 0.0
        %1060 = vmatpush2.msra.mxu0 0.0
        %1061 = vmatprep.subr.mxu0 0.0
        %1062 = vmatpush2.msra.mxu0 0.0
        %1063 = vmatprep.subr.mxu0 0.0
        %1064 = vmatpush2.msra.mxu0 0.0
        %1065 = vmatprep.mubr.f32.mxu0 0.0
        %1066 = vmatmul.mubr.f32.gmra.mxu0 %v999
        %v1067 = vpop.f32.mrf.mxu0
        %v1068 = vadd.f32 0.0, %v1067
        %v1069 = vpop.f32.mrf.mxu0
        %1070 = vdwg.mxu0
        %1072 = vrot.lane.b32.xlu0 %v1068, 16
        %v1073 = vpop.permute.xlu0 %1072
        %vm1075 = vcmask 261248
        %1076 = vst.msk [vmem:[#allocation5] sm:$0xff] %vm1075, %v1073
        %v1077 = vld [vmem:[#allocation2] sm:$0xff]
        %v1078 = vld [vmem:[#allocation3] sm:$0xff]
        %v1079 = vld [vmem:[#allocation4] sm:$0xff]
        %1081 = vrot.lane.b32.xlu0 %v1077, 96
        %v1082 = vpop.permute.xlu0 %1081
        %1084 = vrot.lane.b32.xlu0 %v1078, 96
        %v1085 = vpop.permute.xlu0 %1084
        %v1086 = vsel %vm737, %v1082, 0
        %v1088 = vsel %vm737, %v1085, 0
        %1090 = vmatprep.subr.mxu0 0.0
        %1091 = vmatpush1.xpose.msra.mxu0 0.0
        %1092 = vmatprep.subr.mxu0 0.0
        %1093 = vmatpush1.xpose.msra.mxu0 0.0
        %1094 = vmatprep.subr.mxu0 0.0
        %1095 = vmatpush1.xpose.msra.mxu0 0.0
        %1096 = vmatprep.subr.mxu0 0.0
        %1097 = vmatpush1.xpose.msra.mxu0 0.0
        %1098 = vmatprep.subr.mxu0 0.0
        %1099 = vmatpush1.xpose.msra.mxu0 0.0
        %1100 = vmatprep.subr.mxu0 0.0
        %1101 = vmatpush1.xpose.msra.mxu0 0.0
        %1102 = vmatprep.subr.mxu0 0.0
        %1103 = vmatpush1.xpose.msra.mxu0 0.0
        %1104 = vmatprep.subr.mxu0 0.0
        %1105 = vmatpush1.xpose.msra.mxu0 0.0
        %1106 = vmatprep.subr.mxu0 0.0
        %1107 = vmatpush1.xpose.msra.mxu0 0.0
        %1108 = vmatprep.subr.mxu0 0.0
        %1109 = vmatpush1.xpose.msra.mxu0 0.0
        %1110 = vmatprep.subr.mxu0 0.0
        %1111 = vmatpush1.xpose.msra.mxu0 0.0
        %1112 = vmatprep.subr.mxu0 0.0
        %1113 = vmatpush1.xpose.msra.mxu0 0.0
        %1114 = vmatprep.subr.mxu0 0.0
        %1115 = vmatpush1.xpose.msra.mxu0 0.0
        %1116 = vmatprep.subr.mxu0 0.0
        %1117 = vmatpush1.xpose.msra.mxu0 0.0
        %1118 = vmatprep.subr.mxu0 0.0
        %1119 = vmatpush1.xpose.msra.mxu0 0.0
        %1120 = vmatprep.subr.mxu0 0.0
        %1121 = vmatpush1.xpose.msra.mxu0 %v1088
        %1122 = vmatprep.subr.mxu0 0.0
        %1123 = vmatpush2.xpose.msra.mxu0 0.0
        %1124 = vmatprep.subr.mxu0 0.0
        %1125 = vmatpush2.xpose.msra.mxu0 0.0
        %1126 = vmatprep.subr.mxu0 0.0
        %1127 = vmatpush2.xpose.msra.mxu0 0.0
        %1128 = vmatprep.subr.mxu0 0.0
        %1129 = vmatpush2.xpose.msra.mxu0 0.0
        %1130 = vmatprep.subr.mxu0 0.0
        %1131 = vmatpush2.xpose.msra.mxu0 0.0
        %1132 = vmatprep.subr.mxu0 0.0
        %1133 = vmatpush2.xpose.msra.mxu0 0.0
        %1134 = vmatprep.subr.mxu0 0.0
        %1135 = vmatpush2.xpose.msra.mxu0 0.0
        %1136 = vmatprep.subr.mxu0 0.0
        %1137 = vmatpush2.xpose.msra.mxu0 0.0
        %1138 = vmatprep.subr.mxu0 0.0
        %1139 = vmatpush2.xpose.msra.mxu0 0.0
        %1140 = vmatprep.subr.mxu0 0.0
        %1141 = vmatpush2.xpose.msra.mxu0 0.0
        %1142 = vmatprep.subr.mxu0 0.0
        %1143 = vmatpush2.xpose.msra.mxu0 0.0
        %1144 = vmatprep.subr.mxu0 0.0
        %1145 = vmatpush2.xpose.msra.mxu0 0.0
        %1146 = vmatprep.subr.mxu0 0.0
        %1147 = vmatpush2.xpose.msra.mxu0 0.0
        %1148 = vmatprep.subr.mxu0 0.0
        %1149 = vmatpush2.xpose.msra.mxu0 0.0
        %1150 = vmatprep.subr.mxu0 0.0
        %1151 = vmatpush2.xpose.msra.mxu0 0.0
        %1152 = vmatprep.subr.mxu0 0.0
        %1153 = vmatpush2.xpose.msra.mxu0 0.0
        %1154 = vmatprep.mubr.f32.mxu0 0.0
        %1155 = vmatmul.mubr.f32.gmra.mxu0 %v1086
        %v1156 = vpop.f32.mrf.mxu0
        %v1157 = vadd.f32 0.0, %v1156
        %v1158 = vpop.f32.mrf.mxu0
        %1159 = vdwg.mxu0
        %v1160 = vsel %vm814, %v1157, -inf
        %1161 = vmax.xlane.f32.xlu0 %v1160
        %v1162 = vpop.xlane.xlu0 %1161
        %v1163 = vsub.f32 %v1157, %v1162
        %v1164 = vmul.f32 %v1163, 1.442695
        %v1165 = vpow.pop %v1164
        %v1166 = vsel %vm814, %v1165, 0.0
        %1167 = vadd.xlane.f32.xlu0 %v1166
        %v1168 = vpop.xlane.xlu0 %1167
        %v1169 = vrcp.pop %v1168
        %v1170 = vmul.f32 %v1165, %v1169
        %1172 = vrot.lane.b32.xlu0 %v1079, 96
        %v1173 = vpop.permute.xlu0 %1172
        %v1176 = vsel %vm814, %v1170, 0
        %1178 = vmatprep.subr.mxu0 0.0
        %1179 = vmatpush1.msra.mxu0 0.0
        %1180 = vmatprep.subr.mxu0 0.0
        %1181 = vmatpush1.msra.mxu0 0.0
        %1182 = vmatprep.subr.mxu0 0.0
        %1183 = vmatpush1.msra.mxu0 0.0
        %1184 = vmatprep.subr.mxu0 0.0
        %1185 = vmatpush1.msra.mxu0 0.0
        %1186 = vmatprep.subr.mxu0 0.0
        %1187 = vmatpush1.msra.mxu0 0.0
        %1188 = vmatprep.subr.mxu0 0.0
        %1189 = vmatpush1.msra.mxu0 0.0
        %1190 = vmatprep.subr.mxu0 0.0
        %1191 = vmatpush1.msra.mxu0 0.0
        %1192 = vmatprep.subr.mxu0 0.0
        %1193 = vmatpush1.msra.mxu0 0.0
        %1194 = vmatprep.subr.mxu0 0.0
        %1195 = vmatpush1.msra.mxu0 0.0
        %1196 = vmatprep.subr.mxu0 0.0
        %1197 = vmatpush1.msra.mxu0 0.0
        %1198 = vmatprep.subr.mxu0 0.0
        %1199 = vmatpush1.msra.mxu0 0.0
        %1200 = vmatprep.subr.mxu0 0.0
        %1201 = vmatpush1.msra.mxu0 0.0
        %1202 = vmatprep.subr.mxu0 0.0
        %1203 = vmatpush1.msra.mxu0 0.0
        %1204 = vmatprep.subr.mxu0 0.0
        %1205 = vmatpush1.msra.mxu0 0.0
        %1206 = vmatprep.subr.mxu0 0.0
        %1207 = vmatpush1.msra.mxu0 0.0
        %1208 = vmatprep.subr.mxu0 0.0
        %1209 = vmatpush1.msra.mxu0 %v1173
        %1210 = vmatprep.subr.mxu0 0.0
        %1211 = vmatpush2.msra.mxu0 0.0
        %1212 = vmatprep.subr.mxu0 0.0
        %1213 = vmatpush2.msra.mxu0 0.0
        %1214 = vmatprep.subr.mxu0 0.0
        %1215 = vmatpush2.msra.mxu0 0.0
        %1216 = vmatprep.subr.mxu0 0.0
        %1217 = vmatpush2.msra.mxu0 0.0
        %1218 = vmatprep.subr.mxu0 0.0
        %1219 = vmatpush2.msra.mxu0 0.0
        %1220 = vmatprep.subr.mxu0 0.0
        %1221 = vmatpush2.msra.mxu0 0.0
        %1222 = vmatprep.subr.mxu0 0.0
        %1223 = vmatpush2.msra.mxu0 0.0
        %1224 = vmatprep.subr.mxu0 0.0
        %1225 = vmatpush2.msra.mxu0 0.0
        %1226 = vmatprep.subr.mxu0 0.0
        %1227 = vmatpush2.msra.mxu0 0.0
        %1228 = vmatprep.subr.mxu0 0.0
        %1229 = vmatpush2.msra.mxu0 0.0
        %1230 = vmatprep.subr.mxu0 0.0
        %1231 = vmatpush2.msra.mxu0 0.0
        %1232 = vmatprep.subr.mxu0 0.0
        %1233 = vmatpush2.msra.mxu0 0.0
        %1234 = vmatprep.subr.mxu0 0.0
        %1235 = vmatpush2.msra.mxu0 0.0
        %1236 = vmatprep.subr.mxu0 0.0
        %1237 = vmatpush2.msra.mxu0 0.0
        %1238 = vmatprep.subr.mxu0 0.0
        %1239 = vmatpush2.msra.mxu0 0.0
        %1240 = vmatprep.subr.mxu0 0.0
        %1241 = vmatpush2.msra.mxu0 0.0
        %1242 = vmatprep.mubr.f32.mxu0 0.0
        %1243 = vmatmul.mubr.f32.gmra.mxu0 %v1176
        %v1244 = vpop.f32.mrf.mxu0
        %v1245 = vadd.f32 0.0, %v1244
        %v1246 = vpop.f32.mrf.mxu0
        %1247 = vdwg.mxu0
        %1249 = vrot.lane.b32.xlu0 %v1245, 32
        %v1250 = vpop.permute.xlu0 %1249
        %vm1252 = vcmask 392448
        %1253 = vst.msk [vmem:[#allocation5] sm:$0xff] %vm1252, %v1250
        %v1254 = vld [vmem:[#allocation2] sm:$0xff]
        %v1255 = vld [vmem:[#allocation3] sm:$0xff]
        %v1256 = vld [vmem:[#allocation4] sm:$0xff]
        %1258 = vrot.lane.b32.xlu0 %v1254, 80
        %v1259 = vpop.permute.xlu0 %1258
        %1261 = vrot.lane.b32.xlu0 %v1255, 80
        %v1262 = vpop.permute.xlu0 %1261
        %v1263 = vsel %vm737, %v1259, 0
        %v1265 = vsel %vm737, %v1262, 0
        %1267 = vmatprep.subr.mxu0 0.0
        %1268 = vmatpush1.xpose.msra.mxu0 0.0
        %1269 = vmatprep.subr.mxu0 0.0
        %1270 = vmatpush1.xpose.msra.mxu0 0.0
        %1271 = vmatprep.subr.mxu0 0.0
        %1272 = vmatpush1.xpose.msra.mxu0 0.0
        %1273 = vmatprep.subr.mxu0 0.0
        %1274 = vmatpush1.xpose.msra.mxu0 0.0
        %1275 = vmatprep.subr.mxu0 0.0
        %1276 = vmatpush1.xpose.msra.mxu0 0.0
        %1277 = vmatprep.subr.mxu0 0.0
        %1278 = vmatpush1.xpose.msra.mxu0 0.0
        %1279 = vmatprep.subr.mxu0 0.0
        %1280 = vmatpush1.xpose.msra.mxu0 0.0
        %1281 = vmatprep.subr.mxu0 0.0
        %1282 = vmatpush1.xpose.msra.mxu0 0.0
        %1283 = vmatprep.subr.mxu0 0.0
        %1284 = vmatpush1.xpose.msra.mxu0 0.0
        %1285 = vmatprep.subr.mxu0 0.0
        %1286 = vmatpush1.xpose.msra.mxu0 0.0
        %1287 = vmatprep.subr.mxu0 0.0
        %1288 = vmatpush1.xpose.msra.mxu0 0.0
        %1289 = vmatprep.subr.mxu0 0.0
        %1290 = vmatpush1.xpose.msra.mxu0 0.0
        %1291 = vmatprep.subr.mxu0 0.0
        %1292 = vmatpush1.xpose.msra.mxu0 0.0
        %1293 = vmatprep.subr.mxu0 0.0
        %1294 = vmatpush1.xpose.msra.mxu0 0.0
        %1295 = vmatprep.subr.mxu0 0.0
        %1296 = vmatpush1.xpose.msra.mxu0 0.0
        %1297 = vmatprep.subr.mxu0 0.0
        %1298 = vmatpush1.xpose.msra.mxu0 %v1265
        %1299 = vmatprep.subr.mxu0 0.0
        %1300 = vmatpush2.xpose.msra.mxu0 0.0
        %1301 = vmatprep.subr.mxu0 0.0
        %1302 = vmatpush2.xpose.msra.mxu0 0.0
        %1303 = vmatprep.subr.mxu0 0.0
        %1304 = vmatpush2.xpose.msra.mxu0 0.0
        %1305 = vmatprep.subr.mxu0 0.0
        %1306 = vmatpush2.xpose.msra.mxu0 0.0
        %1307 = vmatprep.subr.mxu0 0.0
        %1308 = vmatpush2.xpose.msra.mxu0 0.0
        %1309 = vmatprep.subr.mxu0 0.0
        %1310 = vmatpush2.xpose.msra.mxu0 0.0
        %1311 = vmatprep.subr.mxu0 0.0
        %1312 = vmatpush2.xpose.msra.mxu0 0.0
        %1313 = vmatprep.subr.mxu0 0.0
        %1314 = vmatpush2.xpose.msra.mxu0 0.0
        %1315 = vmatprep.subr.mxu0 0.0
        %1316 = vmatpush2.xpose.msra.mxu0 0.0
        %1317 = vmatprep.subr.mxu0 0.0
        %1318 = vmatpush2.xpose.msra.mxu0 0.0
        %1319 = vmatprep.subr.mxu0 0.0
        %1320 = vmatpush2.xpose.msra.mxu0 0.0
        %1321 = vmatprep.subr.mxu0 0.0
        %1322 = vmatpush2.xpose.msra.mxu0 0.0
        %1323 = vmatprep.subr.mxu0 0.0
        %1324 = vmatpush2.xpose.msra.mxu0 0.0
        %1325 = vmatprep.subr.mxu0 0.0
        %1326 = vmatpush2.xpose.msra.mxu0 0.0
        %1327 = vmatprep.subr.mxu0 0.0
        %1328 = vmatpush2.xpose.msra.mxu0 0.0
        %1329 = vmatprep.subr.mxu0 0.0
        %1330 = vmatpush2.xpose.msra.mxu0 0.0
        %1331 = vmatprep.mubr.f32.mxu0 0.0
        %1332 = vmatmul.mubr.f32.gmra.mxu0 %v1263
        %v1333 = vpop.f32.mrf.mxu0
        %v1334 = vadd.f32 0.0, %v1333
        %v1335 = vpop.f32.mrf.mxu0
        %1336 = vdwg.mxu0
        %v1337 = vsel %vm814, %v1334, -inf
        %1338 = vmax.xlane.f32.xlu0 %v1337
        %v1339 = vpop.xlane.xlu0 %1338
        %v1340 = vsub.f32 %v1334, %v1339
        %v1341 = vmul.f32 %v1340, 1.442695
        %v1342 = vpow.pop %v1341
        %v1343 = vsel %vm814, %v1342, 0.0
        %1344 = vadd.xlane.f32.xlu0 %v1343
        %v1345 = vpop.xlane.xlu0 %1344
        %v1346 = vrcp.pop %v1345
        %v1347 = vmul.f32 %v1342, %v1346
        %1349 = vrot.lane.b32.xlu0 %v1256, 80
        %v1350 = vpop.permute.xlu0 %1349
        %v1353 = vsel %vm814, %v1347, 0
        %1355 = vmatprep.subr.mxu0 0.0
        %1356 = vmatpush1.msra.mxu0 0.0
        %1357 = vmatprep.subr.mxu0 0.0
        %1358 = vmatpush1.msra.mxu0 0.0
        %1359 = vmatprep.subr.mxu0 0.0
        %1360 = vmatpush1.msra.mxu0 0.0
        %1361 = vmatprep.subr.mxu0 0.0
        %1362 = vmatpush1.msra.mxu0 0.0
        %1363 = vmatprep.subr.mxu0 0.0
        %1364 = vmatpush1.msra.mxu0 0.0
        %1365 = vmatprep.subr.mxu0 0.0
        %1366 = vmatpush1.msra.mxu0 0.0
        %1367 = vmatprep.subr.mxu0 0.0
        %1368 = vmatpush1.msra.mxu0 0.0
        %1369 = vmatprep.subr.mxu0 0.0
        %1370 = vmatpush1.msra.mxu0 0.0
        %1371 = vmatprep.subr.mxu0 0.0
        %1372 = vmatpush1.msra.mxu0 0.0
        %1373 = vmatprep.subr.mxu0 0.0
        %1374 = vmatpush1.msra.mxu0 0.0
        %1375 = vmatprep.subr.mxu0 0.0
        %1376 = vmatpush1.msra.mxu0 0.0
        %1377 = vmatprep.subr.mxu0 0.0
        %1378 = vmatpush1.msra.mxu0 0.0
        %1379 = vmatprep.subr.mxu0 0.0
        %1380 = vmatpush1.msra.mxu0 0.0
        %1381 = vmatprep.subr.mxu0 0.0
        %1382 = vmatpush1.msra.mxu0 0.0
        %1383 = vmatprep.subr.mxu0 0.0
        %1384 = vmatpush1.msra.mxu0 0.0
        %1385 = vmatprep.subr.mxu0 0.0
        %1386 = vmatpush1.msra.mxu0 %v1350
        %1387 = vmatprep.subr.mxu0 0.0
        %1388 = vmatpush2.msra.mxu0 0.0
        %1389 = vmatprep.subr.mxu0 0.0
        %1390 = vmatpush2.msra.mxu0 0.0
        %1391 = vmatprep.subr.mxu0 0.0
        %1392 = vmatpush2.msra.mxu0 0.0
        %1393 = vmatprep.subr.mxu0 0.0
        %1394 = vmatpush2.msra.mxu0 0.0
        %1395 = vmatprep.subr.mxu0 0.0
        %1396 = vmatpush2.msra.mxu0 0.0
        %1397 = vmatprep.subr.mxu0 0.0
        %1398 = vmatpush2.msra.mxu0 0.0
        %1399 = vmatprep.subr.mxu0 0.0
        %1400 = vmatpush2.msra.mxu0 0.0
        %1401 = vmatprep.subr.mxu0 0.0
        %1402 = vmatpush2.msra.mxu0 0.0
        %1403 = vmatprep.subr.mxu0 0.0
        %1404 = vmatpush2.msra.mxu0 0.0
        %1405 = vmatprep.subr.mxu0 0.0
        %1406 = vmatpush2.msra.mxu0 0.0
        %1407 = vmatprep.subr.mxu0 0.0
        %1408 = vmatpush2.msra.mxu0 0.0
        %1409 = vmatprep.subr.mxu0 0.0
        %1410 = vmatpush2.msra.mxu0 0.0
        %1411 = vmatprep.subr.mxu0 0.0
        %1412 = vmatpush2.msra.mxu0 0.0
        %1413 = vmatprep.subr.mxu0 0.0
        %1414 = vmatpush2.msra.mxu0 0.0
        %1415 = vmatprep.subr.mxu0 0.0
        %1416 = vmatpush2.msra.mxu0 0.0
        %1417 = vmatprep.subr.mxu0 0.0
        %1418 = vmatpush2.msra.mxu0 0.0
        %1419 = vmatprep.mubr.f32.mxu0 0.0
        %1420 = vmatmul.mubr.f32.gmra.mxu0 %v1353
        %v1421 = vpop.f32.mrf.mxu0
        %v1422 = vadd.f32 0.0, %v1421
        %v1423 = vpop.f32.mrf.mxu0
        %1424 = vdwg.mxu0
        %1426 = vrot.lane.b32.xlu0 %v1422, 48
        %v1427 = vpop.permute.xlu0 %1426
        %vm1429 = vcmask 523648
        %1430 = vst.msk [vmem:[#allocation5] sm:$0xff] %vm1429, %v1427
        %v1431 = vld [vmem:[#allocation5] sm:$0xff]
        %v1432 = vld [vmem:[%s9] sm:$0xff]
        %v1433 = vld [vmem:[%s9 + $0x8] sm:$0xff]
        %v1434 = vld [vmem:[%s9 + $0x10] sm:$0xff]
        %v1435 = vld [vmem:[%s9 + $0x18] sm:$0xff]
        %v1436 = vld [vmem:[%s9 + $0x20] sm:$0xff]
        %v1437 = vld [vmem:[%s9 + $0x28] sm:$0xff]
        %v1438 = vld [vmem:[%s9 + $0x30] sm:$0xff]
        %v1439 = vld [vmem:[%s9 + $0x38] sm:$0xff]
        %v1440 = vld [vmem:[%s10] sm:$0x1]
        %v1442 = vlaneseq
        %v1443 = vshrl.u32 %v1442, 7
        %v1444 = vsub.s32 0, %v1443
        %v1445 = vrot.slane %v1440, %v1444
        %v1448 = vsel %vm730, %v1431, 0
        %1450 = vmatprep.subr.mxu0 0.0
        %1451 = vmatpush1.msra.mxu0 0.0
        %1452 = vmatprep.subr.mxu0 0.0
        %1453 = vmatpush1.msra.mxu0 0.0
        %1454 = vmatprep.subr.mxu0 0.0
        %1455 = vmatpush1.msra.mxu0 0.0
        %1456 = vmatprep.subr.mxu0 0.0
        %1457 = vmatpush1.msra.mxu0 0.0
        %1458 = vmatprep.subr.mxu0 0.0
        %1459 = vmatpush1.msra.mxu0 0.0
        %1460 = vmatprep.subr.mxu0 0.0
        %1461 = vmatpush1.msra.mxu0 0.0
        %1462 = vmatprep.subr.mxu0 0.0
        %1463 = vmatpush1.msra.mxu0 0.0
        %1464 = vmatprep.subr.mxu0 0.0
        %1465 = vmatpush1.msra.mxu0 0.0
        %1466 = vmatprep.subr.mxu0 0.0
        %1467 = vmatpush1.msra.mxu0 %v1439
        %1468 = vmatprep.subr.mxu0 0.0
        %1469 = vmatpush1.msra.mxu0 %v1438
        %1470 = vmatprep.subr.mxu0 0.0
        %1471 = vmatpush1.msra.mxu0 %v1437
        %1472 = vmatprep.subr.mxu0 0.0
        %1473 = vmatpush1.msra.mxu0 %v1436
        %1474 = vmatprep.subr.mxu0 0.0
        %1475 = vmatpush1.msra.mxu0 %v1435
        %1476 = vmatprep.subr.mxu0 0.0
        %1477 = vmatpush1.msra.mxu0 %v1434
        %1478 = vmatprep.subr.mxu0 0.0
        %1479 = vmatpush1.msra.mxu0 %v1433
        %1480 = vmatprep.subr.mxu0 0.0
        %1481 = vmatpush1.msra.mxu0 %v1432
        %1482 = vmatprep.subr.mxu0 0.0
        %1483 = vmatpush2.msra.mxu0 0.0
        %1484 = vmatprep.subr.mxu0 0.0
        %1485 = vmatpush2.msra.mxu0 0.0
        %1486 = vmatprep.subr.mxu0 0.0
        %1487 = vmatpush2.msra.mxu0 0.0
        %1488 = vmatprep.subr.mxu0 0.0
        %1489 = vmatpush2.msra.mxu0 0.0
        %1490 = vmatprep.subr.mxu0 0.0
        %1491 = vmatpush2.msra.mxu0 0.0
        %1492 = vmatprep.subr.mxu0 0.0
        %1493 = vmatpush2.msra.mxu0 0.0
        %1494 = vmatprep.subr.mxu0 0.0
        %1495 = vmatpush2.msra.mxu0 0.0
        %1496 = vmatprep.subr.mxu0 0.0
        %1497 = vmatpush2.msra.mxu0 0.0
        %1498 = vmatprep.subr.mxu0 0.0
        %1499 = vmatpush2.msra.mxu0 0.0
        %1500 = vmatprep.subr.mxu0 0.0
        %1501 = vmatpush2.msra.mxu0 0.0
        %1502 = vmatprep.subr.mxu0 0.0
        %1503 = vmatpush2.msra.mxu0 0.0
        %1504 = vmatprep.subr.mxu0 0.0
        %1505 = vmatpush2.msra.mxu0 0.0
        %1506 = vmatprep.subr.mxu0 0.0
        %1507 = vmatpush2.msra.mxu0 0.0
        %1508 = vmatprep.subr.mxu0 0.0
        %1509 = vmatpush2.msra.mxu0 0.0
        %1510 = vmatprep.subr.mxu0 0.0
        %1511 = vmatpush2.msra.mxu0 0.0
        %1512 = vmatprep.subr.mxu0 0.0
        %1513 = vmatpush2.msra.mxu0 0.0
        %1514 = vmatprep.mubr.f32.mxu0 0.0
        %1515 = vmatmul.mubr.f32.gmra.mxu0 %v1448
        %v1516 = vpop.f32.mrf.mxu0
        %v1517 = vadd.f32 %v1445, %v1516
        %v1518 = vpop.f32.mrf.mxu0
        %1519 = vdwg.mxu0
        %1520 = vst.msk [vmem:[%s472] sm:$0xff] %vm487, %v1517
        %s1521 = sand.u32 %s285, 1
        %s1522 = scalar_lea.sflag [#allocation8], %s1521
        %s1523 = sand.u32 %s285, 1
        %s1524 = smul.addr %s1523, 8
        %s1525 = scalar_lea.vmem [#allocation12], %s1524
        // Predicated region
        $region77: #{tpu_custom_call.1} parent=63 // pred_check
          %p1526 = pneg %p295
        $region78: #{tpu_custom_call.1} parent=63 // pred_check_branch
          %1528 = sbr.rel (%p1526) target = $region80
        $region79: #{tpu_custom_call.1} parent=63 // pred_region
          %s1530 = ssub.s32 128, 128
          %1531 = vsyncadd %s1522, %s1530
          %s1532 = smul.addr %s31, 128
          %s1533 = scalar_lea.hbm %s11, %s1532
          %s1535 = sshll.u32 %s1525, 4
          %s1536 = int_to_ptr.vmem [resolvable:$true] %s1535
          %1538 = dma.vmem_to_hbm [thread:$0]  %s1536, 128, %s1533, %s1522
        $region80: #{tpu_custom_call.1} parent=63 // pred_fallthru
          _
      $region64: #{tpu_custom_call.1} parent=5 // pred_fallthru
        _
      %p1539 = scmp.le.s32.totalorder 2, %s26
      // Predicated region
      $region81: #{tpu_custom_call.1} parent=5 // pred_check
        %p1540 = pneg %p1539
      $region82: #{tpu_custom_call.1} parent=5 // pred_check_branch
        %1542 = sbr.rel (%p1540) target = $region84
      $region83: #{tpu_custom_call.1} parent=5 // pred_region
        %s1543 = ssub.s32 %s26, 2
        // Predicated region
        $region85: #{tpu_custom_call.1} parent=83 // pred_check
          %p1544 = pneg %p301
        $region86: #{tpu_custom_call.1} parent=83 // pred_check_branch
          %1546 = sbr.rel (%p1544) target = $region88
        $region87: #{tpu_custom_call.1} parent=83 // pred_region
          %s1547 = sand.u32 %s286, 1
          %s1548 = scalar_lea.sflag [#allocation8], %s1547
          %s1549 = sand.u32 %s286, 1
          %s1550 = smul.addr %s1549, 8
          %s1551 = scalar_lea.vmem [#allocation12], %s1550
          %1552 = dma.done %s1548, 128
        $region88: #{tpu_custom_call.1} parent=83 // pred_fallthru
          _
      $region84: #{tpu_custom_call.1} parent=5 // pred_fallthru
        _
    $region6: #{tpu_custom_call.1} parent=1 // loop_footer
      %s30 = sadd.s32 1, %s26
    $region7: #{tpu_custom_call.1} parent=1 // loop_footer_branch
      %25 = sbr.rel target = $region3
    $region8: #{tpu_custom_call.1} parent=1 // loop_exit
      _
    %1553 = vsyncpa [#allocation7], 1
    %s1554 = scalar_lea.sflag [#allocation7], 1
    %1555 = vsyncpa %s1554, 1
    %1556 = vsyncpa [#allocation10], 1
    %s1557 = scalar_lea.sflag [#allocation10], 1
    %1558 = vsyncpa %s1557, 1
    %1559 = vsyncpa [#allocation8], 1
    %s1560 = scalar_lea.sflag [#allocation8], 1
    %1561 = vsyncpa %s1560, 1

</llo_original>
